<compile_context>
chip_gen: v5e
topology: v5e:2x2
jax: 0.10.0
libtpu: 0.0.40
codegen_flags: <defaults>
</compile_context>

<pallas_src>
import functools

import jax
import jax.numpy as jnp
from jax.experimental import pallas as pl
from jax.experimental.pallas import tpu as pltpu


def _conv_block_kernel(x_ref, w1_ref, b1_ref, w2_ref, b2_ref, o_ref,
                       xpad_ref, mid_ref, *, H, W, TH, use_pn):
    """Fused ConvBlock; grid = (batch, row-tile).

    x_ref   : (1, H, W, Cin)          full-image NHWC input block (resident across tiles)
    w1_ref  : (9, Cin,  Cmid)         conv1 weights, tap-major (ky*3+kx), WS scale folded in
    b1_ref  : (1, Cmid)               f32
    w2_ref  : (9, Cmid, Cout)         conv2 weights, tap-major, WS scale folded in
    b2_ref  : (1, Cout)               f32
    o_ref   : (1, TH, W, Cout)        output row tile
    xpad_ref: VMEM (H+4, W+2, Cin)    zero-padded conv1 input, MXU dtype
    mid_ref : VMEM (TH+2, W+2, Cmid)  padded inter-layer row tile, MXU dtype
    """
    t = pl.program_id(1)
    base = t * TH
    if TH % 8 == 0:
        base = pl.multiple_of(base, TH)
    cdt = xpad_ref.dtype
    Cin = xpad_ref.shape[-1]
    Cmid = mid_ref.shape[-1]

    @pl.when(t == 0)
    def _prologue():
        # Zero only the thin halo border (the interior is always overwritten), once
        # per batch element instead of a full-scratch zero fill every grid step.
        xpad_ref[0:2, :, :] = jnp.zeros((2, W + 2, Cin), cdt)
        xpad_ref[H + 2:H + 4, :, :] = jnp.zeros((2, W + 2, Cin), cdt)
        xpad_ref[:, 0:1, :] = jnp.zeros((H + 4, 1, Cin), cdt)
        xpad_ref[:, W + 1:W + 2, :] = jnp.zeros((H + 4, 1, Cin), cdt)
        # TODO(synk): interior starts at column 1 (sublane-misaligned); a pltpu.roll
        # based kx shift with halo columns at the end would make these stores and the
        # tap loads fully aligned.
        xpad_ref[2:H + 2, 1:W + 1, :] = x_ref[0].astype(cdt)
        # Column halo of the inter-layer scratch; never written anywhere else.
        mid_ref[:, 0:1, :] = jnp.zeros((TH + 2, 1, Cmid), cdt)
        mid_ref[:, W + 1:W + 2, :] = jnp.zeros((TH + 2, 1, Cmid), cdt)

    def conv3x3(load_tap, w_ref, b_ref):
        # 9 per-tap MXU matmuls (K = C) accumulated in f32 -- no 9xC im2col patch.
        acc = None
        for idx in range(9):
            ky, kx = divmod(idx, 3)
            p = jax.lax.dot_general(
                load_tap(ky, kx), w_ref[idx],
                dimension_numbers=(((2,), (0,)), ((), ())),
                preferred_element_type=jnp.float32)
            acc = p if acc is None else acc + p
        return acc + b_ref[...].reshape(1, 1, -1)

    def act(y):
        # f32 VPU / EUP math (bf16 is only the MXU input / storage dtype).
        y = jnp.where(y > 0, y, 0.2 * y)                         # LeakyReLU(0.2)
        if use_pn:
            # PixelNorm over channels (NHWC last axis == NCHW dim=1); rsqrt -> EUP.
            y = y * jax.lax.rsqrt(jnp.mean(y * y, axis=-1, keepdims=True) + 1e-8)
        return y

    # ---- layer 1: conv over TH+2 rows (1-row recomputed halo for layer 2) ----
    def tap1(ky, kx):
        return xpad_ref[pl.ds(base + ky, TH + 2), pl.ds(kx, W), :]

    y1 = act(conv3x3(tap1, w1_ref, b1_ref))                      # (TH+2, W, Cmid) f32
    # Rows outside the image are conv2's zero padding -> force them to exact zero.
    row = base - 1 + jax.lax.broadcasted_iota(jnp.int32, (TH + 2, 1, 1), 0)
    y1 = jnp.where((row >= 0) & (row < H), y1, 0.0)
    mid_ref[:, 1:W + 1, :] = y1.astype(cdt)                      # never leaves VMEM

    # ---- layer 2 ----
    def tap2(ky, kx):
        return mid_ref[pl.ds(ky, TH), pl.ds(kx, W), :]

    y2 = act(conv3x3(tap2, w2_ref, b2_ref))                      # (TH, W, Cout) f32
    # TODO(synk): for Cout < 128 stages a lane-dense (TH, W*Cout) store layout would
    # avoid masked vst on the writeback; kept plain NHWC here.
    o_ref[0] = y2.astype(o_ref.dtype)


def _oihw_to_taps(w_oihw):
    # (Cout, Cin, 3, 3) -> (9, Cin, Cout); tap index = ky*3 + kx, matching the kernel.
    cout, cin, kh, kw = w_oihw.shape
    return jnp.transpose(w_oihw, (2, 3, 1, 0)).reshape(kh * kw, cin, cout)


def _vmem_capacity_bytes():
    try:
        return int(getattr(pltpu.get_tpu_info(), "vmem_capacity_bytes",
                           64 * 1024 * 1024))
    except Exception:
        return 64 * 1024 * 1024


def _pick_row_tile(H, W, cin, cmid, cout, in_isz, mxu_isz, vmem_cap):
    """Largest row tile TH (divisor of H; TH == H or TH % 8 == 0) whose footprint fits
    a conservative slice of VMEM; prefers >= 2 tiles when H >= 16 so the output DMA
    pipelines against compute."""
    budget = int(0.35 * vmem_cap)
    fixed = (2 * H * W * cin * in_isz                       # double-buffered input block
             + (H + 4) * (W + 2) * cin * mxu_isz            # padded-input scratch
             + 9 * (cin * cmid + cmid * cout) * mxu_isz)    # weights (Buffered(1))
    cands = sorted({th for th in range(8, H + 1, 8) if H % th == 0} | {H})
    best = cands[0]
    for th in cands:
        per_tile = ((th + 2) * (W + 2) * cmid * mxu_isz     # inter-layer scratch
                    + 2 * th * W * cout * in_isz            # double-buffered output block
                    + 4 * (th + 2) * W * (cin + 2 * cmid)   # layer-1 f32 temporaries
                    + 4 * th * W * (cmid + 2 * cout))       # layer-2 f32 temporaries
        if fixed + per_tile <= budget:
            best = th
    if best == H and H >= 16:
        smaller = [th for th in cands if th <= H // 2]
        if smaller:
            best = smaller[-1]
    return best


def conv_block_forward(x_nchw, params, use_pixelnorm=True, *,
                       mxu_dtype=jnp.bfloat16, row_tile=None):
    """ConvBlock.forward -- input/output in PyTorch NCHW layout."""
    x = jnp.transpose(x_nchw, (0, 2, 3, 1))                  # NCHW -> NHWC
    N, H, W, Cin = (int(d) for d in x.shape)

    # Fold the WS (equalized-lr) scale into the weights once; cast to the MXU dtype.
    w1 = (_oihw_to_taps(params["w1"]) * params["scale1"]).astype(mxu_dtype)
    w2 = (_oihw_to_taps(params["w2"]) * params["scale2"]).astype(mxu_dtype)
    Cmid, Cout = int(w1.shape[-1]), int(w2.shape[-1])
    b1 = params["b1"].reshape(1, Cmid).astype(jnp.float32)
    b2 = params["b2"].reshape(1, Cout).astype(jnp.float32)

    in_isz = jnp.dtype(x.dtype).itemsize
    mxu_isz = jnp.dtype(mxu_dtype).itemsize
    vmem_cap = _vmem_capacity_bytes()

    TH = row_tile if row_tile is not None else _pick_row_tile(
        H, W, Cin, Cmid, Cout, in_isz, mxu_isz, vmem_cap)
    assert H % TH == 0 and (TH == H or TH % 8 == 0), (H, TH)
    n_tiles = H // TH

    kernel = functools.partial(_conv_block_kernel, H=H, W=W, TH=TH,
                               use_pn=use_pixelnorm)

    # Generation-aware scoped-VMEM limit sized from the real footprint.
    est = (2 * H * W * Cin * in_isz                      # double-buffered input block
           + 2 * TH * W * Cout * in_isz                  # double-buffered output block
           + (H + 4) * (W + 2) * Cin * mxu_isz           # padded-input scratch
           + (TH + 2) * (W + 2) * Cmid * mxu_isz         # inter-layer scratch
           + 9 * (Cin * Cmid + Cmid * Cout) * mxu_isz    # weights (single-buffered)
           + 4 * (Cmid + Cout)                           # biases
           + 4 * (TH + 2) * W * (Cin + 2 * Cmid)         # layer-1 temporaries (f32)
           + 4 * TH * W * (Cmid + 2 * Cout))             # layer-2 temporaries (f32)
    vmem_limit = int(min(max(2 * est, 32 * 1024 * 1024), int(0.9 * vmem_cap)))

    # TODO(synk): for very large images, DMA only a (TH+4)-row input slab per tile
    # (manual halo copies from an ANY-space input) instead of keeping the full-image
    # input block resident.

    out = pl.pallas_call(
        kernel,
        out_shape=jax.ShapeDtypeStruct((N, H, W, Cout), x.dtype),
        grid=(N, n_tiles),
        in_specs=[
            pl.BlockSpec((1, H, W, Cin), lambda n, t: (n, 0, 0, 0)),
            pl.BlockSpec((9, Cin, Cmid), lambda n, t: (0, 0, 0),
                         pipeline_mode=pl.Buffered(1)),
            pl.BlockSpec((1, Cmid), lambda n, t: (0, 0),
                         pipeline_mode=pl.Buffered(1)),
            pl.BlockSpec((9, Cmid, Cout), lambda n, t: (0, 0, 0),
                         pipeline_mode=pl.Buffered(1)),
            pl.BlockSpec((1, Cout), lambda n, t: (0, 0),
                         pipeline_mode=pl.Buffered(1)),
        ],
        out_specs=pl.BlockSpec((1, TH, W, Cout), lambda n, t: (n, t, 0, 0)),
        scratch_shapes=[
            pltpu.VMEM((H + 4, W + 2, Cin), mxu_dtype),    # zero-padded conv1 input
            pltpu.VMEM((TH + 2, W + 2, Cmid), mxu_dtype),  # padded inter-layer tile
        ],
        compiler_params=pltpu.CompilerParams(
            dimension_semantics=("parallel", "arbitrary"),
            vmem_limit_bytes=vmem_limit),
    )(x, w1, b1, w2, b2)

    return jnp.transpose(out, (0, 3, 1, 2))                  # NHWC -> NCHW


def init_conv_block_params(key, in_channels, out_channels, gain=2, k=3):
    """Deterministic init matching WSConv2d: weight ~ N(0,1), bias = 0."""
    k1, k2 = jax.random.split(key)
    w1 = jax.random.normal(k1, (out_channels, in_channels, k, k), jnp.float32)
    w2 = jax.random.normal(k2, (out_channels, out_channels, k, k), jnp.float32)
    b1 = jnp.zeros((out_channels,), jnp.float32)
    b2 = jnp.zeros((out_channels,), jnp.float32)
    scale1 = (gain / (in_channels * k * k)) ** 0.5
    scale2 = (gain / (out_channels * k * k)) ** 0.5
    return dict(w1=w1, b1=b1, scale1=scale1, w2=w2, b2=b2, scale2=scale2)


# ---------------- pure-JAX reference (for correctness check) ----------------
def _ref_forward(x, params, use_pixelnorm=True):
    def wsconv(x, w, b, s):
        y = jax.lax.conv_general_dilated(
            x * s, w, window_strides=(1, 1), padding=((1, 1), (1, 1)),
            dimension_numbers=("NCHW", "OIHW", "NCHW"))
        return y + b[None, :, None, None]

    def leaky(v):
        return jnp.where(v > 0, v, 0.2 * v)

    def pn(v):
        return v / jnp.sqrt(jnp.mean(v * v, axis=1, keepdims=True) + 1e-8)

    x = leaky(wsconv(x, params["w1"], params["b1"], params["scale1"]))
    if use_pixelnorm:
        x = pn(x)
    x = leaky(wsconv(x, params["w2"], params["b2"], params["scale2"]))
    if use_pixelnorm:
        x = pn(x)
    return x


if __name__ == "__main__":
    key = jax.random.PRNGKey(0)
    kx, kp = jax.random.split(key)

    N, Cin, Cout, H, W = 2, 4, 8, 16, 16
    x = jax.random.normal(kx, (N, Cin, H, W), jnp.float32)
    params = init_conv_block_params(kp, Cin, Cout)

    ref = _ref_forward(x, params, use_pixelnorm=True)

    # f32 verification path (tight tolerance against the f32 reference).
    out_f32 = conv_block_forward(x, params, use_pixelnorm=True,
                                 mxu_dtype=jnp.float32)
    out_f32 = jax.block_until_ready(out_f32)
    assert out_f32.shape == (N, Cout, H, W)
    assert jnp.allclose(out_f32, ref, atol=1e-4, rtol=1e-4), (
        float(jnp.max(jnp.abs(out_f32 - ref))))

    # no-PixelNorm path, f32 (exercises the use_pn=False branch).
    ref_nopn = _ref_forward(x, params, use_pixelnorm=False)
    out_nopn = conv_block_forward(x, params, use_pixelnorm=False,
                                  mxu_dtype=jnp.float32)
    out_nopn = jax.block_until_ready(out_nopn)
    assert jnp.allclose(out_nopn, ref_nopn, atol=1e-4, rtol=1e-4), (
        float(jnp.max(jnp.abs(out_nopn - ref_nopn))))

    # Default fast path: bf16 MXU inputs, f32 accumulation (looser tolerance).
    out_bf16 = conv_block_forward(x, params, use_pixelnorm=True)
    out_bf16 = jax.block_until_ready(out_bf16)
    assert out_bf16.shape == (N, Cout, H, W)
    assert jnp.allclose(out_bf16, ref, atol=5e-2, rtol=5e-2), (
        float(jnp.max(jnp.abs(out_bf16 - ref))))

    print("KERNEL_OK")
</pallas_src>

<mosaic_0001>
module attributes {stable_mosaic.version = 11 : i64} {
  func.func @_conv_block_kernel(%arg0: i32, %arg1: i32, %arg2: memref<1x16x16x4xf32, #tpu.memory_space<vmem>>, %arg3: memref<9x4x8xf32, #tpu.memory_space<vmem>>, %arg4: memref<1x8xf32, #tpu.memory_space<vmem>>, %arg5: memref<9x8x8xf32, #tpu.memory_space<vmem>>, %arg6: memref<1x8xf32, #tpu.memory_space<vmem>>, %arg7: memref<1x8x16x8xf32, #tpu.memory_space<vmem>>, %arg8: memref<20x18x4xf32, #tpu.memory_space<vmem>>, %arg9: memref<10x18x8xf32, #tpu.memory_space<vmem>>) attributes {dimension_semantics = [#tpu.dimension_semantics<parallel>, #tpu.dimension_semantics<arbitrary>], iteration_bounds = array<i64: 2, 2>, scalar_prefetch = 0 : i64, scratch_operands = 2 : i64, tpu.core_type = #tpu.core_type<tc>, window_params = [{transform_indices = @transform_0, window_bounds = array<i64: 1, 16, 16, 4>}, {pipeline_mode = #tpu.pipeline_mode<synchronous>, transform_indices = @transform_1, window_bounds = array<i64: 9, 4, 8>}, {pipeline_mode = #tpu.pipeline_mode<synchronous>, transform_indices = @transform_2, window_bounds = array<i64: 1, 8>}, {pipeline_mode = #tpu.pipeline_mode<synchronous>, transform_indices = @transform_3, window_bounds = array<i64: 9, 8, 8>}, {pipeline_mode = #tpu.pipeline_mode<synchronous>, transform_indices = @transform_4, window_bounds = array<i64: 1, 8>}, {transform_indices = @transform_5, window_bounds = array<i64: 1, 8, 16, 8>}]} {
    %c8_i32 = arith.constant 8 : i32
    %0 = arith.muli %arg1, %c8_i32 : i32
    %1 = tpu.assume_multiple %0, 8 : i32
    %c0_i32 = arith.constant 0 : i32
    %2 = arith.cmpi eq, %arg1, %c0_i32 : i32
    %3 = arith.extui %2 : i1 to i32
    %c0_i32_0 = arith.constant 0 : i32
    %4 = arith.cmpi ne, %3, %c0_i32_0 : i32
    scf.if %4 {
      %cst_139 = arith.constant 0.000000e+00 : f32
      %166 = vector.broadcast %cst_139 : f32 to vector<2x18x4xf32>
      %c0_140 = arith.constant 0 : index
      %c0_141 = arith.constant 0 : index
      %c0_142 = arith.constant 0 : index
      %167 = vector.load %arg8[%c0_140, %c0_141, %c0_142] : memref<20x18x4xf32, #tpu.memory_space<vmem>>, vector<2x18x4xf32>
      tpu.vector_store %arg8[%c0_140, %c0_141, %c0_142], %166 {strides = array<i32>} : memref<20x18x4xf32, #tpu.memory_space<vmem>>, vector<2x18x4xf32>,
      %cst_143 = arith.constant 0.000000e+00 : f32
      %168 = vector.broadcast %cst_143 : f32 to vector<2x18x4xf32>
      %c18 = arith.constant 18 : index
      %c0_144 = arith.constant 0 : index
      %c0_145 = arith.constant 0 : index
      %169 = vector.load %arg8[%c18, %c0_144, %c0_145] : memref<20x18x4xf32, #tpu.memory_space<vmem>>, vector<2x18x4xf32>
      tpu.vector_store %arg8[%c18, %c0_144, %c0_145], %168 {strides = array<i32>} : memref<20x18x4xf32, #tpu.memory_space<vmem>>, vector<2x18x4xf32>,
      %cst_146 = arith.constant 0.000000e+00 : f32
      %170 = vector.broadcast %cst_146 : f32 to vector<20x1x4xf32>
      %c0_147 = arith.constant 0 : index
      %c0_148 = arith.constant 0 : index
      %c0_149 = arith.constant 0 : index
      %171 = vector.load %arg8[%c0_147, %c0_148, %c0_149] : memref<20x18x4xf32, #tpu.memory_space<vmem>>, vector<20x1x4xf32>
      tpu.vector_store %arg8[%c0_147, %c0_148, %c0_149], %170 {strides = array<i32>} : memref<20x18x4xf32, #tpu.memory_space<vmem>>, vector<20x1x4xf32>,
      %cst_150 = arith.constant 0.000000e+00 : f32
      %172 = vector.broadcast %cst_150 : f32 to vector<20x1x4xf32>
      %c0_151 = arith.constant 0 : index
      %c17 = arith.constant 17 : index
      %c0_152 = arith.constant 0 : index
      %173 = vector.load %arg8[%c0_151, %c17, %c0_152] : memref<20x18x4xf32, #tpu.memory_space<vmem>>, vector<20x1x4xf32>
      tpu.vector_store %arg8[%c0_151, %c17, %c0_152], %172 {strides = array<i32>} : memref<20x18x4xf32, #tpu.memory_space<vmem>>, vector<20x1x4xf32>,
      %c0_153 = arith.constant 0 : index
      %c0_154 = arith.constant 0 : index
      %c0_155 = arith.constant 0 : index
      %c0_156 = arith.constant 0 : index
      %174 = vector.load %arg2[%c0_153, %c0_154, %c0_155, %c0_156] : memref<1x16x16x4xf32, #tpu.memory_space<vmem>>, vector<1x16x16x4xf32>
      %175 = vector.shape_cast %174 : vector<1x16x16x4xf32> to vector<16x16x4xf32>
      %c2_157 = arith.constant 2 : index
      %c1_158 = arith.constant 1 : index
      %c0_159 = arith.constant 0 : index
      %176 = vector.load %arg8[%c2_157, %c1_158, %c0_159] : memref<20x18x4xf32, #tpu.memory_space<vmem>>, vector<16x16x4xf32>
      tpu.vector_store %arg8[%c2_157, %c1_158, %c0_159], %175 {strides = array<i32>} : memref<20x18x4xf32, #tpu.memory_space<vmem>>, vector<16x16x4xf32>,
      %cst_160 = arith.constant 0.000000e+00 : f32
      %177 = vector.broadcast %cst_160 : f32 to vector<10x1x8xf32>
      %c0_161 = arith.constant 0 : index
      %c0_162 = arith.constant 0 : index
      %c0_163 = arith.constant 0 : index
      %178 = vector.load %arg9[%c0_161, %c0_162, %c0_163] : memref<10x18x8xf32, #tpu.memory_space<vmem>>, vector<10x1x8xf32>
      tpu.vector_store %arg9[%c0_161, %c0_162, %c0_163], %177 {strides = array<i32>} : memref<10x18x8xf32, #tpu.memory_space<vmem>>, vector<10x1x8xf32>,
      %cst_164 = arith.constant 0.000000e+00 : f32
      %179 = vector.broadcast %cst_164 : f32 to vector<10x1x8xf32>
      %c0_165 = arith.constant 0 : index
      %c17_166 = arith.constant 17 : index
      %c0_167 = arith.constant 0 : index
      %180 = vector.load %arg9[%c0_165, %c17_166, %c0_167] : memref<10x18x8xf32, #tpu.memory_space<vmem>>, vector<10x1x8xf32>
      tpu.vector_store %arg9[%c0_165, %c17_166, %c0_167], %179 {strides = array<i32>} : memref<10x18x8xf32, #tpu.memory_space<vmem>>, vector<10x1x8xf32>,
    } else {
    }
    %c0_i32_1 = arith.constant 0 : i32
    %5 = arith.addi %1, %c0_i32_1 : i32
    %6 = arith.index_cast %5 : i32 to index
    %c0 = arith.constant 0 : index
    %c0_2 = arith.constant 0 : index
    %7 = vector.load %arg8[%6, %c0, %c0_2] : memref<20x18x4xf32, #tpu.memory_space<vmem>>, vector<10x16x4xf32>
    %c0_3 = arith.constant 0 : index
    %c0_4 = arith.constant 0 : index
    %c0_5 = arith.constant 0 : index
    %8 = vector.load %arg3[%c0_3, %c0_4, %c0_5] : memref<9x4x8xf32, #tpu.memory_space<vmem>>, vector<1x4x8xf32>
    %9 = vector.shape_cast %8 : vector<1x4x8xf32> to vector<4x8xf32>
    %cst = arith.constant dense<0.000000e+00> : vector<10x16x8xf32>
    %10 = tpu.matmul %7, %9, %cst {dimension_numbers = #tpu.dot_dimension_numbers<[2], [0], [0, 1], [1], [0, 0, 0, 1, 1, 1], [], []>} : vector<10x16x4xf32>, vector<4x8xf32>, vector<10x16x8xf32> -> vector<10x16x8xf32>
    %c0_i32_6 = arith.constant 0 : i32
    %11 = arith.addi %1, %c0_i32_6 : i32
    %12 = arith.index_cast %11 : i32 to index
    %c1 = arith.constant 1 : index
    %c0_7 = arith.constant 0 : index
    %13 = vector.load %arg8[%12, %c1, %c0_7] : memref<20x18x4xf32, #tpu.memory_space<vmem>>, vector<10x16x4xf32>
    %c1_8 = arith.constant 1 : index
    %c0_9 = arith.constant 0 : index
    %c0_10 = arith.constant 0 : index
    %14 = vector.load %arg3[%c1_8, %c0_9, %c0_10] : memref<9x4x8xf32, #tpu.memory_space<vmem>>, vector<1x4x8xf32>
    %15 = vector.shape_cast %14 : vector<1x4x8xf32> to vector<4x8xf32>
    %cst_11 = arith.constant dense<0.000000e+00> : vector<10x16x8xf32>
    %16 = tpu.matmul %13, %15, %cst_11 {dimension_numbers = #tpu.dot_dimension_numbers<[2], [0], [0, 1], [1], [0, 0, 0, 1, 1, 1], [], []>} : vector<10x16x4xf32>, vector<4x8xf32>, vector<10x16x8xf32> -> vector<10x16x8xf32>
    %17 = arith.addf %10, %16 : vector<10x16x8xf32>
    %c0_i32_12 = arith.constant 0 : i32
    %18 = arith.addi %1, %c0_i32_12 : i32
    %19 = arith.index_cast %18 : i32 to index
    %c2 = arith.constant 2 : index
    %c0_13 = arith.constant 0 : index
    %20 = vector.load %arg8[%19, %c2, %c0_13] : memref<20x18x4xf32, #tpu.memory_space<vmem>>, vector<10x16x4xf32>
    %c2_14 = arith.constant 2 : index
    %c0_15 = arith.constant 0 : index
    %c0_16 = arith.constant 0 : index
    %21 = vector.load %arg3[%c2_14, %c0_15, %c0_16] : memref<9x4x8xf32, #tpu.memory_space<vmem>>, vector<1x4x8xf32>
    %22 = vector.shape_cast %21 : vector<1x4x8xf32> to vector<4x8xf32>
    %cst_17 = arith.constant dense<0.000000e+00> : vector<10x16x8xf32>
    %23 = tpu.matmul %20, %22, %cst_17 {dimension_numbers = #tpu.dot_dimension_numbers<[2], [0], [0, 1], [1], [0, 0, 0, 1, 1, 1], [], []>} : vector<10x16x4xf32>, vector<4x8xf32>, vector<10x16x8xf32> -> vector<10x16x8xf32>
    %24 = arith.addf %17, %23 : vector<10x16x8xf32>
    %c1_i32 = arith.constant 1 : i32
    %25 = arith.addi %1, %c1_i32 : i32
    %26 = arith.index_cast %25 : i32 to index
    %c0_18 = arith.constant 0 : index
    %c0_19 = arith.constant 0 : index
    %27 = vector.load %arg8[%26, %c0_18, %c0_19] : memref<20x18x4xf32, #tpu.memory_space<vmem>>, vector<10x16x4xf32>
    %c3 = arith.constant 3 : index
    %c0_20 = arith.constant 0 : index
    %c0_21 = arith.constant 0 : index
    %28 = vector.load %arg3[%c3, %c0_20, %c0_21] : memref<9x4x8xf32, #tpu.memory_space<vmem>>, vector<1x4x8xf32>
    %29 = vector.shape_cast %28 : vector<1x4x8xf32> to vector<4x8xf32>
    %cst_22 = arith.constant dense<0.000000e+00> : vector<10x16x8xf32>
    %30 = tpu.matmul %27, %29, %cst_22 {dimension_numbers = #tpu.dot_dimension_numbers<[2], [0], [0, 1], [1], [0, 0, 0, 1, 1, 1], [], []>} : vector<10x16x4xf32>, vector<4x8xf32>, vector<10x16x8xf32> -> vector<10x16x8xf32>
    %31 = arith.addf %24, %30 : vector<10x16x8xf32>
    %c1_i32_23 = arith.constant 1 : i32
    %32 = arith.addi %1, %c1_i32_23 : i32
    %33 = arith.index_cast %32 : i32 to index
    %c1_24 = arith.constant 1 : index
    %c0_25 = arith.constant 0 : index
    %34 = vector.load %arg8[%33, %c1_24, %c0_25] : memref<20x18x4xf32, #tpu.memory_space<vmem>>, vector<10x16x4xf32>
    %c4 = arith.constant 4 : index
    %c0_26 = arith.constant 0 : index
    %c0_27 = arith.constant 0 : index
    %35 = vector.load %arg3[%c4, %c0_26, %c0_27] : memref<9x4x8xf32, #tpu.memory_space<vmem>>, vector<1x4x8xf32>
    %36 = vector.shape_cast %35 : vector<1x4x8xf32> to vector<4x8xf32>
    %cst_28 = arith.constant dense<0.000000e+00> : vector<10x16x8xf32>
    %37 = tpu.matmul %34, %36, %cst_28 {dimension_numbers = #tpu.dot_dimension_numbers<[2], [0], [0, 1], [1], [0, 0, 0, 1, 1, 1], [], []>} : vector<10x16x4xf32>, vector<4x8xf32>, vector<10x16x8xf32> -> vector<10x16x8xf32>
    %38 = arith.addf %31, %37 : vector<10x16x8xf32>
    %c1_i32_29 = arith.constant 1 : i32
    %39 = arith.addi %1, %c1_i32_29 : i32
    %40 = arith.index_cast %39 : i32 to index
    %c2_30 = arith.constant 2 : index
    %c0_31 = arith.constant 0 : index
    %41 = vector.load %arg8[%40, %c2_30, %c0_31] : memref<20x18x4xf32, #tpu.memory_space<vmem>>, vector<10x16x4xf32>
    %c5 = arith.constant 5 : index
    %c0_32 = arith.constant 0 : index
    %c0_33 = arith.constant 0 : index
    %42 = vector.load %arg3[%c5, %c0_32, %c0_33] : memref<9x4x8xf32, #tpu.memory_space<vmem>>, vector<1x4x8xf32>
    %43 = vector.shape_cast %42 : vector<1x4x8xf32> to vector<4x8xf32>
    %cst_34 = arith.constant dense<0.000000e+00> : vector<10x16x8xf32>
    %44 = tpu.matmul %41, %43, %cst_34 {dimension_numbers = #tpu.dot_dimension_numbers<[2], [0], [0, 1], [1], [0, 0, 0, 1, 1, 1], [], []>} : vector<10x16x4xf32>, vector<4x8xf32>, vector<10x16x8xf32> -> vector<10x16x8xf32>
    %45 = arith.addf %38, %44 : vector<10x16x8xf32>
    %c2_i32 = arith.constant 2 : i32
    %46 = arith.addi %1, %c2_i32 : i32
    %47 = arith.index_cast %46 : i32 to index
    %c0_35 = arith.constant 0 : index
    %c0_36 = arith.constant 0 : index
    %48 = vector.load %arg8[%47, %c0_35, %c0_36] : memref<20x18x4xf32, #tpu.memory_space<vmem>>, vector<10x16x4xf32>
    %c6 = arith.constant 6 : index
    %c0_37 = arith.constant 0 : index
    %c0_38 = arith.constant 0 : index
    %49 = vector.load %arg3[%c6, %c0_37, %c0_38] : memref<9x4x8xf32, #tpu.memory_space<vmem>>, vector<1x4x8xf32>
    %50 = vector.shape_cast %49 : vector<1x4x8xf32> to vector<4x8xf32>
    %cst_39 = arith.constant dense<0.000000e+00> : vector<10x16x8xf32>
    %51 = tpu.matmul %48, %50, %cst_39 {dimension_numbers = #tpu.dot_dimension_numbers<[2], [0], [0, 1], [1], [0, 0, 0, 1, 1, 1], [], []>} : vector<10x16x4xf32>, vector<4x8xf32>, vector<10x16x8xf32> -> vector<10x16x8xf32>
    %52 = arith.addf %45, %51 : vector<10x16x8xf32>
    %c2_i32_40 = arith.constant 2 : i32
    %53 = arith.addi %1, %c2_i32_40 : i32
    %54 = arith.index_cast %53 : i32 to index
    %c1_41 = arith.constant 1 : index
    %c0_42 = arith.constant 0 : index
    %55 = vector.load %arg8[%54, %c1_41, %c0_42] : memref<20x18x4xf32, #tpu.memory_space<vmem>>, vector<10x16x4xf32>
    %c7 = arith.constant 7 : index
    %c0_43 = arith.constant 0 : index
    %c0_44 = arith.constant 0 : index
    %56 = vector.load %arg3[%c7, %c0_43, %c0_44] : memref<9x4x8xf32, #tpu.memory_space<vmem>>, vector<1x4x8xf32>
    %57 = vector.shape_cast %56 : vector<1x4x8xf32> to vector<4x8xf32>
    %cst_45 = arith.constant dense<0.000000e+00> : vector<10x16x8xf32>
    %58 = tpu.matmul %55, %57, %cst_45 {dimension_numbers = #tpu.dot_dimension_numbers<[2], [0], [0, 1], [1], [0, 0, 0, 1, 1, 1], [], []>} : vector<10x16x4xf32>, vector<4x8xf32>, vector<10x16x8xf32> -> vector<10x16x8xf32>
    %59 = arith.addf %52, %58 : vector<10x16x8xf32>
    %c2_i32_46 = arith.constant 2 : i32
    %60 = arith.addi %1, %c2_i32_46 : i32
    %61 = arith.index_cast %60 : i32 to index
    %c2_47 = arith.constant 2 : index
    %c0_48 = arith.constant 0 : index
    %62 = vector.load %arg8[%61, %c2_47, %c0_48] : memref<20x18x4xf32, #tpu.memory_space<vmem>>, vector<10x16x4xf32>
    %c8 = arith.constant 8 : index
    %c0_49 = arith.constant 0 : index
    %c0_50 = arith.constant 0 : index
    %63 = vector.load %arg3[%c8, %c0_49, %c0_50] : memref<9x4x8xf32, #tpu.memory_space<vmem>>, vector<1x4x8xf32>
    %64 = vector.shape_cast %63 : vector<1x4x8xf32> to vector<4x8xf32>
    %cst_51 = arith.constant dense<0.000000e+00> : vector<10x16x8xf32>
    %65 = tpu.matmul %62, %64, %cst_51 {dimension_numbers = #tpu.dot_dimension_numbers<[2], [0], [0, 1], [1], [0, 0, 0, 1, 1, 1], [], []>} : vector<10x16x4xf32>, vector<4x8xf32>, vector<10x16x8xf32> -> vector<10x16x8xf32>
    %66 = arith.addf %59, %65 : vector<10x16x8xf32>
    %c0_52 = arith.constant 0 : index
    %c0_53 = arith.constant 0 : index
    %67 = vector.load %arg4[%c0_52, %c0_53] : memref<1x8xf32, #tpu.memory_space<vmem>>, vector<1x8xf32>
    %68 = vector.shape_cast %67 : vector<1x8xf32> to vector<1x1x8xf32>
    %69 = vector.broadcast %68 : vector<1x1x8xf32> to vector<10x16x8xf32>
    %70 = arith.addf %66, %69 : vector<10x16x8xf32>
    %cst_54 = arith.constant 0.000000e+00 : f32
    %71 = vector.broadcast %cst_54 : f32 to vector<10x16x8xf32>
    %72 = arith.cmpf ogt, %70, %71 : vector<10x16x8xf32>
    %cst_55 = arith.constant 2.000000e-01 : f32
    %73 = vector.broadcast %cst_55 : f32 to vector<10x16x8xf32>
    %74 = arith.mulf %73, %70 : vector<10x16x8xf32>
    %75 = arith.select %72, %70, %74 : vector<10x16x8xi1>, vector<10x16x8xf32>
    %76 = arith.mulf %75, %75 : vector<10x16x8xf32>
    %cst_56 = arith.constant dense<0.000000e+00> : vector<10x16xf32>
    %77 = vector.multi_reduction <add>, %76, %cst_56 [2] : vector<10x16x8xf32> to vector<10x16xf32>
    %78 = vector.shape_cast %77 : vector<10x16xf32> to vector<10x16x1xf32>
    %cst_57 = arith.constant 8.000000e+00 : f32
    %79 = vector.broadcast %cst_57 : f32 to vector<10x16x1xf32>
    %80 = arith.divf %78, %79 : vector<10x16x1xf32>
    %cst_58 = arith.constant 9.99999993E-9 : f32
    %81 = vector.broadcast %cst_58 : f32 to vector<10x16x1xf32>
    %82 = arith.addf %80, %81 : vector<10x16x1xf32>
    %83 = math.rsqrt %82 : vector<10x16x1xf32>
    %84 = vector.broadcast %83 : vector<10x16x1xf32> to vector<10x16x8xf32>
    %85 = arith.mulf %75, %84 : vector<10x16x8xf32>
    %c1_i32_59 = arith.constant 1 : i32
    %86 = arith.subi %1, %c1_i32_59 : i32
    %87 = tpu.iota {dimensions = array<i32: 0>} : vector<10x1x1xi32>
    %88 = vector.broadcast %86 : i32 to vector<10x1x1xi32>
    %89 = arith.addi %88, %87 : vector<10x1x1xi32>
    %c0_i32_60 = arith.constant 0 : i32
    %90 = vector.broadcast %c0_i32_60 : i32 to vector<10x1x1xi32>
    %91 = arith.cmpi sge, %89, %90 : vector<10x1x1xi32>
    %c16_i32 = arith.constant 16 : i32
    %92 = vector.broadcast %c16_i32 : i32 to vector<10x1x1xi32>
    %93 = arith.cmpi slt, %89, %92 : vector<10x1x1xi32>
    %94 = arith.andi %91, %93 : vector<10x1x1xi1>
    %cst_61 = arith.constant 0.000000e+00 : f32
    %95 = vector.shape_cast %94 : vector<10x1x1xi1> to vector<10x1x1xi1>
    %96 = vector.broadcast %95 : vector<10x1x1xi1> to vector<10x16x8xi1>
    %97 = vector.broadcast %cst_61 : f32 to vector<10x16x8xf32>
    %98 = arith.select %96, %85, %97 : vector<10x16x8xi1>, vector<10x16x8xf32>
    %c0_62 = arith.constant 0 : index
    %c1_63 = arith.constant 1 : index
    %c0_64 = arith.constant 0 : index
    %99 = vector.load %arg9[%c0_62, %c1_63, %c0_64] : memref<10x18x8xf32, #tpu.memory_space<vmem>>, vector<10x16x8xf32>
    tpu.vector_store %arg9[%c0_62, %c1_63, %c0_64], %98 {strides = array<i32>} : memref<10x18x8xf32, #tpu.memory_space<vmem>>, vector<10x16x8xf32>,
    %c0_65 = arith.constant 0 : index
    %c0_66 = arith.constant 0 : index
    %c0_67 = arith.constant 0 : index
    %100 = vector.load %arg9[%c0_65, %c0_66, %c0_67] : memref<10x18x8xf32, #tpu.memory_space<vmem>>, vector<8x16x8xf32>
    %c0_68 = arith.constant 0 : index
    %c0_69 = arith.constant 0 : index
    %c0_70 = arith.constant 0 : index
    %101 = vector.load %arg5[%c0_68, %c0_69, %c0_70] : memref<9x8x8xf32, #tpu.memory_space<vmem>>, vector<1x8x8xf32>
    %102 = vector.shape_cast %101 : vector<1x8x8xf32> to vector<8x8xf32>
    %cst_71 = arith.constant dense<0.000000e+00> : vector<8x16x8xf32>
    %103 = tpu.matmul %100, %102, %cst_71 {dimension_numbers = #tpu.dot_dimension_numbers<[2], [0], [0, 1], [1], [0, 0, 0, 1, 1, 1], [], []>} : vector<8x16x8xf32>, vector<8x8xf32>, vector<8x16x8xf32> -> vector<8x16x8xf32>
    %c0_72 = arith.constant 0 : index
    %c1_73 = arith.constant 1 : index
    %c0_74 = arith.constant 0 : index
    %104 = vector.load %arg9[%c0_72, %c1_73, %c0_74] : memref<10x18x8xf32, #tpu.memory_space<vmem>>, vector<8x16x8xf32>
    %c1_75 = arith.constant 1 : index
    %c0_76 = arith.constant 0 : index
    %c0_77 = arith.constant 0 : index
    %105 = vector.load %arg5[%c1_75, %c0_76, %c0_77] : memref<9x8x8xf32, #tpu.memory_space<vmem>>, vector<1x8x8xf32>
    %106 = vector.shape_cast %105 : vector<1x8x8xf32> to vector<8x8xf32>
    %cst_78 = arith.constant dense<0.000000e+00> : vector<8x16x8xf32>
    %107 = tpu.matmul %104, %106, %cst_78 {dimension_numbers = #tpu.dot_dimension_numbers<[2], [0], [0, 1], [1], [0, 0, 0, 1, 1, 1], [], []>} : vector<8x16x8xf32>, vector<8x8xf32>, vector<8x16x8xf32> -> vector<8x16x8xf32>
    %108 = arith.addf %103, %107 : vector<8x16x8xf32>
    %c0_79 = arith.constant 0 : index
    %c2_80 = arith.constant 2 : index
    %c0_81 = arith.constant 0 : index
    %109 = vector.load %arg9[%c0_79, %c2_80, %c0_81] : memref<10x18x8xf32, #tpu.memory_space<vmem>>, vector<8x16x8xf32>
    %c2_82 = arith.constant 2 : index
    %c0_83 = arith.constant 0 : index
    %c0_84 = arith.constant 0 : index
    %110 = vector.load %arg5[%c2_82, %c0_83, %c0_84] : memref<9x8x8xf32, #tpu.memory_space<vmem>>, vector<1x8x8xf32>
    %111 = vector.shape_cast %110 : vector<1x8x8xf32> to vector<8x8xf32>
    %cst_85 = arith.constant dense<0.000000e+00> : vector<8x16x8xf32>
    %112 = tpu.matmul %109, %111, %cst_85 {dimension_numbers = #tpu.dot_dimension_numbers<[2], [0], [0, 1], [1], [0, 0, 0, 1, 1, 1], [], []>} : vector<8x16x8xf32>, vector<8x8xf32>, vector<8x16x8xf32> -> vector<8x16x8xf32>
    %113 = arith.addf %108, %112 : vector<8x16x8xf32>
    %c1_86 = arith.constant 1 : index
    %c0_87 = arith.constant 0 : index
    %c0_88 = arith.constant 0 : index
    %114 = vector.load %arg9[%c1_86, %c0_87, %c0_88] : memref<10x18x8xf32, #tpu.memory_space<vmem>>, vector<8x16x8xf32>
    %c3_89 = arith.constant 3 : index
    %c0_90 = arith.constant 0 : index
    %c0_91 = arith.constant 0 : index
    %115 = vector.load %arg5[%c3_89, %c0_90, %c0_91] : memref<9x8x8xf32, #tpu.memory_space<vmem>>, vector<1x8x8xf32>
    %116 = vector.shape_cast %115 : vector<1x8x8xf32> to vector<8x8xf32>
    %cst_92 = arith.constant dense<0.000000e+00> : vector<8x16x8xf32>
    %117 = tpu.matmul %114, %116, %cst_92 {dimension_numbers = #tpu.dot_dimension_numbers<[2], [0], [0, 1], [1], [0, 0, 0, 1, 1, 1], [], []>} : vector<8x16x8xf32>, vector<8x8xf32>, vector<8x16x8xf32> -> vector<8x16x8xf32>
    %118 = arith.addf %113, %117 : vector<8x16x8xf32>
    %c1_93 = arith.constant 1 : index
    %c1_94 = arith.constant 1 : index
    %c0_95 = arith.constant 0 : index
    %119 = vector.load %arg9[%c1_93, %c1_94, %c0_95] : memref<10x18x8xf32, #tpu.memory_space<vmem>>, vector<8x16x8xf32>
    %c4_96 = arith.constant 4 : index
    %c0_97 = arith.constant 0 : index
    %c0_98 = arith.constant 0 : index
    %120 = vector.load %arg5[%c4_96, %c0_97, %c0_98] : memref<9x8x8xf32, #tpu.memory_space<vmem>>, vector<1x8x8xf32>
    %121 = vector.shape_cast %120 : vector<1x8x8xf32> to vector<8x8xf32>
    %cst_99 = arith.constant dense<0.000000e+00> : vector<8x16x8xf32>
    %122 = tpu.matmul %119, %121, %cst_99 {dimension_numbers = #tpu.dot_dimension_numbers<[2], [0], [0, 1], [1], [0, 0, 0, 1, 1, 1], [], []>} : vector<8x16x8xf32>, vector<8x8xf32>, vector<8x16x8xf32> -> vector<8x16x8xf32>
    %123 = arith.addf %118, %122 : vector<8x16x8xf32>
    %c1_100 = arith.constant 1 : index
    %c2_101 = arith.constant 2 : index
    %c0_102 = arith.constant 0 : index
    %124 = vector.load %arg9[%c1_100, %c2_101, %c0_102] : memref<10x18x8xf32, #tpu.memory_space<vmem>>, vector<8x16x8xf32>
    %c5_103 = arith.constant 5 : index
    %c0_104 = arith.constant 0 : index
    %c0_105 = arith.constant 0 : index
    %125 = vector.load %arg5[%c5_103, %c0_104, %c0_105] : memref<9x8x8xf32, #tpu.memory_space<vmem>>, vector<1x8x8xf32>
    %126 = vector.shape_cast %125 : vector<1x8x8xf32> to vector<8x8xf32>
    %cst_106 = arith.constant dense<0.000000e+00> : vector<8x16x8xf32>
    %127 = tpu.matmul %124, %126, %cst_106 {dimension_numbers = #tpu.dot_dimension_numbers<[2], [0], [0, 1], [1], [0, 0, 0, 1, 1, 1], [], []>} : vector<8x16x8xf32>, vector<8x8xf32>, vector<8x16x8xf32> -> vector<8x16x8xf32>
    %128 = arith.addf %123, %127 : vector<8x16x8xf32>
    %c2_107 = arith.constant 2 : index
    %c0_108 = arith.constant 0 : index
    %c0_109 = arith.constant 0 : index
    %129 = vector.load %arg9[%c2_107, %c0_108, %c0_109] : memref<10x18x8xf32, #tpu.memory_space<vmem>>, vector<8x16x8xf32>
    %c6_110 = arith.constant 6 : index
    %c0_111 = arith.constant 0 : index
    %c0_112 = arith.constant 0 : index
    %130 = vector.load %arg5[%c6_110, %c0_111, %c0_112] : memref<9x8x8xf32, #tpu.memory_space<vmem>>, vector<1x8x8xf32>
    %131 = vector.shape_cast %130 : vector<1x8x8xf32> to vector<8x8xf32>
    %cst_113 = arith.constant dense<0.000000e+00> : vector<8x16x8xf32>
    %132 = tpu.matmul %129, %131, %cst_113 {dimension_numbers = #tpu.dot_dimension_numbers<[2], [0], [0, 1], [1], [0, 0, 0, 1, 1, 1], [], []>} : vector<8x16x8xf32>, vector<8x8xf32>, vector<8x16x8xf32> -> vector<8x16x8xf32>
    %133 = arith.addf %128, %132 : vector<8x16x8xf32>
    %c2_114 = arith.constant 2 : index
    %c1_115 = arith.constant 1 : index
    %c0_116 = arith.constant 0 : index
    %134 = vector.load %arg9[%c2_114, %c1_115, %c0_116] : memref<10x18x8xf32, #tpu.memory_space<vmem>>, vector<8x16x8xf32>
    %c7_117 = arith.constant 7 : index
    %c0_118 = arith.constant 0 : index
    %c0_119 = arith.constant 0 : index
    %135 = vector.load %arg5[%c7_117, %c0_118, %c0_119] : memref<9x8x8xf32, #tpu.memory_space<vmem>>, vector<1x8x8xf32>
    %136 = vector.shape_cast %135 : vector<1x8x8xf32> to vector<8x8xf32>
    %cst_120 = arith.constant dense<0.000000e+00> : vector<8x16x8xf32>
    %137 = tpu.matmul %134, %136, %cst_120 {dimension_numbers = #tpu.dot_dimension_numbers<[2], [0], [0, 1], [1], [0, 0, 0, 1, 1, 1], [], []>} : vector<8x16x8xf32>, vector<8x8xf32>, vector<8x16x8xf32> -> vector<8x16x8xf32>
    %138 = arith.addf %133, %137 : vector<8x16x8xf32>
    %c2_121 = arith.constant 2 : index
    %c2_122 = arith.constant 2 : index
    %c0_123 = arith.constant 0 : index
    %139 = vector.load %arg9[%c2_121, %c2_122, %c0_123] : memref<10x18x8xf32, #tpu.memory_space<vmem>>, vector<8x16x8xf32>
    %c8_124 = arith.constant 8 : index
    %c0_125 = arith.constant 0 : index
    %c0_126 = arith.constant 0 : index
    %140 = vector.load %arg5[%c8_124, %c0_125, %c0_126] : memref<9x8x8xf32, #tpu.memory_space<vmem>>, vector<1x8x8xf32>
    %141 = vector.shape_cast %140 : vector<1x8x8xf32> to vector<8x8xf32>
    %cst_127 = arith.constant dense<0.000000e+00> : vector<8x16x8xf32>
    %142 = tpu.matmul %139, %141, %cst_127 {dimension_numbers = #tpu.dot_dimension_numbers<[2], [0], [0, 1], [1], [0, 0, 0, 1, 1, 1], [], []>} : vector<8x16x8xf32>, vector<8x8xf32>, vector<8x16x8xf32> -> vector<8x16x8xf32>
    %143 = arith.addf %138, %142 : vector<8x16x8xf32>
    %c0_128 = arith.constant 0 : index
    %c0_129 = arith.constant 0 : index
    %144 = vector.load %arg6[%c0_128, %c0_129] : memref<1x8xf32, #tpu.memory_space<vmem>>, vector<1x8xf32>
    %145 = vector.shape_cast %144 : vector<1x8xf32> to vector<1x1x8xf32>
    %146 = vector.broadcast %145 : vector<1x1x8xf32> to vector<8x16x8xf32>
    %147 = arith.addf %143, %146 : vector<8x16x8xf32>
    %cst_130 = arith.constant 0.000000e+00 : f32
    %148 = vector.broadcast %cst_130 : f32 to vector<8x16x8xf32>
    %149 = arith.cmpf ogt, %147, %148 : vector<8x16x8xf32>
    %cst_131 = arith.constant 2.000000e-01 : f32
    %150 = vector.broadcast %cst_131 : f32 to vector<8x16x8xf32>
    %151 = arith.mulf %150, %147 : vector<8x16x8xf32>
    %152 = arith.select %149, %147, %151 : vector<8x16x8xi1>, vector<8x16x8xf32>
    %153 = arith.mulf %152, %152 : vector<8x16x8xf32>
    %cst_132 = arith.constant dense<0.000000e+00> : vector<8x16xf32>
    %154 = vector.multi_reduction <add>, %153, %cst_132 [2] : vector<8x16x8xf32> to vector<8x16xf32>
    %155 = vector.shape_cast %154 : vector<8x16xf32> to vector<8x16x1xf32>
    %cst_133 = arith.constant 8.000000e+00 : f32
    %156 = vector.broadcast %cst_133 : f32 to vector<8x16x1xf32>
    %157 = arith.divf %155, %156 : vector<8x16x1xf32>
    %cst_134 = arith.constant 9.99999993E-9 : f32
    %158 = vector.broadcast %cst_134 : f32 to vector<8x16x1xf32>
    %159 = arith.addf %157, %158 : vector<8x16x1xf32>
    %160 = math.rsqrt %159 : vector<8x16x1xf32>
    %161 = vector.broadcast %160 : vector<8x16x1xf32> to vector<8x16x8xf32>
    %162 = arith.mulf %152, %161 : vector<8x16x8xf32>
    %c0_135 = arith.constant 0 : index
    %c0_136 = arith.constant 0 : index
    %c0_137 = arith.constant 0 : index
    %c0_138 = arith.constant 0 : index
    %163 = vector.load %arg7[%c0_135, %c0_136, %c0_137, %c0_138] : memref<1x8x16x8xf32, #tpu.memory_space<vmem>>, vector<1x8x16x8xf32>
    %164 = vector.shape_cast %163 : vector<1x8x16x8xf32> to vector<8x16x8xf32>
    %165 = vector.shape_cast %162 : vector<8x16x8xf32> to vector<1x8x16x8xf32>
    tpu.vector_store %arg7[%c0_135, %c0_136, %c0_137, %c0_138], %165 {strides = array<i32>} : memref<1x8x16x8xf32, #tpu.memory_space<vmem>>, vector<1x8x16x8xf32>,
    return
  }
  func.func @transform_0(%arg0: i32, %arg1: i32) -> (i32, i32, i32, i32) {
    %c0_i32 = arith.constant 0 : i32
    %c0_i32_0 = arith.constant 0 : i32
    %c0_i32_1 = arith.constant 0 : i32
    %c0_i32_2 = arith.constant 0 : i32
    return %arg0, %c0_i32, %c0_i32_0, %c0_i32_1 : i32, i32, i32, i32
  }
  func.func @transform_1(%arg0: i32, %arg1: i32) -> (i32, i32, i32) {
    %c0_i32 = arith.constant 0 : i32
    %c0_i32_0 = arith.constant 0 : i32
    %c0_i32_1 = arith.constant 0 : i32
    %c0_i32_2 = arith.constant 0 : i32
    return %c0_i32, %c0_i32_0, %c0_i32_1 : i32, i32, i32
  }
  func.func @transform_2(%arg0: i32, %arg1: i32) -> (i32, i32) {
    %c0_i32 = arith.constant 0 : i32
    %c0_i32_0 = arith.constant 0 : i32
    %c0_i32_1 = arith.constant 0 : i32
    return %c0_i32, %c0_i32_0 : i32, i32
  }
  func.func @transform_3(%arg0: i32, %arg1: i32) -> (i32, i32, i32) {
    %c0_i32 = arith.constant 0 : i32
    %c0_i32_0 = arith.constant 0 : i32
    %c0_i32_1 = arith.constant 0 : i32
    %c0_i32_2 = arith.constant 0 : i32
    return %c0_i32, %c0_i32_0, %c0_i32_1 : i32, i32, i32
  }
  func.func @transform_4(%arg0: i32, %arg1: i32) -> (i32, i32) {
    %c0_i32 = arith.constant 0 : i32
    %c0_i32_0 = arith.constant 0 : i32
    %c0_i32_1 = arith.constant 0 : i32
    return %c0_i32, %c0_i32_0 : i32, i32
  }
  func.func @transform_5(%arg0: i32, %arg1: i32) -> (i32, i32, i32, i32) {
    %c0_i32 = arith.constant 0 : i32
    %c0_i32_0 = arith.constant 0 : i32
    %c0_i32_1 = arith.constant 0 : i32
    return %arg0, %arg1, %c0_i32, %c0_i32_0 : i32, i32, i32, i32
  }
}

</mosaic_0001>

<llo_original>
// kernel: tpu_custom_call.1
$region0: #{tpu_custom_call.1}
  #allocation0 [shape = 'u32[]', space=smem, size = 0x4, offset = 0x4, fixed_abs, tag = 'smem constant byte address 0x4 - core index']
  #allocation1 [shape = 'u32[72,128]{1,0:T(1,128)}', space=vmem, size = 0x9000, scoped, tag = 'internal scratch']
  #allocation2 [shape = 'f32[20,18,4]{2,1,0:T(8,128)}', space=vmem, size = 0x3c000, scoped, tag = 'scratch operand']
  #allocation3 [shape = 'f32[10,18,8]{2,1,0:T(8,128)}', space=vmem, size = 0x1e000, scoped, tag = 'scratch operand']
  %s0 = inlined_call_operand.vmem [shape: f32[2,16,16,4], index: 0, kind: input, shape index: {}]
  %s1 = inlined_call_operand.vmem [shape: f32[9,4,8], index: 1, kind: input, shape index: {}]
  %s2 = inlined_call_operand.vmem [shape: f32[1,8], index: 2, kind: input, shape index: {}]
  %s3 = inlined_call_operand.vmem [shape: f32[9,8,8], index: 3, kind: input, shape index: {}]
  %s4 = inlined_call_operand.vmem [shape: f32[1,8], index: 4, kind: input, shape index: {}]
  %s5 = inlined_call_operand.vmem [shape: f32[2,16,16,8], index: 5, kind: output, shape index: {}]
  %s6 = sld [smem:[#allocation0]]
  $region57: #{tpu_custom_call.1} parent=0
    _
  %s8 = ssub.s32 1, %s6
  %s9 = scalar_select 0, %s8, %s6
  loop: start=0, step=1, limit=6
  $region2: #{tpu_custom_call.1} parent=0 // loop_pre_header
    _
  $region3: #{tpu_custom_call.1} parent=0 // loop_header
    %s11 = sphi 0, %s15
    %p12 = scmp.ge.s32.totalorder %s11, 6
    %s18 = sphi 0, %s30
    %s19 = sphi 0, %s26
    %s20 = sphi 0, %s18
    %s21 = sphi 0, %s19
    %s22 = sphi 0, %s20
    %s23 = sphi 0, %s21
    %s33 = sphi 0, %s35
    %s36 = sphi 0, %s33
    %s37 = sphi 0, %s36
    %s53 = sphi 0, %s37
    %s57 = sphi 0, %s57
    %s59 = sphi 0, %s57
    %s60 = sphi 0, %s59
    %s74 = sphi 0, %s60
    %s78 = sphi 0, %s78
    %s80 = sphi 0, %s78
    %s81 = sphi 0, %s80
    %s95 = sphi 0, %s81
    %s99 = sphi 0, %s99
    %s101 = sphi 0, %s99
    %s102 = sphi 0, %s101
    %s116 = sphi 0, %s102
    %s120 = sphi 0, %s120
    %s122 = sphi 0, %s120
    %s123 = sphi 0, %s122
    %s137 = sphi 0, %s123
    %s145 = sphi 0, %s147
    %s148 = sphi 0, %s145
    %s149 = sphi 0, %s148
    %s165 = sphi 0, %s149
  $region4: #{tpu_custom_call.1} parent=0 // loop_header_branch
    %14 = sbr.rel (%p12) target = $region8
  $region5: #{tpu_custom_call.1} parent=0 // loop_body
    %s16 = ssub.s32 %s11, 1
    %s17 = ssub.s32 %s11, 2
    %s24 = sadd.s32 1, %s19
    %p25 = scmp.ge.s32.totalorder %s24, 2
    %s26 = scalar_select %p25, 0, %s24
    %s27 = sadd.s32 1, %s18
    %s28 = scalar_select %p25, %s27, %s18
    %p29 = scmp.ge.s32.totalorder %s28, 2
    %s30 = scalar_select %p29, 0, %s28
    %s31 = ssub.s32 %s18, %s30
    %p32 = scmp.eq.s32.totalorder %s31, 0
    %s34 = sadd.s32 %s33, 1
    %s35 = scalar_select %p32, %s33, %s34
    %p38 = pneg %p32
    %p39 = scmp.eq.s32.totalorder %s11, 3
    %p40 = por %p38, %p39
    %p41 = scmp.ne.s32.totalorder %s33, %s36
    %p42 = scmp.eq.s32.totalorder %s11, 0
    %p43 = por %p41, %p42
    %p44 = scmp.ne.s32.totalorder %s33, %s36
    %p45 = scmp.eq.s32.totalorder %s16, 3
    %p46 = por %p44, %p45
    %p47 = scmp.ne.s32.totalorder %s36, %s37
    %p48 = scmp.eq.s32.totalorder %s16, 0
    %p49 = por %p47, %p48
    %p50 = scmp.ne.s32.totalorder %s36, %s37
    %p51 = scmp.eq.s32.totalorder %s17, 3
    %p52 = por %p50, %p51
    %p54 = scmp.ne.s32.totalorder %s37, %s53
    %p55 = scmp.eq.s32.totalorder %s17, 0
    %p56 = por %p54, %p55
    %s58 = sadd.s32 %s57, 1
    %p61 = scmp.eq.s32.totalorder %s11, 3
    %p62 = scmp.ne.s32.totalorder %s57, %s59
    %p63 = scmp.eq.s32.totalorder %s11, 0
    %p64 = por %p62, %p63
    %p65 = scmp.ne.s32.totalorder %s57, %s59
    %p66 = scmp.eq.s32.totalorder %s16, 3
    %p67 = por %p65, %p66
    %p68 = scmp.ne.s32.totalorder %s59, %s60
    %p69 = scmp.eq.s32.totalorder %s16, 0
    %p70 = por %p68, %p69
    %p71 = scmp.ne.s32.totalorder %s59, %s60
    %p72 = scmp.eq.s32.totalorder %s17, 3
    %p73 = por %p71, %p72
    %p75 = scmp.ne.s32.totalorder %s60, %s74
    %p76 = scmp.eq.s32.totalorder %s17, 0
    %p77 = por %p75, %p76
    %s79 = sadd.s32 %s78, 1
    %p82 = scmp.eq.s32.totalorder %s11, 3
    %p83 = scmp.ne.s32.totalorder %s78, %s80
    %p84 = scmp.eq.s32.totalorder %s11, 0
    %p85 = por %p83, %p84
    %p86 = scmp.ne.s32.totalorder %s78, %s80
    %p87 = scmp.eq.s32.totalorder %s16, 3
    %p88 = por %p86, %p87
    %p89 = scmp.ne.s32.totalorder %s80, %s81
    %p90 = scmp.eq.s32.totalorder %s16, 0
    %p91 = por %p89, %p90
    %p92 = scmp.ne.s32.totalorder %s80, %s81
    %p93 = scmp.eq.s32.totalorder %s17, 3
    %p94 = por %p92, %p93
    %p96 = scmp.ne.s32.totalorder %s81, %s95
    %p97 = scmp.eq.s32.totalorder %s17, 0
    %p98 = por %p96, %p97
    %s100 = sadd.s32 %s99, 1
    %p103 = scmp.eq.s32.totalorder %s11, 3
    %p104 = scmp.ne.s32.totalorder %s99, %s101
    %p105 = scmp.eq.s32.totalorder %s11, 0
    %p106 = por %p104, %p105
    %p107 = scmp.ne.s32.totalorder %s99, %s101
    %p108 = scmp.eq.s32.totalorder %s16, 3
    %p109 = por %p107, %p108
    %p110 = scmp.ne.s32.totalorder %s101, %s102
    %p111 = scmp.eq.s32.totalorder %s16, 0
    %p112 = por %p110, %p111
    %p113 = scmp.ne.s32.totalorder %s101, %s102
    %p114 = scmp.eq.s32.totalorder %s17, 3
    %p115 = por %p113, %p114
    %p117 = scmp.ne.s32.totalorder %s102, %s116
    %p118 = scmp.eq.s32.totalorder %s17, 0
    %p119 = por %p117, %p118
    %s121 = sadd.s32 %s120, 1
    %p124 = scmp.eq.s32.totalorder %s11, 3
    %p125 = scmp.ne.s32.totalorder %s120, %s122
    %p126 = scmp.eq.s32.totalorder %s11, 0
    %p127 = por %p125, %p126
    %p128 = scmp.ne.s32.totalorder %s120, %s122
    %p129 = scmp.eq.s32.totalorder %s16, 3
    %p130 = por %p128, %p129
    %p131 = scmp.ne.s32.totalorder %s122, %s123
    %p132 = scmp.eq.s32.totalorder %s16, 0
    %p133 = por %p131, %p132
    %p134 = scmp.ne.s32.totalorder %s122, %s123
    %p135 = scmp.eq.s32.totalorder %s17, 3
    %p136 = por %p134, %p135
    %p138 = scmp.ne.s32.totalorder %s123, %s137
    %p139 = scmp.eq.s32.totalorder %s17, 0
    %p140 = por %p138, %p139
    %s141 = ssub.s32 %s18, %s30
    %s142 = ssub.s32 %s19, %s26
    %s143 = sor.u32 %s141, %s142
    %p144 = scmp.eq.s32.totalorder %s143, 0
    %s146 = sadd.s32 %s145, 1
    %s147 = scalar_select %p144, %s145, %s146
    %p150 = pneg %p144
    %p151 = scmp.eq.s32.totalorder %s11, 3
    %p152 = por %p150, %p151
    %p153 = scmp.ne.s32.totalorder %s145, %s148
    %p154 = scmp.eq.s32.totalorder %s11, 0
    %p155 = por %p153, %p154
    %p156 = scmp.ne.s32.totalorder %s145, %s148
    %p157 = scmp.eq.s32.totalorder %s16, 3
    %p158 = por %p156, %p157
    %p159 = scmp.ne.s32.totalorder %s148, %s149
    %p160 = scmp.eq.s32.totalorder %s16, 0
    %p161 = por %p159, %p160
    %p162 = scmp.ne.s32.totalorder %s148, %s149
    %p163 = scmp.eq.s32.totalorder %s17, 3
    %p164 = por %p162, %p163
    %p166 = scmp.ne.s32.totalorder %s149, %s165
    %p167 = scmp.eq.s32.totalorder %s17, 0
    %p168 = por %p166, %p167
    %p169 = scmp.le.s32.totalorder 1, %s11
    %p170 = scmp.lt.s32.totalorder %s11, 5
    %p171 = pnand %p169, %p170
    %p172 = pneg %p171
    // Predicated region
    $region9: #{tpu_custom_call.1} parent=5 // pred_check
      _
    $region10: #{tpu_custom_call.1} parent=5 // pred_check_branch
      %174 = sbr.rel (%p171) target = $region12
    $region11: #{tpu_custom_call.1} parent=5 // pred_region
      %s175 = ssub.s32 %s11, 1
      // Predicated region
      $region13: #{tpu_custom_call.1} parent=11 // pred_check
        %p176 = pneg %p70
      $region14: #{tpu_custom_call.1} parent=11 // pred_check_branch
        %178 = sbr.rel (%p176) target = $region16
      $region15: #{tpu_custom_call.1} parent=11 // pred_region
        _
      $region16: #{tpu_custom_call.1} parent=11 // pred_fallthru
        _
      // Predicated region
      $region17: #{tpu_custom_call.1} parent=11 // pred_check
        %p179 = pneg %p91
      $region18: #{tpu_custom_call.1} parent=11 // pred_check_branch
        %181 = sbr.rel (%p179) target = $region20
      $region19: #{tpu_custom_call.1} parent=11 // pred_region
        _
      $region20: #{tpu_custom_call.1} parent=11 // pred_fallthru
        _
      // Predicated region
      $region21: #{tpu_custom_call.1} parent=11 // pred_check
        %p182 = pneg %p112
      $region22: #{tpu_custom_call.1} parent=11 // pred_check_branch
        %184 = sbr.rel (%p182) target = $region24
      $region23: #{tpu_custom_call.1} parent=11 // pred_region
        _
      $region24: #{tpu_custom_call.1} parent=11 // pred_fallthru
        _
      // Predicated region
      $region25: #{tpu_custom_call.1} parent=11 // pred_check
        %p185 = pneg %p133
      $region26: #{tpu_custom_call.1} parent=11 // pred_check_branch
        %187 = sbr.rel (%p185) target = $region28
      $region27: #{tpu_custom_call.1} parent=11 // pred_region
        _
      $region28: #{tpu_custom_call.1} parent=11 // pred_fallthru
        _
    $region12: #{tpu_custom_call.1} parent=5 // pred_fallthru
      _
    %p188 = scmp.lt.s32.totalorder %s11, 4
    // Predicated region
    $region29: #{tpu_custom_call.1} parent=5 // pred_check
      %p189 = pneg %p188
    $region30: #{tpu_custom_call.1} parent=5 // pred_check_branch
      %191 = sbr.rel (%p189) target = $region32
    $region31: #{tpu_custom_call.1} parent=5 // pred_region
      // Predicated region
      $region33: #{tpu_custom_call.1} parent=31 // pred_check
        %p192 = pneg %p43
      $region34: #{tpu_custom_call.1} parent=31 // pred_check_branch
        %194 = sbr.rel (%p192) target = $region36
      $region35: #{tpu_custom_call.1} parent=31 // pred_region
        %p195 = scmp.lt.s32.totalorder %s18, 1
        %s196 = scalar_select %p195, %s18, 1
        %s197 = smul.addr %s196, 32
        %s198 = smul.addr %s197, 8
        %s199 = scalar_lea.vmem %s0, %s198
      $region36: #{tpu_custom_call.1} parent=31 // pred_fallthru
        _
    $region32: #{tpu_custom_call.1} parent=5 // pred_fallthru
      _
    %p200 = scmp.le.s32.totalorder 1, %s11
    %p201 = scmp.lt.s32.totalorder %s11, 5
    %p202 = pnand %p200, %p201
    %p203 = pneg %p202
    // Predicated region
    $region37: #{tpu_custom_call.1} parent=5 // pred_check
      _
    $region38: #{tpu_custom_call.1} parent=5 // pred_check_branch
      %205 = sbr.rel (%p202) target = $region40
    $region39: #{tpu_custom_call.1} parent=5 // pred_region
      %s206 = ssub.s32 %s11, 1
      %p207 = scmp.lt.s32.totalorder %s20, 1
      %s208 = scalar_select %p207, %s20, 1
      %s209 = smul.addr %s208, 32
      %s210 = smul.addr %s209, 8
      %s211 = scalar_lea.vmem %s0, %s210
      %p212 = pneg %p49
      %p213 = pneg %p46
      %p214 = pneg %p70
      %p215 = pneg %p67
      %p216 = pneg %p91
      %p217 = pneg %p88
      %p218 = pneg %p112
      %p219 = pneg %p109
      %p220 = pneg %p133
      %p221 = pneg %p130
      %p222 = pneg %p161
      %p223 = pneg %p158
      %s224 = smul.u32 8, %s21
      %p225 = scmp.lt.s32.totalorder %s20, 1
      %s226 = scalar_select %p225, %s20, 1
      %p227 = scmp.lt.s32.totalorder %s224, 15
      %s228 = scalar_select %p227, %s224, 15
      %s229 = smul.addr %s228, 2
      %s230 = smul.addr %s226, 32
      %s231 = sadd.s32 %s229, %s230
      %s232 = smul.addr %s231, 8
      %s233 = scalar_lea.vmem %s5, %s232
      %p234 = scmp.lt.s32.totalorder %s20, 1
      %s235 = scalar_select %p234, %s20, 1
      %s236 = smul.addr %s235, 32
      %s237 = smul.addr %s236, 8
      %s238 = scalar_lea.vmem %s0, %s237
      %s239 = smul.u32 8, %s21
      %p240 = scmp.lt.s32.totalorder %s20, 1
      %s241 = scalar_select %p240, %s20, 1
      %p242 = scmp.lt.s32.totalorder %s239, 15
      %s243 = scalar_select %p242, %s239, 15
      %s244 = smul.addr %s243, 2
      %s245 = smul.addr %s241, 32
      %s246 = sadd.s32 %s244, %s245
      %s247 = smul.addr %s246, 8
      %s248 = scalar_lea.vmem %s5, %s247
      %s249 = smul.u32 8, %s21
      %s250 = smul.u32 %s21, 8
      %p251 = scmp.eq.s32.totalorder %s21, 0
      // Predicated region
      $region41: #{tpu_custom_call.1} parent=39 // pred_check
        %p252 = pneg %p251
      $region42: #{tpu_custom_call.1} parent=39 // pred_check_branch
        %254 = sbr.rel (%p252) target = $region44
      $region43: #{tpu_custom_call.1} parent=39 // pred_region
        %vm255 = vcmask 31744
        %256 = vst.msk [vmem:[#allocation2] sm:$0xff] %vm255, 0.0
        %257 = vst.msk [vmem:[#allocation2 + $0x8] sm:$0xff] %vm255, 0.0
        %vm258 = vcmask 25600
        %259 = vst.msk [vmem:[#allocation2 + $0x10] sm:$0x3] %vm258, 0.0
        %260 = vst.msk [vmem:[#allocation2 + $0x18] sm:$0xff] %vm255, 0.0
        %261 = vst.msk [vmem:[#allocation2 + $0x20] sm:$0xff] %vm255, 0.0
        %262 = vst.msk [vmem:[#allocation2 + $0x28] sm:$0x3] %vm258, 0.0
        %s263 = scalar_lea.vmem [#allocation2], 432
        %264 = vst.msk [vmem:[%s263] sm:$0xff] %vm255, 0.0
        %265 = vst.msk [vmem:[%s263 + $0x8] sm:$0xff] %vm255, 0.0
        %266 = vst.msk [vmem:[%s263 + $0x10] sm:$0x3] %vm258, 0.0
        %267 = vst.msk [vmem:[%s263 + $0x18] sm:$0xff] %vm255, 0.0
        %268 = vst.msk [vmem:[%s263 + $0x20] sm:$0xff] %vm255, 0.0
        %269 = vst.msk [vmem:[%s263 + $0x28] sm:$0x3] %vm258, 0.0
        %vm270 = vcmask 24576
        %271 = vst.msk [vmem:[#allocation2] sm:$0x1] %vm270, 0.0
        %272 = vst.msk [vmem:[#allocation2 + $0x18] sm:$0x1] %vm270, 0.0
        %273 = vst.msk [vmem:[#allocation2 + $0x30] sm:$0x1] %vm270, 0.0
        %274 = vst.msk [vmem:[#allocation2 + $0x48] sm:$0x1] %vm270, 0.0
        %275 = vst.msk [vmem:[#allocation2 + $0x60] sm:$0x1] %vm270, 0.0
        %276 = vst.msk [vmem:[#allocation2 + $0x78] sm:$0x1] %vm270, 0.0
        %277 = vst.msk [vmem:[#allocation2 + $0x90] sm:$0x1] %vm270, 0.0
        %278 = vst.msk [vmem:[#allocation2 + $0xa8] sm:$0x1] %vm270, 0.0
        %279 = vst.msk [vmem:[#allocation2 + $0xc0] sm:$0x1] %vm270, 0.0
        %280 = vst.msk [vmem:[#allocation2 + $0xd8] sm:$0x1] %vm270, 0.0
        %281 = vst.msk [vmem:[#allocation2 + $0xf0] sm:$0x1] %vm270, 0.0
        %282 = vst.msk [vmem:[#allocation2 + $0x108] sm:$0x1] %vm270, 0.0
        %283 = vst.msk [vmem:[#allocation2 + $0x120] sm:$0x1] %vm270, 0.0
        %284 = vst.msk [vmem:[#allocation2 + $0x138] sm:$0x1] %vm270, 0.0
        %285 = vst.msk [vmem:[#allocation2 + $0x150] sm:$0x1] %vm270, 0.0
        %286 = vst.msk [vmem:[#allocation2 + $0x168] sm:$0x1] %vm270, 0.0
        %287 = vst.msk [vmem:[#allocation2 + $0x180] sm:$0x1] %vm270, 0.0
        %288 = vst.msk [vmem:[#allocation2 + $0x198] sm:$0x1] %vm270, 0.0
        %289 = vst.msk [vmem:[#allocation2 + $0x1b0] sm:$0x1] %vm270, 0.0
        %290 = vst.msk [vmem:[#allocation2 + $0x1c8] sm:$0x1] %vm270, 0.0
        %291 = vst.msk [vmem:[#allocation2 + $0x11] sm:$0x1] %vm270, 0.0
        %292 = vst.msk [vmem:[#allocation2 + $0x29] sm:$0x1] %vm270, 0.0
        %293 = vst.msk [vmem:[#allocation2 + $0x41] sm:$0x1] %vm270, 0.0
        %294 = vst.msk [vmem:[#allocation2 + $0x59] sm:$0x1] %vm270, 0.0
        %295 = vst.msk [vmem:[#allocation2 + $0x71] sm:$0x1] %vm270, 0.0
        %296 = vst.msk [vmem:[#allocation2 + $0x89] sm:$0x1] %vm270, 0.0
        %297 = vst.msk [vmem:[#allocation2 + $0xa1] sm:$0x1] %vm270, 0.0
        %298 = vst.msk [vmem:[#allocation2 + $0xb9] sm:$0x1] %vm270, 0.0
        %299 = vst.msk [vmem:[#allocation2 + $0xd1] sm:$0x1] %vm270, 0.0
        %300 = vst.msk [vmem:[#allocation2 + $0xe9] sm:$0x1] %vm270, 0.0
        %301 = vst.msk [vmem:[#allocation2 + $0x101] sm:$0x1] %vm270, 0.0
        %302 = vst.msk [vmem:[#allocation2 + $0x119] sm:$0x1] %vm270, 0.0
        %303 = vst.msk [vmem:[#allocation2 + $0x131] sm:$0x1] %vm270, 0.0
        %304 = vst.msk [vmem:[#allocation2 + $0x149] sm:$0x1] %vm270, 0.0
        %305 = vst.msk [vmem:[#allocation2 + $0x161] sm:$0x1] %vm270, 0.0
        %306 = vst.msk [vmem:[#allocation2 + $0x179] sm:$0x1] %vm270, 0.0
        %307 = vst.msk [vmem:[#allocation2 + $0x191] sm:$0x1] %vm270, 0.0
        %308 = vst.msk [vmem:[#allocation2 + $0x1a9] sm:$0x1] %vm270, 0.0
        %309 = vst.msk [vmem:[#allocation2 + $0x1c1] sm:$0x1] %vm270, 0.0
        %310 = vst.msk [vmem:[#allocation2 + $0x1d9] sm:$0x1] %vm270, 0.0
        %v311 = vld [vmem:[%s238] sm:$0xff]
        %v312 = vld [vmem:[%s238 + $0x8] sm:$0xff]
        %v313 = vld [vmem:[%s238 + $0x10] sm:$0xff]
        %v314 = vld [vmem:[%s238 + $0x18] sm:$0xff]
        %v315 = vld [vmem:[%s238 + $0x20] sm:$0xff]
        %v316 = vld [vmem:[%s238 + $0x28] sm:$0xff]
        %v317 = vld [vmem:[%s238 + $0x30] sm:$0xff]
        %v318 = vld [vmem:[%s238 + $0x38] sm:$0xff]
        %v319 = vld [vmem:[%s238 + $0x40] sm:$0xff]
        %v320 = vld [vmem:[%s238 + $0x48] sm:$0xff]
        %v321 = vld [vmem:[%s238 + $0x50] sm:$0xff]
        %v322 = vld [vmem:[%s238 + $0x58] sm:$0xff]
        %v323 = vld [vmem:[%s238 + $0x60] sm:$0xff]
        %v324 = vld [vmem:[%s238 + $0x68] sm:$0xff]
        %v325 = vld [vmem:[%s238 + $0x70] sm:$0xff]
        %v326 = vld [vmem:[%s238 + $0x78] sm:$0xff]
        %v327 = vld [vmem:[%s238 + $0x80] sm:$0xff]
        %v328 = vld [vmem:[%s238 + $0x88] sm:$0xff]
        %v329 = vld [vmem:[%s238 + $0x90] sm:$0xff]
        %v330 = vld [vmem:[%s238 + $0x98] sm:$0xff]
        %v331 = vld [vmem:[%s238 + $0xa0] sm:$0xff]
        %v332 = vld [vmem:[%s238 + $0xa8] sm:$0xff]
        %v333 = vld [vmem:[%s238 + $0xb0] sm:$0xff]
        %v334 = vld [vmem:[%s238 + $0xb8] sm:$0xff]
        %v335 = vld [vmem:[%s238 + $0xc0] sm:$0xff]
        %v336 = vld [vmem:[%s238 + $0xc8] sm:$0xff]
        %v337 = vld [vmem:[%s238 + $0xd0] sm:$0xff]
        %v338 = vld [vmem:[%s238 + $0xd8] sm:$0xff]
        %v339 = vld [vmem:[%s238 + $0xe0] sm:$0xff]
        %v340 = vld [vmem:[%s238 + $0xe8] sm:$0xff]
        %v341 = vld [vmem:[%s238 + $0xf0] sm:$0xff]
        %v342 = vld [vmem:[%s238 + $0xf8] sm:$0xff]
        %s343 = scalar_lea.vmem [#allocation2], 48
        %344 = vst.msk [vmem:[%s343 + $0x1] sm:$0xff] %vm255, %v311
        %345 = vst.msk [vmem:[%s343 + $0x9] sm:$0xff] %vm255, %v312
        %346 = vst.msk [vmem:[%s343 + $0x19] sm:$0xff] %vm255, %v313
        %347 = vst.msk [vmem:[%s343 + $0x21] sm:$0xff] %vm255, %v314
        %348 = vst.msk [vmem:[%s343 + $0x31] sm:$0xff] %vm255, %v315
        %349 = vst.msk [vmem:[%s343 + $0x39] sm:$0xff] %vm255, %v316
        %350 = vst.msk [vmem:[%s343 + $0x49] sm:$0xff] %vm255, %v317
        %351 = vst.msk [vmem:[%s343 + $0x51] sm:$0xff] %vm255, %v318
        %352 = vst.msk [vmem:[%s343 + $0x61] sm:$0xff] %vm255, %v319
        %353 = vst.msk [vmem:[%s343 + $0x69] sm:$0xff] %vm255, %v320
        %354 = vst.msk [vmem:[%s343 + $0x79] sm:$0xff] %vm255, %v321
        %355 = vst.msk [vmem:[%s343 + $0x81] sm:$0xff] %vm255, %v322
        %356 = vst.msk [vmem:[%s343 + $0x91] sm:$0xff] %vm255, %v323
        %357 = vst.msk [vmem:[%s343 + $0x99] sm:$0xff] %vm255, %v324
        %358 = vst.msk [vmem:[%s343 + $0xa9] sm:$0xff] %vm255, %v325
        %359 = vst.msk [vmem:[%s343 + $0xb1] sm:$0xff] %vm255, %v326
        %360 = vst.msk [vmem:[%s343 + $0xc1] sm:$0xff] %vm255, %v327
        %361 = vst.msk [vmem:[%s343 + $0xc9] sm:$0xff] %vm255, %v328
        %362 = vst.msk [vmem:[%s343 + $0xd9] sm:$0xff] %vm255, %v329
        %363 = vst.msk [vmem:[%s343 + $0xe1] sm:$0xff] %vm255, %v330
        %364 = vst.msk [vmem:[%s343 + $0xf1] sm:$0xff] %vm255, %v331
        %365 = vst.msk [vmem:[%s343 + $0xf9] sm:$0xff] %vm255, %v332
        %366 = vst.msk [vmem:[%s343 + $0x109] sm:$0xff] %vm255, %v333
        %367 = vst.msk [vmem:[%s343 + $0x111] sm:$0xff] %vm255, %v334
        %368 = vst.msk [vmem:[%s343 + $0x121] sm:$0xff] %vm255, %v335
        %369 = vst.msk [vmem:[%s343 + $0x129] sm:$0xff] %vm255, %v336
        %370 = vst.msk [vmem:[%s343 + $0x139] sm:$0xff] %vm255, %v337
        %371 = vst.msk [vmem:[%s343 + $0x141] sm:$0xff] %vm255, %v338
        %372 = vst.msk [vmem:[%s343 + $0x151] sm:$0xff] %vm255, %v339
        %373 = vst.msk [vmem:[%s343 + $0x159] sm:$0xff] %vm255, %v340
        %374 = vst.msk [vmem:[%s343 + $0x169] sm:$0xff] %vm255, %v341
        %375 = vst.msk [vmem:[%s343 + $0x171] sm:$0xff] %vm255, %v342
        %vm376 = vcmask 57344
        %377 = vst.msk [vmem:[#allocation3] sm:$0x1] %vm376, 0.0
        %378 = vst.msk [vmem:[#allocation3 + $0x18] sm:$0x1] %vm376, 0.0
        %379 = vst.msk [vmem:[#allocation3 + $0x30] sm:$0x1] %vm376, 0.0
        %380 = vst.msk [vmem:[#allocation3 + $0x48] sm:$0x1] %vm376, 0.0
        %381 = vst.msk [vmem:[#allocation3 + $0x60] sm:$0x1] %vm376, 0.0
        %382 = vst.msk [vmem:[#allocation3 + $0x78] sm:$0x1] %vm376, 0.0
        %383 = vst.msk [vmem:[#allocation3 + $0x90] sm:$0x1] %vm376, 0.0
        %384 = vst.msk [vmem:[#allocation3 + $0xa8] sm:$0x1] %vm376, 0.0
        %385 = vst.msk [vmem:[#allocation3 + $0xc0] sm:$0x1] %vm376, 0.0
        %386 = vst.msk [vmem:[#allocation3 + $0xd8] sm:$0x1] %vm376, 0.0
        %387 = vst.msk [vmem:[#allocation3 + $0x11] sm:$0x1] %vm376, 0.0
        %388 = vst.msk [vmem:[#allocation3 + $0x29] sm:$0x1] %vm376, 0.0
        %389 = vst.msk [vmem:[#allocation3 + $0x41] sm:$0x1] %vm376, 0.0
        %390 = vst.msk [vmem:[#allocation3 + $0x59] sm:$0x1] %vm376, 0.0
        %391 = vst.msk [vmem:[#allocation3 + $0x71] sm:$0x1] %vm376, 0.0
        %392 = vst.msk [vmem:[#allocation3 + $0x89] sm:$0x1] %vm376, 0.0
        %393 = vst.msk [vmem:[#allocation3 + $0xa1] sm:$0x1] %vm376, 0.0
        %394 = vst.msk [vmem:[#allocation3 + $0xb9] sm:$0x1] %vm376, 0.0
        %395 = vst.msk [vmem:[#allocation3 + $0xd1] sm:$0x1] %vm376, 0.0
        %396 = vst.msk [vmem:[#allocation3 + $0xe9] sm:$0x1] %vm376, 0.0
      $region44: #{tpu_custom_call.1} parent=39 // pred_fallthru
        _
      %s397 = smul.u32 %s250, 24
      %s398 = scalar_lea.vmem [#allocation2], %s397
      %v399 = vld [vmem:[%s398] sm:$0xff]
      %v400 = vld [vmem:[%s398 + $0x8] sm:$0xff]
      %v401 = vld [vmem:[%s398 + $0x18] sm:$0xff]
      %v402 = vld [vmem:[%s398 + $0x20] sm:$0xff]
      %v403 = vld [vmem:[%s398 + $0x30] sm:$0xff]
      %v404 = vld [vmem:[%s398 + $0x38] sm:$0xff]
      %v405 = vld [vmem:[%s398 + $0x48] sm:$0xff]
      %v406 = vld [vmem:[%s398 + $0x50] sm:$0xff]
      %v407 = vld [vmem:[%s398 + $0x60] sm:$0xff]
      %v408 = vld [vmem:[%s398 + $0x68] sm:$0xff]
      %v409 = vld [vmem:[%s398 + $0x78] sm:$0xff]
      %v410 = vld [vmem:[%s398 + $0x80] sm:$0xff]
      %v411 = vld [vmem:[%s398 + $0x90] sm:$0xff]
      %v412 = vld [vmem:[%s398 + $0x98] sm:$0xff]
      %v413 = vld [vmem:[%s398 + $0xa8] sm:$0xff]
      %v414 = vld [vmem:[%s398 + $0xb0] sm:$0xff]
      %v415 = vld [vmem:[%s398 + $0xc0] sm:$0xff]
      %v416 = vld [vmem:[%s398 + $0xc8] sm:$0xff]
      %v417 = vld [vmem:[%s398 + $0xd8] sm:$0xff]
      %v418 = vld [vmem:[%s398 + $0xe0] sm:$0xff]
      %v419 = vld [vmem:[%s1] sm:$0xf]
      %v420 = vld [vmem:[%s398 + $0x1] sm:$0xff]
      %v421 = vld [vmem:[%s398 + $0x9] sm:$0xff]
      %v422 = vld [vmem:[%s398 + $0x19] sm:$0xff]
      %v423 = vld [vmem:[%s398 + $0x21] sm:$0xff]
      %v424 = vld [vmem:[%s398 + $0x31] sm:$0xff]
      %v425 = vld [vmem:[%s398 + $0x39] sm:$0xff]
      %v426 = vld [vmem:[%s398 + $0x49] sm:$0xff]
      %v427 = vld [vmem:[%s398 + $0x51] sm:$0xff]
      %v428 = vld [vmem:[%s398 + $0x61] sm:$0xff]
      %v429 = vld [vmem:[%s398 + $0x69] sm:$0xff]
      %v430 = vld [vmem:[%s398 + $0x79] sm:$0xff]
      %v431 = vld [vmem:[%s398 + $0x81] sm:$0xff]
      %v432 = vld [vmem:[%s398 + $0x91] sm:$0xff]
      %v433 = vld [vmem:[%s398 + $0x99] sm:$0xff]
      %v434 = vld [vmem:[%s398 + $0xa9] sm:$0xff]
      %v435 = vld [vmem:[%s398 + $0xb1] sm:$0xff]
      %v436 = vld [vmem:[%s398 + $0xc1] sm:$0xff]
      %v437 = vld [vmem:[%s398 + $0xc9] sm:$0xff]
      %v438 = vld [vmem:[%s398 + $0xd9] sm:$0xff]
      %v439 = vld [vmem:[%s398 + $0xe1] sm:$0xff]
      %s440 = scalar_lea.vmem %s1, 4
      %v441 = vld [vmem:[%s440] sm:$0xf]
      %vm442 = vcmask 31744
      %v444 = vsel %vm442, %v420, 0
      %v447 = vsel %vm442, %v421, 0
      %v450 = vsel %vm442, %v422, 0
      %v453 = vsel %vm442, %v423, 0
      %v456 = vsel %vm442, %v424, 0
      %v459 = vsel %vm442, %v425, 0
      %v462 = vsel %vm442, %v426, 0
      %v465 = vsel %vm442, %v427, 0
      %v468 = vsel %vm442, %v428, 0
      %v471 = vsel %vm442, %v429, 0
      %v474 = vsel %vm442, %v430, 0
      %v477 = vsel %vm442, %v431, 0
      %v480 = vsel %vm442, %v432, 0
      %v483 = vsel %vm442, %v433, 0
      %v486 = vsel %vm442, %v434, 0
      %v489 = vsel %vm442, %v435, 0
      %v492 = vsel %vm442, %v436, 0
      %v495 = vsel %vm442, %v437, 0
      %v498 = vsel %vm442, %v438, 0
      %v501 = vsel %vm442, %v439, 0
      %vm503 = vcmask 1043456
      %v505 = vsel %vm503, %v441, 0
      %507 = vmatpush.msra.mxu0 0.0
      %508 = vmatpush.msra.mxu0 0.0
      %509 = vmatpush.msra.mxu0 0.0
      %510 = vmatpush.msra.mxu0 0.0
      %511 = vmatpush.msra.mxu0 0.0
      %512 = vmatpush.msra.mxu0 0.0
      %513 = vmatpush.msra.mxu0 0.0
      %514 = vmatpush.msra.mxu0 0.0
      %515 = vmatpush.msra.mxu0 0.0
      %516 = vmatpush.msra.mxu0 0.0
      %517 = vmatpush.msra.mxu0 0.0
      %518 = vmatpush.msra.mxu0 0.0
      %519 = vmatpush.msra.mxu0 0.0
      %520 = vmatpush.msra.mxu0 0.0
      %521 = vmatpush.msra.mxu0 0.0
      %522 = vmatpush.msra.mxu0 %v505
      %523 = vmatmul.f32.gmra.mxu0 %v444
      %v524 = vpop.f32.mrf.mxu0
      %v525 = vadd.f32 0.0, %v524
      %526 = vmatmul.f32.gmra.mxu0 %v447
      %v527 = vpop.f32.mrf.mxu0
      %v528 = vadd.f32 0.0, %v527
      %529 = vmatmul.f32.gmra.mxu0 %v450
      %v530 = vpop.f32.mrf.mxu0
      %v531 = vadd.f32 0.0, %v530
      %532 = vmatmul.f32.gmra.mxu0 %v453
      %v533 = vpop.f32.mrf.mxu0
      %v534 = vadd.f32 0.0, %v533
      %535 = vmatmul.f32.gmra.mxu0 %v456
      %v536 = vpop.f32.mrf.mxu0
      %v537 = vadd.f32 0.0, %v536
      %538 = vmatmul.f32.gmra.mxu0 %v459
      %v539 = vpop.f32.mrf.mxu0
      %v540 = vadd.f32 0.0, %v539
      %541 = vmatmul.f32.gmra.mxu0 %v462
      %v542 = vpop.f32.mrf.mxu0
      %v543 = vadd.f32 0.0, %v542
      %544 = vmatmul.f32.gmra.mxu0 %v465
      %v545 = vpop.f32.mrf.mxu0
      %v546 = vadd.f32 0.0, %v545
      %547 = vmatmul.f32.gmra.mxu0 %v468
      %v548 = vpop.f32.mrf.mxu0
      %v549 = vadd.f32 0.0, %v548
      %550 = vmatmul.f32.gmra.mxu0 %v471
      %v551 = vpop.f32.mrf.mxu0
      %v552 = vadd.f32 0.0, %v551
      %553 = vmatmul.f32.gmra.mxu0 %v474
      %v554 = vpop.f32.mrf.mxu0
      %v555 = vadd.f32 0.0, %v554
      %556 = vmatmul.f32.gmra.mxu0 %v477
      %v557 = vpop.f32.mrf.mxu0
      %v558 = vadd.f32 0.0, %v557
      %559 = vmatmul.f32.gmra.mxu0 %v480
      %v560 = vpop.f32.mrf.mxu0
      %v561 = vadd.f32 0.0, %v560
      %562 = vmatmul.f32.gmra.mxu0 %v483
      %v563 = vpop.f32.mrf.mxu0
      %v564 = vadd.f32 0.0, %v563
      %565 = vmatmul.f32.gmra.mxu0 %v486
      %v566 = vpop.f32.mrf.mxu0
      %v567 = vadd.f32 0.0, %v566
      %568 = vmatmul.f32.gmra.mxu0 %v489
      %v569 = vpop.f32.mrf.mxu0
      %v570 = vadd.f32 0.0, %v569
      %571 = vmatmul.f32.gmra.mxu0 %v492
      %v572 = vpop.f32.mrf.mxu0
      %v573 = vadd.f32 0.0, %v572
      %574 = vmatmul.f32.gmra.mxu0 %v495
      %v575 = vpop.f32.mrf.mxu0
      %v576 = vadd.f32 0.0, %v575
      %577 = vmatmul.f32.gmra.mxu0 %v498
      %v578 = vpop.f32.mrf.mxu0
      %v579 = vadd.f32 0.0, %v578
      %580 = vmatmul.f32.gmra.mxu0 %v501
      %v581 = vpop.f32.mrf.mxu0
      %v582 = vadd.f32 0.0, %v581
      %583 = vdwg.mxu0
      %v585 = vsel %vm442, %v399, 0
      %v588 = vsel %vm442, %v400, 0
      %v591 = vsel %vm442, %v401, 0
      %v594 = vsel %vm442, %v402, 0
      %v597 = vsel %vm442, %v403, 0
      %v600 = vsel %vm442, %v404, 0
      %v603 = vsel %vm442, %v405, 0
      %v606 = vsel %vm442, %v406, 0
      %v609 = vsel %vm442, %v407, 0
      %v612 = vsel %vm442, %v408, 0
      %v615 = vsel %vm442, %v409, 0
      %v618 = vsel %vm442, %v410, 0
      %v621 = vsel %vm442, %v411, 0
      %v624 = vsel %vm442, %v412, 0
      %v627 = vsel %vm442, %v413, 0
      %v630 = vsel %vm442, %v414, 0
      %v633 = vsel %vm442, %v415, 0
      %v636 = vsel %vm442, %v416, 0
      %v639 = vsel %vm442, %v417, 0
      %v642 = vsel %vm442, %v418, 0
      %v645 = vsel %vm503, %v419, 0
      %647 = vmatpush.msra.mxu0 0.0
      %648 = vmatpush.msra.mxu0 0.0
      %649 = vmatpush.msra.mxu0 0.0
      %650 = vmatpush.msra.mxu0 0.0
      %651 = vmatpush.msra.mxu0 0.0
      %652 = vmatpush.msra.mxu0 0.0
      %653 = vmatpush.msra.mxu0 0.0
      %654 = vmatpush.msra.mxu0 0.0
      %655 = vmatpush.msra.mxu0 0.0
      %656 = vmatpush.msra.mxu0 0.0
      %657 = vmatpush.msra.mxu0 0.0
      %658 = vmatpush.msra.mxu0 0.0
      %659 = vmatpush.msra.mxu0 0.0
      %660 = vmatpush.msra.mxu0 0.0
      %661 = vmatpush.msra.mxu0 0.0
      %662 = vmatpush.msra.mxu0 %v645
      %663 = vmatmul.f32.gmra.mxu0 %v585
      %v664 = vpop.f32.mrf.mxu0
      %v665 = vadd.f32 %v525, %v664
      %666 = vmatmul.f32.gmra.mxu0 %v588
      %v667 = vpop.f32.mrf.mxu0
      %v668 = vadd.f32 %v528, %v667
      %669 = vmatmul.f32.gmra.mxu0 %v591
      %v670 = vpop.f32.mrf.mxu0
      %v671 = vadd.f32 %v531, %v670
      %672 = vmatmul.f32.gmra.mxu0 %v594
      %v673 = vpop.f32.mrf.mxu0
      %v674 = vadd.f32 %v534, %v673
      %675 = vmatmul.f32.gmra.mxu0 %v597
      %v676 = vpop.f32.mrf.mxu0
      %v677 = vadd.f32 %v537, %v676
      %678 = vmatmul.f32.gmra.mxu0 %v600
      %v679 = vpop.f32.mrf.mxu0
      %v680 = vadd.f32 %v540, %v679
      %681 = vmatmul.f32.gmra.mxu0 %v603
      %v682 = vpop.f32.mrf.mxu0
      %v683 = vadd.f32 %v543, %v682
      %684 = vmatmul.f32.gmra.mxu0 %v606
      %v685 = vpop.f32.mrf.mxu0
      %v686 = vadd.f32 %v546, %v685
      %687 = vmatmul.f32.gmra.mxu0 %v609
      %v688 = vpop.f32.mrf.mxu0
      %v689 = vadd.f32 %v549, %v688
      %690 = vmatmul.f32.gmra.mxu0 %v612
      %v691 = vpop.f32.mrf.mxu0
      %v692 = vadd.f32 %v552, %v691
      %693 = vmatmul.f32.gmra.mxu0 %v615
      %v694 = vpop.f32.mrf.mxu0
      %v695 = vadd.f32 %v555, %v694
      %696 = vmatmul.f32.gmra.mxu0 %v618
      %v697 = vpop.f32.mrf.mxu0
      %v698 = vadd.f32 %v558, %v697
      %699 = vmatmul.f32.gmra.mxu0 %v621
      %v700 = vpop.f32.mrf.mxu0
      %v701 = vadd.f32 %v561, %v700
      %702 = vmatmul.f32.gmra.mxu0 %v624
      %v703 = vpop.f32.mrf.mxu0
      %v704 = vadd.f32 %v564, %v703
      %705 = vmatmul.f32.gmra.mxu0 %v627
      %v706 = vpop.f32.mrf.mxu0
      %v707 = vadd.f32 %v567, %v706
      %708 = vmatmul.f32.gmra.mxu0 %v630
      %v709 = vpop.f32.mrf.mxu0
      %v710 = vadd.f32 %v570, %v709
      %711 = vmatmul.f32.gmra.mxu0 %v633
      %v712 = vpop.f32.mrf.mxu0
      %v713 = vadd.f32 %v573, %v712
      %714 = vmatmul.f32.gmra.mxu0 %v636
      %v715 = vpop.f32.mrf.mxu0
      %v716 = vadd.f32 %v576, %v715
      %717 = vmatmul.f32.gmra.mxu0 %v639
      %v718 = vpop.f32.mrf.mxu0
      %v719 = vadd.f32 %v579, %v718
      %720 = vmatmul.f32.gmra.mxu0 %v642
      %v721 = vpop.f32.mrf.mxu0
      %v722 = vadd.f32 %v582, %v721
      %723 = vdwg.mxu0
      %v724 = vld [vmem:[%s398 + $0x2] sm:$0xff]
      %v725 = vld [vmem:[%s398 + $0xa] sm:$0xff]
      %v726 = vld [vmem:[%s398 + $0x1a] sm:$0xff]
      %v727 = vld [vmem:[%s398 + $0x22] sm:$0xff]
      %v728 = vld [vmem:[%s398 + $0x32] sm:$0xff]
      %v729 = vld [vmem:[%s398 + $0x3a] sm:$0xff]
      %v730 = vld [vmem:[%s398 + $0x4a] sm:$0xff]
      %v731 = vld [vmem:[%s398 + $0x52] sm:$0xff]
      %v732 = vld [vmem:[%s398 + $0x62] sm:$0xff]
      %v733 = vld [vmem:[%s398 + $0x6a] sm:$0xff]
      %v734 = vld [vmem:[%s398 + $0x7a] sm:$0xff]
      %v735 = vld [vmem:[%s398 + $0x82] sm:$0xff]
      %v736 = vld [vmem:[%s398 + $0x92] sm:$0xff]
      %v737 = vld [vmem:[%s398 + $0x9a] sm:$0xff]
      %v738 = vld [vmem:[%s398 + $0xaa] sm:$0xff]
      %v739 = vld [vmem:[%s398 + $0xb2] sm:$0xff]
      %v740 = vld [vmem:[%s398 + $0xc2] sm:$0xff]
      %v741 = vld [vmem:[%s398 + $0xca] sm:$0xff]
      %v742 = vld [vmem:[%s398 + $0xda] sm:$0xff]
      %v743 = vld [vmem:[%s398 + $0xe2] sm:$0xff]
      %s744 = scalar_lea.vmem %s1, 8
      %v745 = vld [vmem:[%s744] sm:$0xf]
      %v747 = vsel %vm442, %v724, 0
      %v750 = vsel %vm442, %v725, 0
      %v753 = vsel %vm442, %v726, 0
      %v756 = vsel %vm442, %v727, 0
      %v759 = vsel %vm442, %v728, 0
      %v762 = vsel %vm442, %v729, 0
      %v765 = vsel %vm442, %v730, 0
      %v768 = vsel %vm442, %v731, 0
      %v771 = vsel %vm442, %v732, 0
      %v774 = vsel %vm442, %v733, 0
      %v777 = vsel %vm442, %v734, 0
      %v780 = vsel %vm442, %v735, 0
      %v783 = vsel %vm442, %v736, 0
      %v786 = vsel %vm442, %v737, 0
      %v789 = vsel %vm442, %v738, 0
      %v792 = vsel %vm442, %v739, 0
      %v795 = vsel %vm442, %v740, 0
      %v798 = vsel %vm442, %v741, 0
      %v801 = vsel %vm442, %v742, 0
      %v804 = vsel %vm442, %v743, 0
      %v807 = vsel %vm503, %v745, 0
      %809 = vmatpush.msra.mxu0 0.0
      %810 = vmatpush.msra.mxu0 0.0
      %811 = vmatpush.msra.mxu0 0.0
      %812 = vmatpush.msra.mxu0 0.0
      %813 = vmatpush.msra.mxu0 0.0
      %814 = vmatpush.msra.mxu0 0.0
      %815 = vmatpush.msra.mxu0 0.0
      %816 = vmatpush.msra.mxu0 0.0
      %817 = vmatpush.msra.mxu0 0.0
      %818 = vmatpush.msra.mxu0 0.0
      %819 = vmatpush.msra.mxu0 0.0
      %820 = vmatpush.msra.mxu0 0.0
      %821 = vmatpush.msra.mxu0 0.0
      %822 = vmatpush.msra.mxu0 0.0
      %823 = vmatpush.msra.mxu0 0.0
      %824 = vmatpush.msra.mxu0 %v807
      %825 = vmatmul.f32.gmra.mxu0 %v747
      %v826 = vpop.f32.mrf.mxu0
      %v827 = vadd.f32 0.0, %v826
      %828 = vmatmul.f32.gmra.mxu0 %v750
      %v829 = vpop.f32.mrf.mxu0
      %v830 = vadd.f32 0.0, %v829
      %831 = vmatmul.f32.gmra.mxu0 %v753
      %v832 = vpop.f32.mrf.mxu0
      %v833 = vadd.f32 0.0, %v832
      %834 = vmatmul.f32.gmra.mxu0 %v756
      %v835 = vpop.f32.mrf.mxu0
      %v836 = vadd.f32 0.0, %v835
      %837 = vmatmul.f32.gmra.mxu0 %v759
      %v838 = vpop.f32.mrf.mxu0
      %v839 = vadd.f32 0.0, %v838
      %840 = vmatmul.f32.gmra.mxu0 %v762
      %v841 = vpop.f32.mrf.mxu0
      %v842 = vadd.f32 0.0, %v841
      %843 = vmatmul.f32.gmra.mxu0 %v765
      %v844 = vpop.f32.mrf.mxu0
      %v845 = vadd.f32 0.0, %v844
      %846 = vmatmul.f32.gmra.mxu0 %v768
      %v847 = vpop.f32.mrf.mxu0
      %v848 = vadd.f32 0.0, %v847
      %849 = vmatmul.f32.gmra.mxu0 %v771
      %v850 = vpop.f32.mrf.mxu0
      %v851 = vadd.f32 0.0, %v850
      %852 = vmatmul.f32.gmra.mxu0 %v774
      %v853 = vpop.f32.mrf.mxu0
      %v854 = vadd.f32 0.0, %v853
      %855 = vmatmul.f32.gmra.mxu0 %v777
      %v856 = vpop.f32.mrf.mxu0
      %v857 = vadd.f32 0.0, %v856
      %858 = vmatmul.f32.gmra.mxu0 %v780
      %v859 = vpop.f32.mrf.mxu0
      %v860 = vadd.f32 0.0, %v859
      %861 = vmatmul.f32.gmra.mxu0 %v783
      %v862 = vpop.f32.mrf.mxu0
      %v863 = vadd.f32 0.0, %v862
      %864 = vmatmul.f32.gmra.mxu0 %v786
      %v865 = vpop.f32.mrf.mxu0
      %v866 = vadd.f32 0.0, %v865
      %867 = vmatmul.f32.gmra.mxu0 %v789
      %v868 = vpop.f32.mrf.mxu0
      %v869 = vadd.f32 0.0, %v868
      %870 = vmatmul.f32.gmra.mxu0 %v792
      %v871 = vpop.f32.mrf.mxu0
      %v872 = vadd.f32 0.0, %v871
      %873 = vmatmul.f32.gmra.mxu0 %v795
      %v874 = vpop.f32.mrf.mxu0
      %v875 = vadd.f32 0.0, %v874
      %876 = vmatmul.f32.gmra.mxu0 %v798
      %v877 = vpop.f32.mrf.mxu0
      %v878 = vadd.f32 0.0, %v877
      %879 = vmatmul.f32.gmra.mxu0 %v801
      %v880 = vpop.f32.mrf.mxu0
      %v881 = vadd.f32 0.0, %v880
      %882 = vmatmul.f32.gmra.mxu0 %v804
      %v883 = vpop.f32.mrf.mxu0
      %v884 = vadd.f32 0.0, %v883
      %885 = vdwg.mxu0
      %v886 = vadd.f32 %v665, %v827
      %v887 = vadd.f32 %v668, %v830
      %v888 = vadd.f32 %v671, %v833
      %v889 = vadd.f32 %v674, %v836
      %v890 = vadd.f32 %v677, %v839
      %v891 = vadd.f32 %v680, %v842
      %v892 = vadd.f32 %v683, %v845
      %v893 = vadd.f32 %v686, %v848
      %v894 = vadd.f32 %v689, %v851
      %v895 = vadd.f32 %v692, %v854
      %v896 = vadd.f32 %v695, %v857
      %v897 = vadd.f32 %v698, %v860
      %v898 = vadd.f32 %v701, %v863
      %v899 = vadd.f32 %v704, %v866
      %v900 = vadd.f32 %v707, %v869
      %v901 = vadd.f32 %v710, %v872
      %v902 = vadd.f32 %v713, %v875
      %v903 = vadd.f32 %v716, %v878
      %v904 = vadd.f32 %v719, %v881
      %v905 = vadd.f32 %v722, %v884
      %s906 = sadd.s32 %s250, 1
      %s907 = smul.u32 %s906, 24
      %s908 = scalar_lea.vmem [#allocation2], %s907
      %v909 = vld [vmem:[%s908] sm:$0xff]
      %v910 = vld [vmem:[%s908 + $0x8] sm:$0xff]
      %v911 = vld [vmem:[%s908 + $0x18] sm:$0xff]
      %v912 = vld [vmem:[%s908 + $0x20] sm:$0xff]
      %v913 = vld [vmem:[%s908 + $0x30] sm:$0xff]
      %v914 = vld [vmem:[%s908 + $0x38] sm:$0xff]
      %v915 = vld [vmem:[%s908 + $0x48] sm:$0xff]
      %v916 = vld [vmem:[%s908 + $0x50] sm:$0xff]
      %v917 = vld [vmem:[%s908 + $0x60] sm:$0xff]
      %v918 = vld [vmem:[%s908 + $0x68] sm:$0xff]
      %v919 = vld [vmem:[%s908 + $0x78] sm:$0xff]
      %v920 = vld [vmem:[%s908 + $0x80] sm:$0xff]
      %v921 = vld [vmem:[%s908 + $0x90] sm:$0xff]
      %v922 = vld [vmem:[%s908 + $0x98] sm:$0xff]
      %v923 = vld [vmem:[%s908 + $0xa8] sm:$0xff]
      %v924 = vld [vmem:[%s908 + $0xb0] sm:$0xff]
      %v925 = vld [vmem:[%s908 + $0xc0] sm:$0xff]
      %v926 = vld [vmem:[%s908 + $0xc8] sm:$0xff]
      %v927 = vld [vmem:[%s908 + $0xd8] sm:$0xff]
      %v928 = vld [vmem:[%s908 + $0xe0] sm:$0xff]
      %s929 = scalar_lea.vmem %s1, 12
      %v930 = vld [vmem:[%s929] sm:$0xf]
      %v932 = vsel %vm442, %v909, 0
      %v935 = vsel %vm442, %v910, 0
      %v938 = vsel %vm442, %v911, 0
      %v941 = vsel %vm442, %v912, 0
      %v944 = vsel %vm442, %v913, 0
      %v947 = vsel %vm442, %v914, 0
      %v950 = vsel %vm442, %v915, 0
      %v953 = vsel %vm442, %v916, 0
      %v956 = vsel %vm442, %v917, 0
      %v959 = vsel %vm442, %v918, 0
      %v962 = vsel %vm442, %v919, 0
      %v965 = vsel %vm442, %v920, 0
      %v968 = vsel %vm442, %v921, 0
      %v971 = vsel %vm442, %v922, 0
      %v974 = vsel %vm442, %v923, 0
      %v977 = vsel %vm442, %v924, 0
      %v980 = vsel %vm442, %v925, 0
      %v983 = vsel %vm442, %v926, 0
      %v986 = vsel %vm442, %v927, 0
      %v989 = vsel %vm442, %v928, 0
      %v992 = vsel %vm503, %v930, 0
      %994 = vmatpush.msra.mxu0 0.0
      %995 = vmatpush.msra.mxu0 0.0
      %996 = vmatpush.msra.mxu0 0.0
      %997 = vmatpush.msra.mxu0 0.0
      %998 = vmatpush.msra.mxu0 0.0
      %999 = vmatpush.msra.mxu0 0.0
      %1000 = vmatpush.msra.mxu0 0.0
      %1001 = vmatpush.msra.mxu0 0.0
      %1002 = vmatpush.msra.mxu0 0.0
      %1003 = vmatpush.msra.mxu0 0.0
      %1004 = vmatpush.msra.mxu0 0.0
      %1005 = vmatpush.msra.mxu0 0.0
      %1006 = vmatpush.msra.mxu0 0.0
      %1007 = vmatpush.msra.mxu0 0.0
      %1008 = vmatpush.msra.mxu0 0.0
      %1009 = vmatpush.msra.mxu0 %v992
      %1010 = vmatmul.f32.gmra.mxu0 %v932
      %v1011 = vpop.f32.mrf.mxu0
      %v1012 = vadd.f32 0.0, %v1011
      %1013 = vmatmul.f32.gmra.mxu0 %v935
      %v1014 = vpop.f32.mrf.mxu0
      %v1015 = vadd.f32 0.0, %v1014
      %1016 = vmatmul.f32.gmra.mxu0 %v938
      %v1017 = vpop.f32.mrf.mxu0
      %v1018 = vadd.f32 0.0, %v1017
      %1019 = vmatmul.f32.gmra.mxu0 %v941
      %v1020 = vpop.f32.mrf.mxu0
      %v1021 = vadd.f32 0.0, %v1020
      %1022 = vmatmul.f32.gmra.mxu0 %v944
      %v1023 = vpop.f32.mrf.mxu0
      %v1024 = vadd.f32 0.0, %v1023
      %1025 = vmatmul.f32.gmra.mxu0 %v947
      %v1026 = vpop.f32.mrf.mxu0
      %v1027 = vadd.f32 0.0, %v1026
      %1028 = vmatmul.f32.gmra.mxu0 %v950
      %v1029 = vpop.f32.mrf.mxu0
      %v1030 = vadd.f32 0.0, %v1029
      %1031 = vmatmul.f32.gmra.mxu0 %v953
      %v1032 = vpop.f32.mrf.mxu0
      %v1033 = vadd.f32 0.0, %v1032
      %1034 = vmatmul.f32.gmra.mxu0 %v956
      %v1035 = vpop.f32.mrf.mxu0
      %v1036 = vadd.f32 0.0, %v1035
      %1037 = vmatmul.f32.gmra.mxu0 %v959
      %v1038 = vpop.f32.mrf.mxu0
      %v1039 = vadd.f32 0.0, %v1038
      %1040 = vmatmul.f32.gmra.mxu0 %v962
      %v1041 = vpop.f32.mrf.mxu0
      %v1042 = vadd.f32 0.0, %v1041
      %1043 = vmatmul.f32.gmra.mxu0 %v965
      %v1044 = vpop.f32.mrf.mxu0
      %v1045 = vadd.f32 0.0, %v1044
      %1046 = vmatmul.f32.gmra.mxu0 %v968
      %v1047 = vpop.f32.mrf.mxu0
      %v1048 = vadd.f32 0.0, %v1047
      %1049 = vmatmul.f32.gmra.mxu0 %v971
      %v1050 = vpop.f32.mrf.mxu0
      %v1051 = vadd.f32 0.0, %v1050
      %1052 = vmatmul.f32.gmra.mxu0 %v974
      %v1053 = vpop.f32.mrf.mxu0
      %v1054 = vadd.f32 0.0, %v1053
      %1055 = vmatmul.f32.gmra.mxu0 %v977
      %v1056 = vpop.f32.mrf.mxu0
      %v1057 = vadd.f32 0.0, %v1056
      %1058 = vmatmul.f32.gmra.mxu0 %v980
      %v1059 = vpop.f32.mrf.mxu0
      %v1060 = vadd.f32 0.0, %v1059
      %1061 = vmatmul.f32.gmra.mxu0 %v983
      %v1062 = vpop.f32.mrf.mxu0
      %v1063 = vadd.f32 0.0, %v1062
      %1064 = vmatmul.f32.gmra.mxu0 %v986
      %v1065 = vpop.f32.mrf.mxu0
      %v1066 = vadd.f32 0.0, %v1065
      %1067 = vmatmul.f32.gmra.mxu0 %v989
      %v1068 = vpop.f32.mrf.mxu0
      %v1069 = vadd.f32 0.0, %v1068
      %1070 = vdwg.mxu0
      %v1071 = vadd.f32 %v886, %v1012
      %v1072 = vadd.f32 %v887, %v1015
      %v1073 = vadd.f32 %v888, %v1018
      %v1074 = vadd.f32 %v889, %v1021
      %v1075 = vadd.f32 %v890, %v1024
      %v1076 = vadd.f32 %v891, %v1027
      %v1077 = vadd.f32 %v892, %v1030
      %v1078 = vadd.f32 %v893, %v1033
      %v1079 = vadd.f32 %v894, %v1036
      %v1080 = vadd.f32 %v895, %v1039
      %v1081 = vadd.f32 %v896, %v1042
      %v1082 = vadd.f32 %v897, %v1045
      %v1083 = vadd.f32 %v898, %v1048
      %v1084 = vadd.f32 %v899, %v1051
      %v1085 = vadd.f32 %v900, %v1054
      %v1086 = vadd.f32 %v901, %v1057
      %v1087 = vadd.f32 %v902, %v1060
      %v1088 = vadd.f32 %v903, %v1063
      %v1089 = vadd.f32 %v904, %v1066
      %v1090 = vadd.f32 %v905, %v1069
      %v1091 = vld [vmem:[%s908 + $0x1] sm:$0xff]
      %v1092 = vld [vmem:[%s908 + $0x9] sm:$0xff]
      %v1093 = vld [vmem:[%s908 + $0x19] sm:$0xff]
      %v1094 = vld [vmem:[%s908 + $0x21] sm:$0xff]
      %v1095 = vld [vmem:[%s908 + $0x31] sm:$0xff]
      %v1096 = vld [vmem:[%s908 + $0x39] sm:$0xff]
      %v1097 = vld [vmem:[%s908 + $0x49] sm:$0xff]
      %v1098 = vld [vmem:[%s908 + $0x51] sm:$0xff]
      %v1099 = vld [vmem:[%s908 + $0x61] sm:$0xff]
      %v1100 = vld [vmem:[%s908 + $0x69] sm:$0xff]
      %v1101 = vld [vmem:[%s908 + $0x79] sm:$0xff]
      %v1102 = vld [vmem:[%s908 + $0x81] sm:$0xff]
      %v1103 = vld [vmem:[%s908 + $0x91] sm:$0xff]
      %v1104 = vld [vmem:[%s908 + $0x99] sm:$0xff]
      %v1105 = vld [vmem:[%s908 + $0xa9] sm:$0xff]
      %v1106 = vld [vmem:[%s908 + $0xb1] sm:$0xff]
      %v1107 = vld [vmem:[%s908 + $0xc1] sm:$0xff]
      %v1108 = vld [vmem:[%s908 + $0xc9] sm:$0xff]
      %v1109 = vld [vmem:[%s908 + $0xd9] sm:$0xff]
      %v1110 = vld [vmem:[%s908 + $0xe1] sm:$0xff]
      %s1111 = scalar_lea.vmem %s1, 16
      %v1112 = vld [vmem:[%s1111] sm:$0xf]
      %v1114 = vsel %vm442, %v1091, 0
      %v1117 = vsel %vm442, %v1092, 0
      %v1120 = vsel %vm442, %v1093, 0
      %v1123 = vsel %vm442, %v1094, 0
      %v1126 = vsel %vm442, %v1095, 0
      %v1129 = vsel %vm442, %v1096, 0
      %v1132 = vsel %vm442, %v1097, 0
      %v1135 = vsel %vm442, %v1098, 0
      %v1138 = vsel %vm442, %v1099, 0
      %v1141 = vsel %vm442, %v1100, 0
      %v1144 = vsel %vm442, %v1101, 0
      %v1147 = vsel %vm442, %v1102, 0
      %v1150 = vsel %vm442, %v1103, 0
      %v1153 = vsel %vm442, %v1104, 0
      %v1156 = vsel %vm442, %v1105, 0
      %v1159 = vsel %vm442, %v1106, 0
      %v1162 = vsel %vm442, %v1107, 0
      %v1165 = vsel %vm442, %v1108, 0
      %v1168 = vsel %vm442, %v1109, 0
      %v1171 = vsel %vm442, %v1110, 0
      %v1174 = vsel %vm503, %v1112, 0
      %1176 = vmatpush.msra.mxu0 0.0
      %1177 = vmatpush.msra.mxu0 0.0
      %1178 = vmatpush.msra.mxu0 0.0
      %1179 = vmatpush.msra.mxu0 0.0
      %1180 = vmatpush.msra.mxu0 0.0
      %1181 = vmatpush.msra.mxu0 0.0
      %1182 = vmatpush.msra.mxu0 0.0
      %1183 = vmatpush.msra.mxu0 0.0
      %1184 = vmatpush.msra.mxu0 0.0
      %1185 = vmatpush.msra.mxu0 0.0
      %1186 = vmatpush.msra.mxu0 0.0
      %1187 = vmatpush.msra.mxu0 0.0
      %1188 = vmatpush.msra.mxu0 0.0
      %1189 = vmatpush.msra.mxu0 0.0
      %1190 = vmatpush.msra.mxu0 0.0
      %1191 = vmatpush.msra.mxu0 %v1174
      %1192 = vmatmul.f32.gmra.mxu0 %v1114
      %v1193 = vpop.f32.mrf.mxu0
      %v1194 = vadd.f32 0.0, %v1193
      %1195 = vmatmul.f32.gmra.mxu0 %v1117
      %v1196 = vpop.f32.mrf.mxu0
      %v1197 = vadd.f32 0.0, %v1196
      %1198 = vmatmul.f32.gmra.mxu0 %v1120
      %v1199 = vpop.f32.mrf.mxu0
      %v1200 = vadd.f32 0.0, %v1199
      %1201 = vmatmul.f32.gmra.mxu0 %v1123
      %v1202 = vpop.f32.mrf.mxu0
      %v1203 = vadd.f32 0.0, %v1202
      %1204 = vmatmul.f32.gmra.mxu0 %v1126
      %v1205 = vpop.f32.mrf.mxu0
      %v1206 = vadd.f32 0.0, %v1205
      %1207 = vmatmul.f32.gmra.mxu0 %v1129
      %v1208 = vpop.f32.mrf.mxu0
      %v1209 = vadd.f32 0.0, %v1208
      %1210 = vmatmul.f32.gmra.mxu0 %v1132
      %v1211 = vpop.f32.mrf.mxu0
      %v1212 = vadd.f32 0.0, %v1211
      %1213 = vmatmul.f32.gmra.mxu0 %v1135
      %v1214 = vpop.f32.mrf.mxu0
      %v1215 = vadd.f32 0.0, %v1214
      %1216 = vmatmul.f32.gmra.mxu0 %v1138
      %v1217 = vpop.f32.mrf.mxu0
      %v1218 = vadd.f32 0.0, %v1217
      %1219 = vmatmul.f32.gmra.mxu0 %v1141
      %v1220 = vpop.f32.mrf.mxu0
      %v1221 = vadd.f32 0.0, %v1220
      %1222 = vmatmul.f32.gmra.mxu0 %v1144
      %v1223 = vpop.f32.mrf.mxu0
      %v1224 = vadd.f32 0.0, %v1223
      %1225 = vmatmul.f32.gmra.mxu0 %v1147
      %v1226 = vpop.f32.mrf.mxu0
      %v1227 = vadd.f32 0.0, %v1226
      %1228 = vmatmul.f32.gmra.mxu0 %v1150
      %v1229 = vpop.f32.mrf.mxu0
      %v1230 = vadd.f32 0.0, %v1229
      %1231 = vmatmul.f32.gmra.mxu0 %v1153
      %v1232 = vpop.f32.mrf.mxu0
      %v1233 = vadd.f32 0.0, %v1232
      %1234 = vmatmul.f32.gmra.mxu0 %v1156
      %v1235 = vpop.f32.mrf.mxu0
      %v1236 = vadd.f32 0.0, %v1235
      %1237 = vmatmul.f32.gmra.mxu0 %v1159
      %v1238 = vpop.f32.mrf.mxu0
      %v1239 = vadd.f32 0.0, %v1238
      %1240 = vmatmul.f32.gmra.mxu0 %v1162
      %v1241 = vpop.f32.mrf.mxu0
      %v1242 = vadd.f32 0.0, %v1241
      %1243 = vmatmul.f32.gmra.mxu0 %v1165
      %v1244 = vpop.f32.mrf.mxu0
      %v1245 = vadd.f32 0.0, %v1244
      %1246 = vmatmul.f32.gmra.mxu0 %v1168
      %v1247 = vpop.f32.mrf.mxu0
      %v1248 = vadd.f32 0.0, %v1247
      %1249 = vmatmul.f32.gmra.mxu0 %v1171
      %v1250 = vpop.f32.mrf.mxu0
      %v1251 = vadd.f32 0.0, %v1250
      %1252 = vdwg.mxu0
      %v1253 = vadd.f32 %v1071, %v1194
      %v1254 = vadd.f32 %v1072, %v1197
      %v1255 = vadd.f32 %v1073, %v1200
      %v1256 = vadd.f32 %v1074, %v1203
      %v1257 = vadd.f32 %v1075, %v1206
      %v1258 = vadd.f32 %v1076, %v1209
      %v1259 = vadd.f32 %v1077, %v1212
      %v1260 = vadd.f32 %v1078, %v1215
      %v1261 = vadd.f32 %v1079, %v1218
      %v1262 = vadd.f32 %v1080, %v1221
      %v1263 = vadd.f32 %v1081, %v1224
      %v1264 = vadd.f32 %v1082, %v1227
      %v1265 = vadd.f32 %v1083, %v1230
      %v1266 = vadd.f32 %v1084, %v1233
      %v1267 = vadd.f32 %v1085, %v1236
      %v1268 = vadd.f32 %v1086, %v1239
      %v1269 = vadd.f32 %v1087, %v1242
      %v1270 = vadd.f32 %v1088, %v1245
      %v1271 = vadd.f32 %v1089, %v1248
      %v1272 = vadd.f32 %v1090, %v1251
      %v1273 = vld [vmem:[%s908 + $0x2] sm:$0xff]
      %v1274 = vld [vmem:[%s908 + $0xa] sm:$0xff]
      %v1275 = vld [vmem:[%s908 + $0x1a] sm:$0xff]
      %v1276 = vld [vmem:[%s908 + $0x22] sm:$0xff]
      %v1277 = vld [vmem:[%s908 + $0x32] sm:$0xff]
      %v1278 = vld [vmem:[%s908 + $0x3a] sm:$0xff]
      %v1279 = vld [vmem:[%s908 + $0x4a] sm:$0xff]
      %v1280 = vld [vmem:[%s908 + $0x52] sm:$0xff]
      %v1281 = vld [vmem:[%s908 + $0x62] sm:$0xff]
      %v1282 = vld [vmem:[%s908 + $0x6a] sm:$0xff]
      %v1283 = vld [vmem:[%s908 + $0x7a] sm:$0xff]
      %v1284 = vld [vmem:[%s908 + $0x82] sm:$0xff]
      %v1285 = vld [vmem:[%s908 + $0x92] sm:$0xff]
      %v1286 = vld [vmem:[%s908 + $0x9a] sm:$0xff]
      %v1287 = vld [vmem:[%s908 + $0xaa] sm:$0xff]
      %v1288 = vld [vmem:[%s908 + $0xb2] sm:$0xff]
      %v1289 = vld [vmem:[%s908 + $0xc2] sm:$0xff]
      %v1290 = vld [vmem:[%s908 + $0xca] sm:$0xff]
      %v1291 = vld [vmem:[%s908 + $0xda] sm:$0xff]
      %v1292 = vld [vmem:[%s908 + $0xe2] sm:$0xff]
      %s1293 = scalar_lea.vmem %s1, 20
      %v1294 = vld [vmem:[%s1293] sm:$0xf]
      %v1296 = vsel %vm442, %v1273, 0
      %v1299 = vsel %vm442, %v1274, 0
      %v1302 = vsel %vm442, %v1275, 0
      %v1305 = vsel %vm442, %v1276, 0
      %v1308 = vsel %vm442, %v1277, 0
      %v1311 = vsel %vm442, %v1278, 0
      %v1314 = vsel %vm442, %v1279, 0
      %v1317 = vsel %vm442, %v1280, 0
      %v1320 = vsel %vm442, %v1281, 0
      %v1323 = vsel %vm442, %v1282, 0
      %v1326 = vsel %vm442, %v1283, 0
      %v1329 = vsel %vm442, %v1284, 0
      %v1332 = vsel %vm442, %v1285, 0
      %v1335 = vsel %vm442, %v1286, 0
      %v1338 = vsel %vm442, %v1287, 0
      %v1341 = vsel %vm442, %v1288, 0
      %v1344 = vsel %vm442, %v1289, 0
      %v1347 = vsel %vm442, %v1290, 0
      %v1350 = vsel %vm442, %v1291, 0
      %v1353 = vsel %vm442, %v1292, 0
      %v1356 = vsel %vm503, %v1294, 0
      %1358 = vmatpush.msra.mxu0 0.0
      %1359 = vmatpush.msra.mxu0 0.0
      %1360 = vmatpush.msra.mxu0 0.0
      %1361 = vmatpush.msra.mxu0 0.0
      %1362 = vmatpush.msra.mxu0 0.0
      %1363 = vmatpush.msra.mxu0 0.0
      %1364 = vmatpush.msra.mxu0 0.0
      %1365 = vmatpush.msra.mxu0 0.0
      %1366 = vmatpush.msra.mxu0 0.0
      %1367 = vmatpush.msra.mxu0 0.0
      %1368 = vmatpush.msra.mxu0 0.0
      %1369 = vmatpush.msra.mxu0 0.0
      %1370 = vmatpush.msra.mxu0 0.0
      %1371 = vmatpush.msra.mxu0 0.0
      %1372 = vmatpush.msra.mxu0 0.0
      %1373 = vmatpush.msra.mxu0 %v1356
      %1374 = vmatmul.f32.gmra.mxu0 %v1296
      %v1375 = vpop.f32.mrf.mxu0
      %v1376 = vadd.f32 0.0, %v1375
      %1377 = vmatmul.f32.gmra.mxu0 %v1299
      %v1378 = vpop.f32.mrf.mxu0
      %v1379 = vadd.f32 0.0, %v1378
      %1380 = vmatmul.f32.gmra.mxu0 %v1302
      %v1381 = vpop.f32.mrf.mxu0
      %v1382 = vadd.f32 0.0, %v1381
      %1383 = vmatmul.f32.gmra.mxu0 %v1305
      %v1384 = vpop.f32.mrf.mxu0
      %v1385 = vadd.f32 0.0, %v1384
      %1386 = vmatmul.f32.gmra.mxu0 %v1308
      %v1387 = vpop.f32.mrf.mxu0
      %v1388 = vadd.f32 0.0, %v1387
      %1389 = vmatmul.f32.gmra.mxu0 %v1311
      %v1390 = vpop.f32.mrf.mxu0
      %v1391 = vadd.f32 0.0, %v1390
      %1392 = vmatmul.f32.gmra.mxu0 %v1314
      %v1393 = vpop.f32.mrf.mxu0
      %v1394 = vadd.f32 0.0, %v1393
      %1395 = vmatmul.f32.gmra.mxu0 %v1317
      %v1396 = vpop.f32.mrf.mxu0
      %v1397 = vadd.f32 0.0, %v1396
      %1398 = vmatmul.f32.gmra.mxu0 %v1320
      %v1399 = vpop.f32.mrf.mxu0
      %v1400 = vadd.f32 0.0, %v1399
      %1401 = vmatmul.f32.gmra.mxu0 %v1323
      %v1402 = vpop.f32.mrf.mxu0
      %v1403 = vadd.f32 0.0, %v1402
      %1404 = vmatmul.f32.gmra.mxu0 %v1326
      %v1405 = vpop.f32.mrf.mxu0
      %v1406 = vadd.f32 0.0, %v1405
      %1407 = vmatmul.f32.gmra.mxu0 %v1329
      %v1408 = vpop.f32.mrf.mxu0
      %v1409 = vadd.f32 0.0, %v1408
      %1410 = vmatmul.f32.gmra.mxu0 %v1332
      %v1411 = vpop.f32.mrf.mxu0
      %v1412 = vadd.f32 0.0, %v1411
      %1413 = vmatmul.f32.gmra.mxu0 %v1335
      %v1414 = vpop.f32.mrf.mxu0
      %v1415 = vadd.f32 0.0, %v1414
      %1416 = vmatmul.f32.gmra.mxu0 %v1338
      %v1417 = vpop.f32.mrf.mxu0
      %v1418 = vadd.f32 0.0, %v1417
      %1419 = vmatmul.f32.gmra.mxu0 %v1341
      %v1420 = vpop.f32.mrf.mxu0
      %v1421 = vadd.f32 0.0, %v1420
      %1422 = vmatmul.f32.gmra.mxu0 %v1344
      %v1423 = vpop.f32.mrf.mxu0
      %v1424 = vadd.f32 0.0, %v1423
      %1425 = vmatmul.f32.gmra.mxu0 %v1347
      %v1426 = vpop.f32.mrf.mxu0
      %v1427 = vadd.f32 0.0, %v1426
      %1428 = vmatmul.f32.gmra.mxu0 %v1350
      %v1429 = vpop.f32.mrf.mxu0
      %v1430 = vadd.f32 0.0, %v1429
      %1431 = vmatmul.f32.gmra.mxu0 %v1353
      %v1432 = vpop.f32.mrf.mxu0
      %v1433 = vadd.f32 0.0, %v1432
      %1434 = vdwg.mxu0
      %v1435 = vadd.f32 %v1253, %v1376
      %v1436 = vadd.f32 %v1254, %v1379
      %v1437 = vadd.f32 %v1255, %v1382
      %v1438 = vadd.f32 %v1256, %v1385
      %v1439 = vadd.f32 %v1257, %v1388
      %v1440 = vadd.f32 %v1258, %v1391
      %v1441 = vadd.f32 %v1259, %v1394
      %v1442 = vadd.f32 %v1260, %v1397
      %v1443 = vadd.f32 %v1261, %v1400
      %v1444 = vadd.f32 %v1262, %v1403
      %v1445 = vadd.f32 %v1263, %v1406
      %v1446 = vadd.f32 %v1264, %v1409
      %v1447 = vadd.f32 %v1265, %v1412
      %v1448 = vadd.f32 %v1266, %v1415
      %v1449 = vadd.f32 %v1267, %v1418
      %v1450 = vadd.f32 %v1268, %v1421
      %v1451 = vadd.f32 %v1269, %v1424
      %v1452 = vadd.f32 %v1270, %v1427
      %v1453 = vadd.f32 %v1271, %v1430
      %v1454 = vadd.f32 %v1272, %v1433
      %s1455 = sadd.s32 %s250, 2
      %s1456 = smul.u32 %s1455, 24
      %s1457 = scalar_lea.vmem [#allocation2], %s1456
      %v1458 = vld [vmem:[%s1457] sm:$0xff]
      %v1459 = vld [vmem:[%s1457 + $0x8] sm:$0xff]
      %v1460 = vld [vmem:[%s1457 + $0x18] sm:$0xff]
      %v1461 = vld [vmem:[%s1457 + $0x20] sm:$0xff]
      %v1462 = vld [vmem:[%s1457 + $0x30] sm:$0xff]
      %v1463 = vld [vmem:[%s1457 + $0x38] sm:$0xff]
      %v1464 = vld [vmem:[%s1457 + $0x48] sm:$0xff]
      %v1465 = vld [vmem:[%s1457 + $0x50] sm:$0xff]
      %v1466 = vld [vmem:[%s1457 + $0x60] sm:$0xff]
      %v1467 = vld [vmem:[%s1457 + $0x68] sm:$0xff]
      %v1468 = vld [vmem:[%s1457 + $0x78] sm:$0xff]
      %v1469 = vld [vmem:[%s1457 + $0x80] sm:$0xff]
      %v1470 = vld [vmem:[%s1457 + $0x90] sm:$0xff]
      %v1471 = vld [vmem:[%s1457 + $0x98] sm:$0xff]
      %v1472 = vld [vmem:[%s1457 + $0xa8] sm:$0xff]
      %v1473 = vld [vmem:[%s1457 + $0xb0] sm:$0xff]
      %v1474 = vld [vmem:[%s1457 + $0xc0] sm:$0xff]
      %v1475 = vld [vmem:[%s1457 + $0xc8] sm:$0xff]
      %v1476 = vld [vmem:[%s1457 + $0xd8] sm:$0xff]
      %v1477 = vld [vmem:[%s1457 + $0xe0] sm:$0xff]
      %s1478 = scalar_lea.vmem %s1, 24
      %v1479 = vld [vmem:[%s1478] sm:$0xf]
      %v1481 = vsel %vm442, %v1458, 0
      %v1484 = vsel %vm442, %v1459, 0
      %v1487 = vsel %vm442, %v1460, 0
      %v1490 = vsel %vm442, %v1461, 0
      %v1493 = vsel %vm442, %v1462, 0
      %v1496 = vsel %vm442, %v1463, 0
      %v1499 = vsel %vm442, %v1464, 0
      %v1502 = vsel %vm442, %v1465, 0
      %v1505 = vsel %vm442, %v1466, 0
      %v1508 = vsel %vm442, %v1467, 0
      %v1511 = vsel %vm442, %v1468, 0
      %v1514 = vsel %vm442, %v1469, 0
      %v1517 = vsel %vm442, %v1470, 0
      %v1520 = vsel %vm442, %v1471, 0
      %v1523 = vsel %vm442, %v1472, 0
      %v1526 = vsel %vm442, %v1473, 0
      %v1529 = vsel %vm442, %v1474, 0
      %v1532 = vsel %vm442, %v1475, 0
      %v1535 = vsel %vm442, %v1476, 0
      %v1538 = vsel %vm442, %v1477, 0
      %v1541 = vsel %vm503, %v1479, 0
      %1543 = vmatpush.msra.mxu0 0.0
      %1544 = vmatpush.msra.mxu0 0.0
      %1545 = vmatpush.msra.mxu0 0.0
      %1546 = vmatpush.msra.mxu0 0.0
      %1547 = vmatpush.msra.mxu0 0.0
      %1548 = vmatpush.msra.mxu0 0.0
      %1549 = vmatpush.msra.mxu0 0.0
      %1550 = vmatpush.msra.mxu0 0.0
      %1551 = vmatpush.msra.mxu0 0.0
      %1552 = vmatpush.msra.mxu0 0.0
      %1553 = vmatpush.msra.mxu0 0.0
      %1554 = vmatpush.msra.mxu0 0.0
      %1555 = vmatpush.msra.mxu0 0.0
      %1556 = vmatpush.msra.mxu0 0.0
      %1557 = vmatpush.msra.mxu0 0.0
      %1558 = vmatpush.msra.mxu0 %v1541
      %1559 = vmatmul.f32.gmra.mxu0 %v1481
      %v1560 = vpop.f32.mrf.mxu0
      %v1561 = vadd.f32 0.0, %v1560
      %1562 = vmatmul.f32.gmra.mxu0 %v1484
      %v1563 = vpop.f32.mrf.mxu0
      %v1564 = vadd.f32 0.0, %v1563
      %1565 = vmatmul.f32.gmra.mxu0 %v1487
      %v1566 = vpop.f32.mrf.mxu0
      %v1567 = vadd.f32 0.0, %v1566
      %1568 = vmatmul.f32.gmra.mxu0 %v1490
      %v1569 = vpop.f32.mrf.mxu0
      %v1570 = vadd.f32 0.0, %v1569
      %1571 = vmatmul.f32.gmra.mxu0 %v1493
      %v1572 = vpop.f32.mrf.mxu0
      %v1573 = vadd.f32 0.0, %v1572
      %1574 = vmatmul.f32.gmra.mxu0 %v1496
      %v1575 = vpop.f32.mrf.mxu0
      %v1576 = vadd.f32 0.0, %v1575
      %1577 = vmatmul.f32.gmra.mxu0 %v1499
      %v1578 = vpop.f32.mrf.mxu0
      %v1579 = vadd.f32 0.0, %v1578
      %1580 = vmatmul.f32.gmra.mxu0 %v1502
      %v1581 = vpop.f32.mrf.mxu0
      %v1582 = vadd.f32 0.0, %v1581
      %1583 = vmatmul.f32.gmra.mxu0 %v1505
      %v1584 = vpop.f32.mrf.mxu0
      %v1585 = vadd.f32 0.0, %v1584
      %1586 = vmatmul.f32.gmra.mxu0 %v1508
      %v1587 = vpop.f32.mrf.mxu0
      %v1588 = vadd.f32 0.0, %v1587
      %1589 = vmatmul.f32.gmra.mxu0 %v1511
      %v1590 = vpop.f32.mrf.mxu0
      %v1591 = vadd.f32 0.0, %v1590
      %1592 = vmatmul.f32.gmra.mxu0 %v1514
      %v1593 = vpop.f32.mrf.mxu0
      %v1594 = vadd.f32 0.0, %v1593
      %1595 = vmatmul.f32.gmra.mxu0 %v1517
      %v1596 = vpop.f32.mrf.mxu0
      %v1597 = vadd.f32 0.0, %v1596
      %1598 = vmatmul.f32.gmra.mxu0 %v1520
      %v1599 = vpop.f32.mrf.mxu0
      %v1600 = vadd.f32 0.0, %v1599
      %1601 = vmatmul.f32.gmra.mxu0 %v1523
      %v1602 = vpop.f32.mrf.mxu0
      %v1603 = vadd.f32 0.0, %v1602
      %1604 = vmatmul.f32.gmra.mxu0 %v1526
      %v1605 = vpop.f32.mrf.mxu0
      %v1606 = vadd.f32 0.0, %v1605
      %1607 = vmatmul.f32.gmra.mxu0 %v1529
      %v1608 = vpop.f32.mrf.mxu0
      %v1609 = vadd.f32 0.0, %v1608
      %1610 = vmatmul.f32.gmra.mxu0 %v1532
      %v1611 = vpop.f32.mrf.mxu0
      %v1612 = vadd.f32 0.0, %v1611
      %1613 = vmatmul.f32.gmra.mxu0 %v1535
      %v1614 = vpop.f32.mrf.mxu0
      %v1615 = vadd.f32 0.0, %v1614
      %1616 = vmatmul.f32.gmra.mxu0 %v1538
      %v1617 = vpop.f32.mrf.mxu0
      %v1618 = vadd.f32 0.0, %v1617
      %1619 = vdwg.mxu0
      %v1620 = vadd.f32 %v1435, %v1561
      %v1621 = vadd.f32 %v1436, %v1564
      %v1622 = vadd.f32 %v1437, %v1567
      %v1623 = vadd.f32 %v1438, %v1570
      %v1624 = vadd.f32 %v1439, %v1573
      %v1625 = vadd.f32 %v1440, %v1576
      %v1626 = vadd.f32 %v1441, %v1579
      %v1627 = vadd.f32 %v1442, %v1582
      %v1628 = vadd.f32 %v1443, %v1585
      %v1629 = vadd.f32 %v1444, %v1588
      %v1630 = vadd.f32 %v1445, %v1591
      %v1631 = vadd.f32 %v1446, %v1594
      %v1632 = vadd.f32 %v1447, %v1597
      %v1633 = vadd.f32 %v1448, %v1600
      %v1634 = vadd.f32 %v1449, %v1603
      %v1635 = vadd.f32 %v1450, %v1606
      %v1636 = vadd.f32 %v1451, %v1609
      %v1637 = vadd.f32 %v1452, %v1612
      %v1638 = vadd.f32 %v1453, %v1615
      %v1639 = vadd.f32 %v1454, %v1618
      %v1640 = vld [vmem:[%s1457 + $0x1] sm:$0xff]
      %v1641 = vld [vmem:[%s1457 + $0x9] sm:$0xff]
      %v1642 = vld [vmem:[%s1457 + $0x19] sm:$0xff]
      %v1643 = vld [vmem:[%s1457 + $0x21] sm:$0xff]
      %v1644 = vld [vmem:[%s1457 + $0x31] sm:$0xff]
      %v1645 = vld [vmem:[%s1457 + $0x39] sm:$0xff]
      %v1646 = vld [vmem:[%s1457 + $0x49] sm:$0xff]
      %v1647 = vld [vmem:[%s1457 + $0x51] sm:$0xff]
      %v1648 = vld [vmem:[%s1457 + $0x61] sm:$0xff]
      %v1649 = vld [vmem:[%s1457 + $0x69] sm:$0xff]
      %v1650 = vld [vmem:[%s1457 + $0x79] sm:$0xff]
      %v1651 = vld [vmem:[%s1457 + $0x81] sm:$0xff]
      %v1652 = vld [vmem:[%s1457 + $0x91] sm:$0xff]
      %v1653 = vld [vmem:[%s1457 + $0x99] sm:$0xff]
      %v1654 = vld [vmem:[%s1457 + $0xa9] sm:$0xff]
      %v1655 = vld [vmem:[%s1457 + $0xb1] sm:$0xff]
      %v1656 = vld [vmem:[%s1457 + $0xc1] sm:$0xff]
      %v1657 = vld [vmem:[%s1457 + $0xc9] sm:$0xff]
      %v1658 = vld [vmem:[%s1457 + $0xd9] sm:$0xff]
      %v1659 = vld [vmem:[%s1457 + $0xe1] sm:$0xff]
      %s1660 = scalar_lea.vmem %s1, 28
      %v1661 = vld [vmem:[%s1660] sm:$0xf]
      %v1663 = vsel %vm442, %v1640, 0
      %v1666 = vsel %vm442, %v1641, 0
      %v1669 = vsel %vm442, %v1642, 0
      %v1672 = vsel %vm442, %v1643, 0
      %v1675 = vsel %vm442, %v1644, 0
      %v1678 = vsel %vm442, %v1645, 0
      %v1681 = vsel %vm442, %v1646, 0
      %v1684 = vsel %vm442, %v1647, 0
      %v1687 = vsel %vm442, %v1648, 0
      %v1690 = vsel %vm442, %v1649, 0
      %v1693 = vsel %vm442, %v1650, 0
      %v1696 = vsel %vm442, %v1651, 0
      %v1699 = vsel %vm442, %v1652, 0
      %v1702 = vsel %vm442, %v1653, 0
      %v1705 = vsel %vm442, %v1654, 0
      %v1708 = vsel %vm442, %v1655, 0
      %v1711 = vsel %vm442, %v1656, 0
      %v1714 = vsel %vm442, %v1657, 0
      %v1717 = vsel %vm442, %v1658, 0
      %v1720 = vsel %vm442, %v1659, 0
      %v1723 = vsel %vm503, %v1661, 0
      %1725 = vmatpush.msra.mxu0 0.0
      %1726 = vmatpush.msra.mxu0 0.0
      %1727 = vmatpush.msra.mxu0 0.0
      %1728 = vmatpush.msra.mxu0 0.0
      %1729 = vmatpush.msra.mxu0 0.0
      %1730 = vmatpush.msra.mxu0 0.0
      %1731 = vmatpush.msra.mxu0 0.0
      %1732 = vmatpush.msra.mxu0 0.0
      %1733 = vmatpush.msra.mxu0 0.0
      %1734 = vmatpush.msra.mxu0 0.0
      %1735 = vmatpush.msra.mxu0 0.0
      %1736 = vmatpush.msra.mxu0 0.0
      %1737 = vmatpush.msra.mxu0 0.0
      %1738 = vmatpush.msra.mxu0 0.0
      %1739 = vmatpush.msra.mxu0 0.0
      %1740 = vmatpush.msra.mxu0 %v1723
      %1741 = vmatmul.f32.gmra.mxu0 %v1663
      %v1742 = vpop.f32.mrf.mxu0
      %v1743 = vadd.f32 0.0, %v1742
      %1744 = vmatmul.f32.gmra.mxu0 %v1666
      %v1745 = vpop.f32.mrf.mxu0
      %v1746 = vadd.f32 0.0, %v1745
      %1747 = vmatmul.f32.gmra.mxu0 %v1669
      %v1748 = vpop.f32.mrf.mxu0
      %v1749 = vadd.f32 0.0, %v1748
      %1750 = vmatmul.f32.gmra.mxu0 %v1672
      %v1751 = vpop.f32.mrf.mxu0
      %v1752 = vadd.f32 0.0, %v1751
      %1753 = vmatmul.f32.gmra.mxu0 %v1675
      %v1754 = vpop.f32.mrf.mxu0
      %v1755 = vadd.f32 0.0, %v1754
      %1756 = vmatmul.f32.gmra.mxu0 %v1678
      %v1757 = vpop.f32.mrf.mxu0
      %v1758 = vadd.f32 0.0, %v1757
      %1759 = vmatmul.f32.gmra.mxu0 %v1681
      %v1760 = vpop.f32.mrf.mxu0
      %v1761 = vadd.f32 0.0, %v1760
      %1762 = vmatmul.f32.gmra.mxu0 %v1684
      %v1763 = vpop.f32.mrf.mxu0
      %v1764 = vadd.f32 0.0, %v1763
      %1765 = vmatmul.f32.gmra.mxu0 %v1687
      %v1766 = vpop.f32.mrf.mxu0
      %v1767 = vadd.f32 0.0, %v1766
      %1768 = vmatmul.f32.gmra.mxu0 %v1690
      %v1769 = vpop.f32.mrf.mxu0
      %v1770 = vadd.f32 0.0, %v1769
      %1771 = vmatmul.f32.gmra.mxu0 %v1693
      %v1772 = vpop.f32.mrf.mxu0
      %v1773 = vadd.f32 0.0, %v1772
      %1774 = vmatmul.f32.gmra.mxu0 %v1696
      %v1775 = vpop.f32.mrf.mxu0
      %v1776 = vadd.f32 0.0, %v1775
      %1777 = vmatmul.f32.gmra.mxu0 %v1699
      %v1778 = vpop.f32.mrf.mxu0
      %v1779 = vadd.f32 0.0, %v1778
      %1780 = vmatmul.f32.gmra.mxu0 %v1702
      %v1781 = vpop.f32.mrf.mxu0
      %v1782 = vadd.f32 0.0, %v1781
      %1783 = vmatmul.f32.gmra.mxu0 %v1705
      %v1784 = vpop.f32.mrf.mxu0
      %v1785 = vadd.f32 0.0, %v1784
      %1786 = vmatmul.f32.gmra.mxu0 %v1708
      %v1787 = vpop.f32.mrf.mxu0
      %v1788 = vadd.f32 0.0, %v1787
      %1789 = vmatmul.f32.gmra.mxu0 %v1711
      %v1790 = vpop.f32.mrf.mxu0
      %v1791 = vadd.f32 0.0, %v1790
      %1792 = vmatmul.f32.gmra.mxu0 %v1714
      %v1793 = vpop.f32.mrf.mxu0
      %v1794 = vadd.f32 0.0, %v1793
      %1795 = vmatmul.f32.gmra.mxu0 %v1717
      %v1796 = vpop.f32.mrf.mxu0
      %v1797 = vadd.f32 0.0, %v1796
      %1798 = vmatmul.f32.gmra.mxu0 %v1720
      %v1799 = vpop.f32.mrf.mxu0
      %v1800 = vadd.f32 0.0, %v1799
      %1801 = vdwg.mxu0
      %v1802 = vadd.f32 %v1620, %v1743
      %v1803 = vadd.f32 %v1621, %v1746
      %v1804 = vadd.f32 %v1622, %v1749
      %v1805 = vadd.f32 %v1623, %v1752
      %v1806 = vadd.f32 %v1624, %v1755
      %v1807 = vadd.f32 %v1625, %v1758
      %v1808 = vadd.f32 %v1626, %v1761
      %v1809 = vadd.f32 %v1627, %v1764
      %v1810 = vadd.f32 %v1628, %v1767
      %v1811 = vadd.f32 %v1629, %v1770
      %v1812 = vadd.f32 %v1630, %v1773
      %v1813 = vadd.f32 %v1631, %v1776
      %v1814 = vadd.f32 %v1632, %v1779
      %v1815 = vadd.f32 %v1633, %v1782
      %v1816 = vadd.f32 %v1634, %v1785
      %v1817 = vadd.f32 %v1635, %v1788
      %v1818 = vadd.f32 %v1636, %v1791
      %v1819 = vadd.f32 %v1637, %v1794
      %v1820 = vadd.f32 %v1638, %v1797
      %v1821 = vadd.f32 %v1639, %v1800
      %v1822 = vld [vmem:[%s1457 + $0x2] sm:$0xff]
      %v1823 = vld [vmem:[%s1457 + $0xa] sm:$0xff]
      %v1824 = vld [vmem:[%s1457 + $0x1a] sm:$0xff]
      %v1825 = vld [vmem:[%s1457 + $0x22] sm:$0xff]
      %v1826 = vld [vmem:[%s1457 + $0x32] sm:$0xff]
      %v1827 = vld [vmem:[%s1457 + $0x3a] sm:$0xff]
      %v1828 = vld [vmem:[%s1457 + $0x4a] sm:$0xff]
      %v1829 = vld [vmem:[%s1457 + $0x52] sm:$0xff]
      %v1830 = vld [vmem:[%s1457 + $0x62] sm:$0xff]
      %v1831 = vld [vmem:[%s1457 + $0x6a] sm:$0xff]
      %v1832 = vld [vmem:[%s1457 + $0x7a] sm:$0xff]
      %v1833 = vld [vmem:[%s1457 + $0x82] sm:$0xff]
      %v1834 = vld [vmem:[%s1457 + $0x92] sm:$0xff]
      %v1835 = vld [vmem:[%s1457 + $0x9a] sm:$0xff]
      %v1836 = vld [vmem:[%s1457 + $0xaa] sm:$0xff]
      %v1837 = vld [vmem:[%s1457 + $0xb2] sm:$0xff]
      %v1838 = vld [vmem:[%s1457 + $0xc2] sm:$0xff]
      %v1839 = vld [vmem:[%s1457 + $0xca] sm:$0xff]
      %v1840 = vld [vmem:[%s1457 + $0xda] sm:$0xff]
      %v1841 = vld [vmem:[%s1457 + $0xe2] sm:$0xff]
      %s1842 = scalar_lea.vmem %s1, 32
      %v1843 = vld [vmem:[%s1842] sm:$0xf]
      %v1845 = vsel %vm442, %v1822, 0
      %v1848 = vsel %vm442, %v1823, 0
      %v1851 = vsel %vm442, %v1824, 0
      %v1854 = vsel %vm442, %v1825, 0
      %v1857 = vsel %vm442, %v1826, 0
      %v1860 = vsel %vm442, %v1827, 0
      %v1863 = vsel %vm442, %v1828, 0
      %v1866 = vsel %vm442, %v1829, 0
      %v1869 = vsel %vm442, %v1830, 0
      %v1872 = vsel %vm442, %v1831, 0
      %v1875 = vsel %vm442, %v1832, 0
      %v1878 = vsel %vm442, %v1833, 0
      %v1881 = vsel %vm442, %v1834, 0
      %v1884 = vsel %vm442, %v1835, 0
      %v1887 = vsel %vm442, %v1836, 0
      %v1890 = vsel %vm442, %v1837, 0
      %v1893 = vsel %vm442, %v1838, 0
      %v1896 = vsel %vm442, %v1839, 0
      %v1899 = vsel %vm442, %v1840, 0
      %v1902 = vsel %vm442, %v1841, 0
      %v1905 = vsel %vm503, %v1843, 0
      %1907 = vmatpush.msra.mxu0 0.0
      %1908 = vmatpush.msra.mxu0 0.0
      %1909 = vmatpush.msra.mxu0 0.0
      %1910 = vmatpush.msra.mxu0 0.0
      %1911 = vmatpush.msra.mxu0 0.0
      %1912 = vmatpush.msra.mxu0 0.0
      %1913 = vmatpush.msra.mxu0 0.0
      %1914 = vmatpush.msra.mxu0 0.0
      %1915 = vmatpush.msra.mxu0 0.0
      %1916 = vmatpush.msra.mxu0 0.0
      %1917 = vmatpush.msra.mxu0 0.0
      %1918 = vmatpush.msra.mxu0 0.0
      %1919 = vmatpush.msra.mxu0 0.0
      %1920 = vmatpush.msra.mxu0 0.0
      %1921 = vmatpush.msra.mxu0 0.0
      %1922 = vmatpush.msra.mxu0 %v1905
      %1923 = vmatmul.f32.gmra.mxu0 %v1845
      %v1924 = vpop.f32.mrf.mxu0
      %v1925 = vadd.f32 0.0, %v1924
      %1926 = vmatmul.f32.gmra.mxu0 %v1848
      %v1927 = vpop.f32.mrf.mxu0
      %v1928 = vadd.f32 0.0, %v1927
      %1929 = vmatmul.f32.gmra.mxu0 %v1851
      %v1930 = vpop.f32.mrf.mxu0
      %v1931 = vadd.f32 0.0, %v1930
      %1932 = vmatmul.f32.gmra.mxu0 %v1854
      %v1933 = vpop.f32.mrf.mxu0
      %v1934 = vadd.f32 0.0, %v1933
      %1935 = vmatmul.f32.gmra.mxu0 %v1857
      %v1936 = vpop.f32.mrf.mxu0
      %v1937 = vadd.f32 0.0, %v1936
      %1938 = vmatmul.f32.gmra.mxu0 %v1860
      %v1939 = vpop.f32.mrf.mxu0
      %v1940 = vadd.f32 0.0, %v1939
      %1941 = vmatmul.f32.gmra.mxu0 %v1863
      %v1942 = vpop.f32.mrf.mxu0
      %v1943 = vadd.f32 0.0, %v1942
      %1944 = vmatmul.f32.gmra.mxu0 %v1866
      %v1945 = vpop.f32.mrf.mxu0
      %v1946 = vadd.f32 0.0, %v1945
      %1947 = vmatmul.f32.gmra.mxu0 %v1869
      %v1948 = vpop.f32.mrf.mxu0
      %v1949 = vadd.f32 0.0, %v1948
      %1950 = vmatmul.f32.gmra.mxu0 %v1872
      %v1951 = vpop.f32.mrf.mxu0
      %v1952 = vadd.f32 0.0, %v1951
      %1953 = vmatmul.f32.gmra.mxu0 %v1875
      %v1954 = vpop.f32.mrf.mxu0
      %v1955 = vadd.f32 0.0, %v1954
      %1956 = vmatmul.f32.gmra.mxu0 %v1878
      %v1957 = vpop.f32.mrf.mxu0
      %v1958 = vadd.f32 0.0, %v1957
      %1959 = vmatmul.f32.gmra.mxu0 %v1881
      %v1960 = vpop.f32.mrf.mxu0
      %v1961 = vadd.f32 0.0, %v1960
      %1962 = vmatmul.f32.gmra.mxu0 %v1884
      %v1963 = vpop.f32.mrf.mxu0
      %v1964 = vadd.f32 0.0, %v1963
      %1965 = vmatmul.f32.gmra.mxu0 %v1887
      %v1966 = vpop.f32.mrf.mxu0
      %v1967 = vadd.f32 0.0, %v1966
      %1968 = vmatmul.f32.gmra.mxu0 %v1890
      %v1969 = vpop.f32.mrf.mxu0
      %v1970 = vadd.f32 0.0, %v1969
      %1971 = vmatmul.f32.gmra.mxu0 %v1893
      %v1972 = vpop.f32.mrf.mxu0
      %v1973 = vadd.f32 0.0, %v1972
      %1974 = vmatmul.f32.gmra.mxu0 %v1896
      %v1975 = vpop.f32.mrf.mxu0
      %v1976 = vadd.f32 0.0, %v1975
      %1977 = vmatmul.f32.gmra.mxu0 %v1899
      %v1978 = vpop.f32.mrf.mxu0
      %v1979 = vadd.f32 0.0, %v1978
      %1980 = vmatmul.f32.gmra.mxu0 %v1902
      %v1981 = vpop.f32.mrf.mxu0
      %v1982 = vadd.f32 0.0, %v1981
      %1983 = vdwg.mxu0
      %v1984 = vadd.f32 %v1802, %v1925
      %v1985 = vadd.f32 %v1803, %v1928
      %v1986 = vadd.f32 %v1804, %v1931
      %v1987 = vadd.f32 %v1805, %v1934
      %v1988 = vadd.f32 %v1806, %v1937
      %v1989 = vadd.f32 %v1807, %v1940
      %v1990 = vadd.f32 %v1808, %v1943
      %v1991 = vadd.f32 %v1809, %v1946
      %v1992 = vadd.f32 %v1810, %v1949
      %v1993 = vadd.f32 %v1811, %v1952
      %v1994 = vadd.f32 %v1812, %v1955
      %v1995 = vadd.f32 %v1813, %v1958
      %v1996 = vadd.f32 %v1814, %v1961
      %v1997 = vadd.f32 %v1815, %v1964
      %v1998 = vadd.f32 %v1816, %v1967
      %v1999 = vadd.f32 %v1817, %v1970
      %v2000 = vadd.f32 %v1818, %v1973
      %v2001 = vadd.f32 %v1819, %v1976
      %v2002 = vadd.f32 %v1820, %v1979
      %v2003 = vadd.f32 %v1821, %v1982
      %v2004 = vld [vmem:[%s2] sm:$0x1]
      %v2006 = vperm.slane %v2004, 0
      %v2008 = vadd.f32 %v1984, %v2006
      %v2009 = vadd.f32 %v1985, %v2006
      %v2010 = vadd.f32 %v1986, %v2006
      %v2011 = vadd.f32 %v1987, %v2006
      %v2012 = vadd.f32 %v1988, %v2006
      %v2013 = vadd.f32 %v1989, %v2006
      %v2014 = vadd.f32 %v1990, %v2006
      %v2015 = vadd.f32 %v1991, %v2006
      %v2016 = vadd.f32 %v1992, %v2006
      %v2017 = vadd.f32 %v1993, %v2006
      %v2018 = vadd.f32 %v1994, %v2006
      %v2019 = vadd.f32 %v1995, %v2006
      %v2020 = vadd.f32 %v1996, %v2006
      %v2021 = vadd.f32 %v1997, %v2006
      %v2022 = vadd.f32 %v1998, %v2006
      %v2023 = vadd.f32 %v1999, %v2006
      %v2024 = vadd.f32 %v2000, %v2006
      %v2025 = vadd.f32 %v2001, %v2006
      %v2026 = vadd.f32 %v2002, %v2006
      %v2027 = vadd.f32 %v2003, %v2006
      %vm2028 = vcmp.gt.f32.partialorder %v2008, 0.0
      %vm2029 = vcmp.gt.f32.partialorder %v2009, 0.0
      %vm2030 = vcmp.gt.f32.partialorder %v2010, 0.0
      %vm2031 = vcmp.gt.f32.partialorder %v2011, 0.0
      %vm2032 = vcmp.gt.f32.partialorder %v2012, 0.0
      %vm2033 = vcmp.gt.f32.partialorder %v2013, 0.0
      %vm2034 = vcmp.gt.f32.partialorder %v2014, 0.0
      %vm2035 = vcmp.gt.f32.partialorder %v2015, 0.0
      %vm2036 = vcmp.gt.f32.partialorder %v2016, 0.0
      %vm2037 = vcmp.gt.f32.partialorder %v2017, 0.0
      %vm2038 = vcmp.gt.f32.partialorder %v2018, 0.0
      %vm2039 = vcmp.gt.f32.partialorder %v2019, 0.0
      %vm2040 = vcmp.gt.f32.partialorder %v2020, 0.0
      %vm2041 = vcmp.gt.f32.partialorder %v2021, 0.0
      %vm2042 = vcmp.gt.f32.partialorder %v2022, 0.0
      %vm2043 = vcmp.gt.f32.partialorder %v2023, 0.0
      %vm2044 = vcmp.gt.f32.partialorder %v2024, 0.0
      %vm2045 = vcmp.gt.f32.partialorder %v2025, 0.0
      %vm2046 = vcmp.gt.f32.partialorder %v2026, 0.0
      %vm2047 = vcmp.gt.f32.partialorder %v2027, 0.0
      %v2048 = vmul.f32 %v2008, 0.2
      %v2049 = vmul.f32 %v2009, 0.2
      %v2050 = vmul.f32 %v2010, 0.2
      %v2051 = vmul.f32 %v2011, 0.2
      %v2052 = vmul.f32 %v2012, 0.2
      %v2053 = vmul.f32 %v2013, 0.2
      %v2054 = vmul.f32 %v2014, 0.2
      %v2055 = vmul.f32 %v2015, 0.2
      %v2056 = vmul.f32 %v2016, 0.2
      %v2057 = vmul.f32 %v2017, 0.2
      %v2058 = vmul.f32 %v2018, 0.2
      %v2059 = vmul.f32 %v2019, 0.2
      %v2060 = vmul.f32 %v2020, 0.2
      %v2061 = vmul.f32 %v2021, 0.2
      %v2062 = vmul.f32 %v2022, 0.2
      %v2063 = vmul.f32 %v2023, 0.2
      %v2064 = vmul.f32 %v2024, 0.2
      %v2065 = vmul.f32 %v2025, 0.2
      %v2066 = vmul.f32 %v2026, 0.2
      %v2067 = vmul.f32 %v2027, 0.2
      %v2068 = vsel %vm2028, %v2008, %v2048
      %v2069 = vsel %vm2029, %v2009, %v2049
      %v2070 = vsel %vm2030, %v2010, %v2050
      %v2071 = vsel %vm2031, %v2011, %v2051
      %v2072 = vsel %vm2032, %v2012, %v2052
      %v2073 = vsel %vm2033, %v2013, %v2053
      %v2074 = vsel %vm2034, %v2014, %v2054
      %v2075 = vsel %vm2035, %v2015, %v2055
      %v2076 = vsel %vm2036, %v2016, %v2056
      %v2077 = vsel %vm2037, %v2017, %v2057
      %v2078 = vsel %vm2038, %v2018, %v2058
      %v2079 = vsel %vm2039, %v2019, %v2059
      %v2080 = vsel %vm2040, %v2020, %v2060
      %v2081 = vsel %vm2041, %v2021, %v2061
      %v2082 = vsel %vm2042, %v2022, %v2062
      %v2083 = vsel %vm2043, %v2023, %v2063
      %v2084 = vsel %vm2044, %v2024, %v2064
      %v2085 = vsel %vm2045, %v2025, %v2065
      %v2086 = vsel %vm2046, %v2026, %v2066
      %v2087 = vsel %vm2047, %v2027, %v2067
      %v2088 = vmul.f32 %v2068, %v2068
      %v2089 = vmul.f32 %v2069, %v2069
      %v2090 = vmul.f32 %v2070, %v2070
      %v2091 = vmul.f32 %v2071, %v2071
      %v2092 = vmul.f32 %v2072, %v2072
      %v2093 = vmul.f32 %v2073, %v2073
      %v2094 = vmul.f32 %v2074, %v2074
      %v2095 = vmul.f32 %v2075, %v2075
      %v2096 = vmul.f32 %v2076, %v2076
      %v2097 = vmul.f32 %v2077, %v2077
      %v2098 = vmul.f32 %v2078, %v2078
      %v2099 = vmul.f32 %v2079, %v2079
      %v2100 = vmul.f32 %v2080, %v2080
      %v2101 = vmul.f32 %v2081, %v2081
      %v2102 = vmul.f32 %v2082, %v2082
      %v2103 = vmul.f32 %v2083, %v2083
      %v2104 = vmul.f32 %v2084, %v2084
      %v2105 = vmul.f32 %v2085, %v2085
      %v2106 = vmul.f32 %v2086, %v2086
      %v2107 = vmul.f32 %v2087, %v2087
      %vm2108 = vcmask 64512
      %v2109 = vsel %vm2108, %v2088, 0.0
      %2110 = vadd.xlane.f32.xlu0 %v2109
      %v2111 = vpop.xlane.xlu0 %2110
      %v2112 = vsel %vm2108, %v2089, 0.0
      %2113 = vadd.xlane.f32.xlu0 %v2112
      %v2114 = vpop.xlane.xlu0 %2113
      %v2115 = vsel %vm2108, %v2090, 0.0
      %2116 = vadd.xlane.f32.xlu0 %v2115
      %v2117 = vpop.xlane.xlu0 %2116
      %v2118 = vsel %vm2108, %v2091, 0.0
      %2119 = vadd.xlane.f32.xlu0 %v2118
      %v2120 = vpop.xlane.xlu0 %2119
      %v2121 = vsel %vm2108, %v2092, 0.0
      %2122 = vadd.xlane.f32.xlu0 %v2121
      %v2123 = vpop.xlane.xlu0 %2122
      %v2124 = vsel %vm2108, %v2093, 0.0
      %2125 = vadd.xlane.f32.xlu0 %v2124
      %v2126 = vpop.xlane.xlu0 %2125
      %v2127 = vsel %vm2108, %v2094, 0.0
      %2128 = vadd.xlane.f32.xlu0 %v2127
      %v2129 = vpop.xlane.xlu0 %2128
      %v2130 = vsel %vm2108, %v2095, 0.0
      %2131 = vadd.xlane.f32.xlu0 %v2130
      %v2132 = vpop.xlane.xlu0 %2131
      %v2133 = vsel %vm2108, %v2096, 0.0
      %2134 = vadd.xlane.f32.xlu0 %v2133
      %v2135 = vpop.xlane.xlu0 %2134
      %v2136 = vsel %vm2108, %v2097, 0.0
      %2137 = vadd.xlane.f32.xlu0 %v2136
      %v2138 = vpop.xlane.xlu0 %2137
      %v2139 = vsel %vm2108, %v2098, 0.0
      %2140 = vadd.xlane.f32.xlu0 %v2139
      %v2141 = vpop.xlane.xlu0 %2140
      %v2142 = vsel %vm2108, %v2099, 0.0
      %2143 = vadd.xlane.f32.xlu0 %v2142
      %v2144 = vpop.xlane.xlu0 %2143
      %v2145 = vsel %vm2108, %v2100, 0.0
      %2146 = vadd.xlane.f32.xlu0 %v2145
      %v2147 = vpop.xlane.xlu0 %2146
      %v2148 = vsel %vm2108, %v2101, 0.0
      %2149 = vadd.xlane.f32.xlu0 %v2148
      %v2150 = vpop.xlane.xlu0 %2149
      %v2151 = vsel %vm2108, %v2102, 0.0
      %2152 = vadd.xlane.f32.xlu0 %v2151
      %v2153 = vpop.xlane.xlu0 %2152
      %v2154 = vsel %vm2108, %v2103, 0.0
      %2155 = vadd.xlane.f32.xlu0 %v2154
      %v2156 = vpop.xlane.xlu0 %2155
      %v2157 = vsel %vm2108, %v2104, 0.0
      %2158 = vadd.xlane.f32.xlu0 %v2157
      %v2159 = vpop.xlane.xlu0 %2158
      %v2160 = vsel %vm2108, %v2105, 0.0
      %2161 = vadd.xlane.f32.xlu0 %v2160
      %v2162 = vpop.xlane.xlu0 %2161
      %v2163 = vsel %vm2108, %v2106, 0.0
      %2164 = vadd.xlane.f32.xlu0 %v2163
      %v2165 = vpop.xlane.xlu0 %2164
      %v2166 = vsel %vm2108, %v2107, 0.0
      %2167 = vadd.xlane.f32.xlu0 %v2166
      %v2168 = vpop.xlane.xlu0 %2167
      %v2169 = vrcp.pop 8.0
      %v2170 = vmul.f32 8.0, %v2169
      %v2171 = vsub.f32 1.0, %v2170
      %v2172 = vmul.f32 %v2169, %v2171
      %v2173 = vadd.f32 %v2169, %v2172
      %vm2174 = vweird.f32 %v2169
      %v2175 = vsel %vm2174, %v2169, %v2173
      %v2176 = vmul.f32 %v2111, %v2175
      %v2177 = vmul.f32 %v2114, %v2175
      %v2178 = vmul.f32 %v2117, %v2175
      %v2179 = vmul.f32 %v2120, %v2175
      %v2180 = vmul.f32 %v2123, %v2175
      %v2181 = vmul.f32 %v2126, %v2175
      %v2182 = vmul.f32 %v2129, %v2175
      %v2183 = vmul.f32 %v2132, %v2175
      %v2184 = vmul.f32 %v2135, %v2175
      %v2185 = vmul.f32 %v2138, %v2175
      %v2186 = vmul.f32 %v2141, %v2175
      %v2187 = vmul.f32 %v2144, %v2175
      %v2188 = vmul.f32 %v2147, %v2175
      %v2189 = vmul.f32 %v2150, %v2175
      %v2190 = vmul.f32 %v2153, %v2175
      %v2191 = vmul.f32 %v2156, %v2175
      %v2192 = vmul.f32 %v2159, %v2175
      %v2193 = vmul.f32 %v2162, %v2175
      %v2194 = vmul.f32 %v2165, %v2175
      %v2195 = vmul.f32 %v2168, %v2175
      %v2196 = vadd.f32 %v2176, 1e-08
      %v2197 = vadd.f32 %v2177, 1e-08
      %v2198 = vadd.f32 %v2178, 1e-08
      %v2199 = vadd.f32 %v2179, 1e-08
      %v2200 = vadd.f32 %v2180, 1e-08
      %v2201 = vadd.f32 %v2181, 1e-08
      %v2202 = vadd.f32 %v2182, 1e-08
      %v2203 = vadd.f32 %v2183, 1e-08
      %v2204 = vadd.f32 %v2184, 1e-08
      %v2205 = vadd.f32 %v2185, 1e-08
      %v2206 = vadd.f32 %v2186, 1e-08
      %v2207 = vadd.f32 %v2187, 1e-08
      %v2208 = vadd.f32 %v2188, 1e-08
      %v2209 = vadd.f32 %v2189, 1e-08
      %v2210 = vadd.f32 %v2190, 1e-08
      %v2211 = vadd.f32 %v2191, 1e-08
      %v2212 = vadd.f32 %v2192, 1e-08
      %v2213 = vadd.f32 %v2193, 1e-08
      %v2214 = vadd.f32 %v2194, 1e-08
      %v2215 = vadd.f32 %v2195, 1e-08
      %v2216 = vrsqrt.pop %v2196
      %v2217 = vmul.f32 %v2216, %v2196
      %v2218 = vmul.f32 %v2217, %v2216
      %v2219 = vmul.f32 0.5, %v2218
      %v2220 = vsub.f32 1.5, %v2219
      %v2221 = vmul.f32 %v2216, %v2220
      %vm2222 = vweird.f32 %v2196
      %vm2223 = vweird.f32 %v2216
      %vm2224 = vmor %vm2222, %vm2223
      %v2225 = vsel %vm2224, %v2216, %v2221
      %v2226 = vrsqrt.pop %v2197
      %v2227 = vmul.f32 %v2226, %v2197
      %v2228 = vmul.f32 %v2227, %v2226
      %v2229 = vmul.f32 0.5, %v2228
      %v2230 = vsub.f32 1.5, %v2229
      %v2231 = vmul.f32 %v2226, %v2230
      %vm2232 = vweird.f32 %v2197
      %vm2233 = vweird.f32 %v2226
      %vm2234 = vmor %vm2232, %vm2233
      %v2235 = vsel %vm2234, %v2226, %v2231
      %v2236 = vrsqrt.pop %v2198
      %v2237 = vmul.f32 %v2236, %v2198
      %v2238 = vmul.f32 %v2237, %v2236
      %v2239 = vmul.f32 0.5, %v2238
      %v2240 = vsub.f32 1.5, %v2239
      %v2241 = vmul.f32 %v2236, %v2240
      %vm2242 = vweird.f32 %v2198
      %vm2243 = vweird.f32 %v2236
      %vm2244 = vmor %vm2242, %vm2243
      %v2245 = vsel %vm2244, %v2236, %v2241
      %v2246 = vrsqrt.pop %v2199
      %v2247 = vmul.f32 %v2246, %v2199
      %v2248 = vmul.f32 %v2247, %v2246
      %v2249 = vmul.f32 0.5, %v2248
      %v2250 = vsub.f32 1.5, %v2249
      %v2251 = vmul.f32 %v2246, %v2250
      %vm2252 = vweird.f32 %v2199
      %vm2253 = vweird.f32 %v2246
      %vm2254 = vmor %vm2252, %vm2253
      %v2255 = vsel %vm2254, %v2246, %v2251
      %v2256 = vrsqrt.pop %v2200
      %v2257 = vmul.f32 %v2256, %v2200
      %v2258 = vmul.f32 %v2257, %v2256
      %v2259 = vmul.f32 0.5, %v2258
      %v2260 = vsub.f32 1.5, %v2259
      %v2261 = vmul.f32 %v2256, %v2260
      %vm2262 = vweird.f32 %v2200
      %vm2263 = vweird.f32 %v2256
      %vm2264 = vmor %vm2262, %vm2263
      %v2265 = vsel %vm2264, %v2256, %v2261
      %v2266 = vrsqrt.pop %v2201
      %v2267 = vmul.f32 %v2266, %v2201
      %v2268 = vmul.f32 %v2267, %v2266
      %v2269 = vmul.f32 0.5, %v2268
      %v2270 = vsub.f32 1.5, %v2269
      %v2271 = vmul.f32 %v2266, %v2270
      %vm2272 = vweird.f32 %v2201
      %vm2273 = vweird.f32 %v2266
      %vm2274 = vmor %vm2272, %vm2273
      %v2275 = vsel %vm2274, %v2266, %v2271
      %v2276 = vrsqrt.pop %v2202
      %v2277 = vmul.f32 %v2276, %v2202
      %v2278 = vmul.f32 %v2277, %v2276
      %v2279 = vmul.f32 0.5, %v2278
      %v2280 = vsub.f32 1.5, %v2279
      %v2281 = vmul.f32 %v2276, %v2280
      %vm2282 = vweird.f32 %v2202
      %vm2283 = vweird.f32 %v2276
      %vm2284 = vmor %vm2282, %vm2283
      %v2285 = vsel %vm2284, %v2276, %v2281
      %v2286 = vrsqrt.pop %v2203
      %v2287 = vmul.f32 %v2286, %v2203
      %v2288 = vmul.f32 %v2287, %v2286
      %v2289 = vmul.f32 0.5, %v2288
      %v2290 = vsub.f32 1.5, %v2289
      %v2291 = vmul.f32 %v2286, %v2290
      %vm2292 = vweird.f32 %v2203
      %vm2293 = vweird.f32 %v2286
      %vm2294 = vmor %vm2292, %vm2293
      %v2295 = vsel %vm2294, %v2286, %v2291
      %v2296 = vrsqrt.pop %v2204
      %v2297 = vmul.f32 %v2296, %v2204
      %v2298 = vmul.f32 %v2297, %v2296
      %v2299 = vmul.f32 0.5, %v2298
      %v2300 = vsub.f32 1.5, %v2299
      %v2301 = vmul.f32 %v2296, %v2300
      %vm2302 = vweird.f32 %v2204
      %vm2303 = vweird.f32 %v2296
      %vm2304 = vmor %vm2302, %vm2303
      %v2305 = vsel %vm2304, %v2296, %v2301
      %v2306 = vrsqrt.pop %v2205
      %v2307 = vmul.f32 %v2306, %v2205
      %v2308 = vmul.f32 %v2307, %v2306
      %v2309 = vmul.f32 0.5, %v2308
      %v2310 = vsub.f32 1.5, %v2309
      %v2311 = vmul.f32 %v2306, %v2310
      %vm2312 = vweird.f32 %v2205
      %vm2313 = vweird.f32 %v2306
      %vm2314 = vmor %vm2312, %vm2313
      %v2315 = vsel %vm2314, %v2306, %v2311
      %v2316 = vrsqrt.pop %v2206
      %v2317 = vmul.f32 %v2316, %v2206
      %v2318 = vmul.f32 %v2317, %v2316
      %v2319 = vmul.f32 0.5, %v2318
      %v2320 = vsub.f32 1.5, %v2319
      %v2321 = vmul.f32 %v2316, %v2320
      %vm2322 = vweird.f32 %v2206
      %vm2323 = vweird.f32 %v2316
      %vm2324 = vmor %vm2322, %vm2323
      %v2325 = vsel %vm2324, %v2316, %v2321
      %v2326 = vrsqrt.pop %v2207
      %v2327 = vmul.f32 %v2326, %v2207
      %v2328 = vmul.f32 %v2327, %v2326
      %v2329 = vmul.f32 0.5, %v2328
      %v2330 = vsub.f32 1.5, %v2329
      %v2331 = vmul.f32 %v2326, %v2330
      %vm2332 = vweird.f32 %v2207
      %vm2333 = vweird.f32 %v2326
      %vm2334 = vmor %vm2332, %vm2333
      %v2335 = vsel %vm2334, %v2326, %v2331
      %v2336 = vrsqrt.pop %v2208
      %v2337 = vmul.f32 %v2336, %v2208
      %v2338 = vmul.f32 %v2337, %v2336
      %v2339 = vmul.f32 0.5, %v2338
      %v2340 = vsub.f32 1.5, %v2339
      %v2341 = vmul.f32 %v2336, %v2340
      %vm2342 = vweird.f32 %v2208
      %vm2343 = vweird.f32 %v2336
      %vm2344 = vmor %vm2342, %vm2343
      %v2345 = vsel %vm2344, %v2336, %v2341
      %v2346 = vrsqrt.pop %v2209
      %v2347 = vmul.f32 %v2346, %v2209
      %v2348 = vmul.f32 %v2347, %v2346
      %v2349 = vmul.f32 0.5, %v2348
      %v2350 = vsub.f32 1.5, %v2349
      %v2351 = vmul.f32 %v2346, %v2350
      %vm2352 = vweird.f32 %v2209
      %vm2353 = vweird.f32 %v2346
      %vm2354 = vmor %vm2352, %vm2353
      %v2355 = vsel %vm2354, %v2346, %v2351
      %v2356 = vrsqrt.pop %v2210
      %v2357 = vmul.f32 %v2356, %v2210
      %v2358 = vmul.f32 %v2357, %v2356
      %v2359 = vmul.f32 0.5, %v2358
      %v2360 = vsub.f32 1.5, %v2359
      %v2361 = vmul.f32 %v2356, %v2360
      %vm2362 = vweird.f32 %v2210
      %vm2363 = vweird.f32 %v2356
      %vm2364 = vmor %vm2362, %vm2363
      %v2365 = vsel %vm2364, %v2356, %v2361
      %v2366 = vrsqrt.pop %v2211
      %v2367 = vmul.f32 %v2366, %v2211
      %v2368 = vmul.f32 %v2367, %v2366
      %v2369 = vmul.f32 0.5, %v2368
      %v2370 = vsub.f32 1.5, %v2369
      %v2371 = vmul.f32 %v2366, %v2370
      %vm2372 = vweird.f32 %v2211
      %vm2373 = vweird.f32 %v2366
      %vm2374 = vmor %vm2372, %vm2373
      %v2375 = vsel %vm2374, %v2366, %v2371
      %v2376 = vrsqrt.pop %v2212
      %v2377 = vmul.f32 %v2376, %v2212
      %v2378 = vmul.f32 %v2377, %v2376
      %v2379 = vmul.f32 0.5, %v2378
      %v2380 = vsub.f32 1.5, %v2379
      %v2381 = vmul.f32 %v2376, %v2380
      %vm2382 = vweird.f32 %v2212
      %vm2383 = vweird.f32 %v2376
      %vm2384 = vmor %vm2382, %vm2383
      %v2385 = vsel %vm2384, %v2376, %v2381
      %v2386 = vrsqrt.pop %v2213
      %v2387 = vmul.f32 %v2386, %v2213
      %v2388 = vmul.f32 %v2387, %v2386
      %v2389 = vmul.f32 0.5, %v2388
      %v2390 = vsub.f32 1.5, %v2389
      %v2391 = vmul.f32 %v2386, %v2390
      %vm2392 = vweird.f32 %v2213
      %vm2393 = vweird.f32 %v2386
      %vm2394 = vmor %vm2392, %vm2393
      %v2395 = vsel %vm2394, %v2386, %v2391
      %v2396 = vrsqrt.pop %v2214
      %v2397 = vmul.f32 %v2396, %v2214
      %v2398 = vmul.f32 %v2397, %v2396
      %v2399 = vmul.f32 0.5, %v2398
      %v2400 = vsub.f32 1.5, %v2399
      %v2401 = vmul.f32 %v2396, %v2400
      %vm2402 = vweird.f32 %v2214
      %vm2403 = vweird.f32 %v2396
      %vm2404 = vmor %vm2402, %vm2403
      %v2405 = vsel %vm2404, %v2396, %v2401
      %v2406 = vrsqrt.pop %v2215
      %v2407 = vmul.f32 %v2406, %v2215
      %v2408 = vmul.f32 %v2407, %v2406
      %v2409 = vmul.f32 0.5, %v2408
      %v2410 = vsub.f32 1.5, %v2409
      %v2411 = vmul.f32 %v2406, %v2410
      %vm2412 = vweird.f32 %v2215
      %vm2413 = vweird.f32 %v2406
      %vm2414 = vmor %vm2412, %vm2413
      %v2415 = vsel %vm2414, %v2406, %v2411
      %v2416 = vmul.f32 %v2068, %v2225
      %v2417 = vmul.f32 %v2069, %v2235
      %v2418 = vmul.f32 %v2070, %v2245
      %v2419 = vmul.f32 %v2071, %v2255
      %v2420 = vmul.f32 %v2072, %v2265
      %v2421 = vmul.f32 %v2073, %v2275
      %v2422 = vmul.f32 %v2074, %v2285
      %v2423 = vmul.f32 %v2075, %v2295
      %v2424 = vmul.f32 %v2076, %v2305
      %v2425 = vmul.f32 %v2077, %v2315
      %v2426 = vmul.f32 %v2078, %v2325
      %v2427 = vmul.f32 %v2079, %v2335
      %v2428 = vmul.f32 %v2080, %v2345
      %v2429 = vmul.f32 %v2081, %v2355
      %v2430 = vmul.f32 %v2082, %v2365
      %v2431 = vmul.f32 %v2083, %v2375
      %v2432 = vmul.f32 %v2084, %v2385
      %v2433 = vmul.f32 %v2085, %v2395
      %v2434 = vmul.f32 %v2086, %v2405
      %v2435 = vmul.f32 %v2087, %v2415
      %s2436 = ssub.s32 %s250, 1
      %v2437 = vstv %s2436
      %v2438 = vadd.s32 %v2437, 1
      %v2439 = vadd.s32 %v2437, 2
      %v2440 = vadd.s32 %v2437, 3
      %v2441 = vadd.s32 %v2437, 4
      %v2442 = vadd.s32 %v2437, 5
      %v2443 = vadd.s32 %v2437, 6
      %v2444 = vadd.s32 %v2437, 7
      %v2445 = vadd.s32 %v2437, 8
      %v2446 = vadd.s32 %v2437, 9
      %vm2447 = vcmp.ge.s32.totalorder %v2437, 0
      %vm2448 = vcmp.ge.s32.totalorder %v2438, 0
      %vm2449 = vcmp.ge.s32.totalorder %v2439, 0
      %vm2450 = vcmp.ge.s32.totalorder %v2440, 0
      %vm2451 = vcmp.ge.s32.totalorder %v2441, 0
      %vm2452 = vcmp.ge.s32.totalorder %v2442, 0
      %vm2453 = vcmp.ge.s32.totalorder %v2443, 0
      %vm2454 = vcmp.ge.s32.totalorder %v2444, 0
      %vm2455 = vcmp.ge.s32.totalorder %v2445, 0
      %vm2456 = vcmp.ge.s32.totalorder %v2446, 0
      %vm2457 = vcmp.lt.s32.totalorder %v2437, 16
      %vm2458 = vcmp.lt.s32.totalorder %v2438, 16
      %vm2459 = vcmp.lt.s32.totalorder %v2439, 16
      %vm2460 = vcmp.lt.s32.totalorder %v2440, 16
      %vm2461 = vcmp.lt.s32.totalorder %v2441, 16
      %vm2462 = vcmp.lt.s32.totalorder %v2442, 16
      %vm2463 = vcmp.lt.s32.totalorder %v2443, 16
      %vm2464 = vcmp.lt.s32.totalorder %v2444, 16
      %vm2465 = vcmp.lt.s32.totalorder %v2445, 16
      %vm2466 = vcmp.lt.s32.totalorder %v2446, 16
      %vm2467 = vmand %vm2447, %vm2457
      %vm2468 = vmand %vm2448, %vm2458
      %vm2469 = vmand %vm2449, %vm2459
      %vm2470 = vmand %vm2450, %vm2460
      %vm2471 = vmand %vm2451, %vm2461
      %vm2472 = vmand %vm2452, %vm2462
      %vm2473 = vmand %vm2453, %vm2463
      %vm2474 = vmand %vm2454, %vm2464
      %vm2475 = vmand %vm2455, %vm2465
      %vm2476 = vmand %vm2456, %vm2466
      %v2477 = vsel %vm2467, 1, 0
      %v2478 = vsel %vm2468, 1, 0
      %v2479 = vsel %vm2469, 1, 0
      %v2480 = vsel %vm2470, 1, 0
      %v2481 = vsel %vm2471, 1, 0
      %v2482 = vsel %vm2472, 1, 0
      %v2483 = vsel %vm2473, 1, 0
      %v2484 = vsel %vm2474, 1, 0
      %v2485 = vsel %vm2475, 1, 0
      %v2486 = vsel %vm2476, 1, 0
      %vm2487 = vcmp.eq.s32.totalorder %v2477, 1
      %vm2488 = vcmp.eq.s32.totalorder %v2478, 1
      %vm2489 = vcmp.eq.s32.totalorder %v2479, 1
      %vm2490 = vcmp.eq.s32.totalorder %v2480, 1
      %vm2491 = vcmp.eq.s32.totalorder %v2481, 1
      %vm2492 = vcmp.eq.s32.totalorder %v2482, 1
      %vm2493 = vcmp.eq.s32.totalorder %v2483, 1
      %vm2494 = vcmp.eq.s32.totalorder %v2484, 1
      %vm2495 = vcmp.eq.s32.totalorder %v2485, 1
      %vm2496 = vcmp.eq.s32.totalorder %v2486, 1
      %v2497 = vsel %vm2487, %v2416, 0.0
      %v2498 = vsel %vm2487, %v2417, 0.0
      %v2499 = vsel %vm2488, %v2418, 0.0
      %v2500 = vsel %vm2488, %v2419, 0.0
      %v2501 = vsel %vm2489, %v2420, 0.0
      %v2502 = vsel %vm2489, %v2421, 0.0
      %v2503 = vsel %vm2490, %v2422, 0.0
      %v2504 = vsel %vm2490, %v2423, 0.0
      %v2505 = vsel %vm2491, %v2424, 0.0
      %v2506 = vsel %vm2491, %v2425, 0.0
      %v2507 = vsel %vm2492, %v2426, 0.0
      %v2508 = vsel %vm2492, %v2427, 0.0
      %v2509 = vsel %vm2493, %v2428, 0.0
      %v2510 = vsel %vm2493, %v2429, 0.0
      %v2511 = vsel %vm2494, %v2430, 0.0
      %v2512 = vsel %vm2494, %v2431, 0.0
      %v2513 = vsel %vm2495, %v2432, 0.0
      %v2514 = vsel %vm2495, %v2433, 0.0
      %v2515 = vsel %vm2496, %v2434, 0.0
      %v2516 = vsel %vm2496, %v2435, 0.0
      %2517 = vst.msk [vmem:[#allocation3 + $0x1] sm:$0xff] %vm2108, %v2497
      %2518 = vst.msk [vmem:[#allocation3 + $0x9] sm:$0xff] %vm2108, %v2498
      %2519 = vst.msk [vmem:[#allocation3 + $0x19] sm:$0xff] %vm2108, %v2499
      %2520 = vst.msk [vmem:[#allocation3 + $0x21] sm:$0xff] %vm2108, %v2500
      %2521 = vst.msk [vmem:[#allocation3 + $0x31] sm:$0xff] %vm2108, %v2501
      %2522 = vst.msk [vmem:[#allocation3 + $0x39] sm:$0xff] %vm2108, %v2502
      %2523 = vst.msk [vmem:[#allocation3 + $0x49] sm:$0xff] %vm2108, %v2503
      %2524 = vst.msk [vmem:[#allocation3 + $0x51] sm:$0xff] %vm2108, %v2504
      %2525 = vst.msk [vmem:[#allocation3 + $0x61] sm:$0xff] %vm2108, %v2505
      %2526 = vst.msk [vmem:[#allocation3 + $0x69] sm:$0xff] %vm2108, %v2506
      %2527 = vst.msk [vmem:[#allocation3 + $0x79] sm:$0xff] %vm2108, %v2507
      %2528 = vst.msk [vmem:[#allocation3 + $0x81] sm:$0xff] %vm2108, %v2508
      %2529 = vst.msk [vmem:[#allocation3 + $0x91] sm:$0xff] %vm2108, %v2509
      %2530 = vst.msk [vmem:[#allocation3 + $0x99] sm:$0xff] %vm2108, %v2510
      %2531 = vst.msk [vmem:[#allocation3 + $0xa9] sm:$0xff] %vm2108, %v2511
      %2532 = vst.msk [vmem:[#allocation3 + $0xb1] sm:$0xff] %vm2108, %v2512
      %2533 = vst.msk [vmem:[#allocation3 + $0xc1] sm:$0xff] %vm2108, %v2513
      %2534 = vst.msk [vmem:[#allocation3 + $0xc9] sm:$0xff] %vm2108, %v2514
      %2535 = vst.msk [vmem:[#allocation3 + $0xd9] sm:$0xff] %vm2108, %v2515
      %2536 = vst.msk [vmem:[#allocation3 + $0xe1] sm:$0xff] %vm2108, %v2516
      %v2537 = vld [vmem:[#allocation3] sm:$0xff]
      %v2538 = vld [vmem:[#allocation3 + $0x8] sm:$0xff]
      %v2539 = vld [vmem:[#allocation3 + $0x18] sm:$0xff]
      %v2540 = vld [vmem:[#allocation3 + $0x20] sm:$0xff]
      %v2541 = vld [vmem:[#allocation3 + $0x30] sm:$0xff]
      %v2542 = vld [vmem:[#allocation3 + $0x38] sm:$0xff]
      %v2543 = vld [vmem:[#allocation3 + $0x48] sm:$0xff]
      %v2544 = vld [vmem:[#allocation3 + $0x50] sm:$0xff]
      %v2545 = vld [vmem:[#allocation3 + $0x60] sm:$0xff]
      %v2546 = vld [vmem:[#allocation3 + $0x68] sm:$0xff]
      %v2547 = vld [vmem:[#allocation3 + $0x78] sm:$0xff]
      %v2548 = vld [vmem:[#allocation3 + $0x80] sm:$0xff]
      %v2549 = vld [vmem:[#allocation3 + $0x90] sm:$0xff]
      %v2550 = vld [vmem:[#allocation3 + $0x98] sm:$0xff]
      %v2551 = vld [vmem:[#allocation3 + $0xa8] sm:$0xff]
      %v2552 = vld [vmem:[#allocation3 + $0xb0] sm:$0xff]
      %v2553 = vld [vmem:[%s3] sm:$0xff]
      %v2554 = vld [vmem:[#allocation3 + $0x1] sm:$0xff]
      %v2555 = vld [vmem:[#allocation3 + $0x9] sm:$0xff]
      %v2556 = vld [vmem:[#allocation3 + $0x19] sm:$0xff]
      %v2557 = vld [vmem:[#allocation3 + $0x21] sm:$0xff]
      %v2558 = vld [vmem:[#allocation3 + $0x31] sm:$0xff]
      %v2559 = vld [vmem:[#allocation3 + $0x39] sm:$0xff]
      %v2560 = vld [vmem:[#allocation3 + $0x49] sm:$0xff]
      %v2561 = vld [vmem:[#allocation3 + $0x51] sm:$0xff]
      %v2562 = vld [vmem:[#allocation3 + $0x61] sm:$0xff]
      %v2563 = vld [vmem:[#allocation3 + $0x69] sm:$0xff]
      %v2564 = vld [vmem:[#allocation3 + $0x79] sm:$0xff]
      %v2565 = vld [vmem:[#allocation3 + $0x81] sm:$0xff]
      %v2566 = vld [vmem:[#allocation3 + $0x91] sm:$0xff]
      %v2567 = vld [vmem:[#allocation3 + $0x99] sm:$0xff]
      %v2568 = vld [vmem:[#allocation3 + $0xa9] sm:$0xff]
      %v2569 = vld [vmem:[#allocation3 + $0xb1] sm:$0xff]
      %s2570 = scalar_lea.vmem %s3, 8
      %v2571 = vld [vmem:[%s2570] sm:$0xff]
      %v2573 = vsel %vm2108, %v2554, 0
      %v2576 = vsel %vm2108, %v2555, 0
      %v2579 = vsel %vm2108, %v2556, 0
      %v2582 = vsel %vm2108, %v2557, 0
      %v2585 = vsel %vm2108, %v2558, 0
      %v2588 = vsel %vm2108, %v2559, 0
      %v2591 = vsel %vm2108, %v2560, 0
      %v2594 = vsel %vm2108, %v2561, 0
      %v2597 = vsel %vm2108, %v2562, 0
      %v2600 = vsel %vm2108, %v2563, 0
      %v2603 = vsel %vm2108, %v2564, 0
      %v2606 = vsel %vm2108, %v2565, 0
      %v2609 = vsel %vm2108, %v2566, 0
      %v2612 = vsel %vm2108, %v2567, 0
      %v2615 = vsel %vm2108, %v2568, 0
      %v2618 = vsel %vm2108, %v2569, 0
      %2620 = vmatpush.msra.mxu0 0.0
      %2621 = vmatpush.msra.mxu0 0.0
      %2622 = vmatpush.msra.mxu0 0.0
      %2623 = vmatpush.msra.mxu0 0.0
      %2624 = vmatpush.msra.mxu0 0.0
      %2625 = vmatpush.msra.mxu0 0.0
      %2626 = vmatpush.msra.mxu0 0.0
      %2627 = vmatpush.msra.mxu0 0.0
      %2628 = vmatpush.msra.mxu0 0.0
      %2629 = vmatpush.msra.mxu0 0.0
      %2630 = vmatpush.msra.mxu0 0.0
      %2631 = vmatpush.msra.mxu0 0.0
      %2632 = vmatpush.msra.mxu0 0.0
      %2633 = vmatpush.msra.mxu0 0.0
      %2634 = vmatpush.msra.mxu0 0.0
      %2635 = vmatpush.msra.mxu0 %v2571
      %2636 = vmatmul.f32.gmra.mxu0 %v2573
      %v2637 = vpop.f32.mrf.mxu0
      %v2638 = vadd.f32 0.0, %v2637
      %2639 = vmatmul.f32.gmra.mxu0 %v2576
      %v2640 = vpop.f32.mrf.mxu0
      %v2641 = vadd.f32 0.0, %v2640
      %2642 = vmatmul.f32.gmra.mxu0 %v2579
      %v2643 = vpop.f32.mrf.mxu0
      %v2644 = vadd.f32 0.0, %v2643
      %2645 = vmatmul.f32.gmra.mxu0 %v2582
      %v2646 = vpop.f32.mrf.mxu0
      %v2647 = vadd.f32 0.0, %v2646
      %2648 = vmatmul.f32.gmra.mxu0 %v2585
      %v2649 = vpop.f32.mrf.mxu0
      %v2650 = vadd.f32 0.0, %v2649
      %2651 = vmatmul.f32.gmra.mxu0 %v2588
      %v2652 = vpop.f32.mrf.mxu0
      %v2653 = vadd.f32 0.0, %v2652
      %2654 = vmatmul.f32.gmra.mxu0 %v2591
      %v2655 = vpop.f32.mrf.mxu0
      %v2656 = vadd.f32 0.0, %v2655
      %2657 = vmatmul.f32.gmra.mxu0 %v2594
      %v2658 = vpop.f32.mrf.mxu0
      %v2659 = vadd.f32 0.0, %v2658
      %2660 = vmatmul.f32.gmra.mxu0 %v2597
      %v2661 = vpop.f32.mrf.mxu0
      %v2662 = vadd.f32 0.0, %v2661
      %2663 = vmatmul.f32.gmra.mxu0 %v2600
      %v2664 = vpop.f32.mrf.mxu0
      %v2665 = vadd.f32 0.0, %v2664
      %2666 = vmatmul.f32.gmra.mxu0 %v2603
      %v2667 = vpop.f32.mrf.mxu0
      %v2668 = vadd.f32 0.0, %v2667
      %2669 = vmatmul.f32.gmra.mxu0 %v2606
      %v2670 = vpop.f32.mrf.mxu0
      %v2671 = vadd.f32 0.0, %v2670
      %2672 = vmatmul.f32.gmra.mxu0 %v2609
      %v2673 = vpop.f32.mrf.mxu0
      %v2674 = vadd.f32 0.0, %v2673
      %2675 = vmatmul.f32.gmra.mxu0 %v2612
      %v2676 = vpop.f32.mrf.mxu0
      %v2677 = vadd.f32 0.0, %v2676
      %2678 = vmatmul.f32.gmra.mxu0 %v2615
      %v2679 = vpop.f32.mrf.mxu0
      %v2680 = vadd.f32 0.0, %v2679
      %2681 = vmatmul.f32.gmra.mxu0 %v2618
      %v2682 = vpop.f32.mrf.mxu0
      %v2683 = vadd.f32 0.0, %v2682
      %2684 = vdwg.mxu0
      %v2686 = vsel %vm2108, %v2537, 0
      %v2689 = vsel %vm2108, %v2538, 0
      %v2692 = vsel %vm2108, %v2539, 0
      %v2695 = vsel %vm2108, %v2540, 0
      %v2698 = vsel %vm2108, %v2541, 0
      %v2701 = vsel %vm2108, %v2542, 0
      %v2704 = vsel %vm2108, %v2543, 0
      %v2707 = vsel %vm2108, %v2544, 0
      %v2710 = vsel %vm2108, %v2545, 0
      %v2713 = vsel %vm2108, %v2546, 0
      %v2716 = vsel %vm2108, %v2547, 0
      %v2719 = vsel %vm2108, %v2548, 0
      %v2722 = vsel %vm2108, %v2549, 0
      %v2725 = vsel %vm2108, %v2550, 0
      %v2728 = vsel %vm2108, %v2551, 0
      %v2731 = vsel %vm2108, %v2552, 0
      %2733 = vmatpush.msra.mxu0 0.0
      %2734 = vmatpush.msra.mxu0 0.0
      %2735 = vmatpush.msra.mxu0 0.0
      %2736 = vmatpush.msra.mxu0 0.0
      %2737 = vmatpush.msra.mxu0 0.0
      %2738 = vmatpush.msra.mxu0 0.0
      %2739 = vmatpush.msra.mxu0 0.0
      %2740 = vmatpush.msra.mxu0 0.0
      %2741 = vmatpush.msra.mxu0 0.0
      %2742 = vmatpush.msra.mxu0 0.0
      %2743 = vmatpush.msra.mxu0 0.0
      %2744 = vmatpush.msra.mxu0 0.0
      %2745 = vmatpush.msra.mxu0 0.0
      %2746 = vmatpush.msra.mxu0 0.0
      %2747 = vmatpush.msra.mxu0 0.0
      %2748 = vmatpush.msra.mxu0 %v2553
      %2749 = vmatmul.f32.gmra.mxu0 %v2686
      %v2750 = vpop.f32.mrf.mxu0
      %v2751 = vadd.f32 %v2638, %v2750
      %2752 = vmatmul.f32.gmra.mxu0 %v2689
      %v2753 = vpop.f32.mrf.mxu0
      %v2754 = vadd.f32 %v2641, %v2753
      %2755 = vmatmul.f32.gmra.mxu0 %v2692
      %v2756 = vpop.f32.mrf.mxu0
      %v2757 = vadd.f32 %v2644, %v2756
      %2758 = vmatmul.f32.gmra.mxu0 %v2695
      %v2759 = vpop.f32.mrf.mxu0
      %v2760 = vadd.f32 %v2647, %v2759
      %2761 = vmatmul.f32.gmra.mxu0 %v2698
      %v2762 = vpop.f32.mrf.mxu0
      %v2763 = vadd.f32 %v2650, %v2762
      %2764 = vmatmul.f32.gmra.mxu0 %v2701
      %v2765 = vpop.f32.mrf.mxu0
      %v2766 = vadd.f32 %v2653, %v2765
      %2767 = vmatmul.f32.gmra.mxu0 %v2704
      %v2768 = vpop.f32.mrf.mxu0
      %v2769 = vadd.f32 %v2656, %v2768
      %2770 = vmatmul.f32.gmra.mxu0 %v2707
      %v2771 = vpop.f32.mrf.mxu0
      %v2772 = vadd.f32 %v2659, %v2771
      %2773 = vmatmul.f32.gmra.mxu0 %v2710
      %v2774 = vpop.f32.mrf.mxu0
      %v2775 = vadd.f32 %v2662, %v2774
      %2776 = vmatmul.f32.gmra.mxu0 %v2713
      %v2777 = vpop.f32.mrf.mxu0
      %v2778 = vadd.f32 %v2665, %v2777
      %2779 = vmatmul.f32.gmra.mxu0 %v2716
      %v2780 = vpop.f32.mrf.mxu0
      %v2781 = vadd.f32 %v2668, %v2780
      %2782 = vmatmul.f32.gmra.mxu0 %v2719
      %v2783 = vpop.f32.mrf.mxu0
      %v2784 = vadd.f32 %v2671, %v2783
      %2785 = vmatmul.f32.gmra.mxu0 %v2722
      %v2786 = vpop.f32.mrf.mxu0
      %v2787 = vadd.f32 %v2674, %v2786
      %2788 = vmatmul.f32.gmra.mxu0 %v2725
      %v2789 = vpop.f32.mrf.mxu0
      %v2790 = vadd.f32 %v2677, %v2789
      %2791 = vmatmul.f32.gmra.mxu0 %v2728
      %v2792 = vpop.f32.mrf.mxu0
      %v2793 = vadd.f32 %v2680, %v2792
      %2794 = vmatmul.f32.gmra.mxu0 %v2731
      %v2795 = vpop.f32.mrf.mxu0
      %v2796 = vadd.f32 %v2683, %v2795
      %2797 = vdwg.mxu0
      %v2798 = vld [vmem:[#allocation3 + $0x2] sm:$0xff]
      %v2799 = vld [vmem:[#allocation3 + $0xa] sm:$0xff]
      %v2800 = vld [vmem:[#allocation3 + $0x1a] sm:$0xff]
      %v2801 = vld [vmem:[#allocation3 + $0x22] sm:$0xff]
      %v2802 = vld [vmem:[#allocation3 + $0x32] sm:$0xff]
      %v2803 = vld [vmem:[#allocation3 + $0x3a] sm:$0xff]
      %v2804 = vld [vmem:[#allocation3 + $0x4a] sm:$0xff]
      %v2805 = vld [vmem:[#allocation3 + $0x52] sm:$0xff]
      %v2806 = vld [vmem:[#allocation3 + $0x62] sm:$0xff]
      %v2807 = vld [vmem:[#allocation3 + $0x6a] sm:$0xff]
      %v2808 = vld [vmem:[#allocation3 + $0x7a] sm:$0xff]
      %v2809 = vld [vmem:[#allocation3 + $0x82] sm:$0xff]
      %v2810 = vld [vmem:[#allocation3 + $0x92] sm:$0xff]
      %v2811 = vld [vmem:[#allocation3 + $0x9a] sm:$0xff]
      %v2812 = vld [vmem:[#allocation3 + $0xaa] sm:$0xff]
      %v2813 = vld [vmem:[#allocation3 + $0xb2] sm:$0xff]
      %s2814 = scalar_lea.vmem %s3, 16
      %v2815 = vld [vmem:[%s2814] sm:$0xff]
      %v2817 = vsel %vm2108, %v2798, 0
      %v2820 = vsel %vm2108, %v2799, 0
      %v2823 = vsel %vm2108, %v2800, 0
      %v2826 = vsel %vm2108, %v2801, 0
      %v2829 = vsel %vm2108, %v2802, 0
      %v2832 = vsel %vm2108, %v2803, 0
      %v2835 = vsel %vm2108, %v2804, 0
      %v2838 = vsel %vm2108, %v2805, 0
      %v2841 = vsel %vm2108, %v2806, 0
      %v2844 = vsel %vm2108, %v2807, 0
      %v2847 = vsel %vm2108, %v2808, 0
      %v2850 = vsel %vm2108, %v2809, 0
      %v2853 = vsel %vm2108, %v2810, 0
      %v2856 = vsel %vm2108, %v2811, 0
      %v2859 = vsel %vm2108, %v2812, 0
      %v2862 = vsel %vm2108, %v2813, 0
      %2864 = vmatpush.msra.mxu0 0.0
      %2865 = vmatpush.msra.mxu0 0.0
      %2866 = vmatpush.msra.mxu0 0.0
      %2867 = vmatpush.msra.mxu0 0.0
      %2868 = vmatpush.msra.mxu0 0.0
      %2869 = vmatpush.msra.mxu0 0.0
      %2870 = vmatpush.msra.mxu0 0.0
      %2871 = vmatpush.msra.mxu0 0.0
      %2872 = vmatpush.msra.mxu0 0.0
      %2873 = vmatpush.msra.mxu0 0.0
      %2874 = vmatpush.msra.mxu0 0.0
      %2875 = vmatpush.msra.mxu0 0.0
      %2876 = vmatpush.msra.mxu0 0.0
      %2877 = vmatpush.msra.mxu0 0.0
      %2878 = vmatpush.msra.mxu0 0.0
      %2879 = vmatpush.msra.mxu0 %v2815
      %2880 = vmatmul.f32.gmra.mxu0 %v2817
      %v2881 = vpop.f32.mrf.mxu0
      %v2882 = vadd.f32 0.0, %v2881
      %2883 = vmatmul.f32.gmra.mxu0 %v2820
      %v2884 = vpop.f32.mrf.mxu0
      %v2885 = vadd.f32 0.0, %v2884
      %2886 = vmatmul.f32.gmra.mxu0 %v2823
      %v2887 = vpop.f32.mrf.mxu0
      %v2888 = vadd.f32 0.0, %v2887
      %2889 = vmatmul.f32.gmra.mxu0 %v2826
      %v2890 = vpop.f32.mrf.mxu0
      %v2891 = vadd.f32 0.0, %v2890
      %2892 = vmatmul.f32.gmra.mxu0 %v2829
      %v2893 = vpop.f32.mrf.mxu0
      %v2894 = vadd.f32 0.0, %v2893
      %2895 = vmatmul.f32.gmra.mxu0 %v2832
      %v2896 = vpop.f32.mrf.mxu0
      %v2897 = vadd.f32 0.0, %v2896
      %2898 = vmatmul.f32.gmra.mxu0 %v2835
      %v2899 = vpop.f32.mrf.mxu0
      %v2900 = vadd.f32 0.0, %v2899
      %2901 = vmatmul.f32.gmra.mxu0 %v2838
      %v2902 = vpop.f32.mrf.mxu0
      %v2903 = vadd.f32 0.0, %v2902
      %2904 = vmatmul.f32.gmra.mxu0 %v2841
      %v2905 = vpop.f32.mrf.mxu0
      %v2906 = vadd.f32 0.0, %v2905
      %2907 = vmatmul.f32.gmra.mxu0 %v2844
      %v2908 = vpop.f32.mrf.mxu0
      %v2909 = vadd.f32 0.0, %v2908
      %2910 = vmatmul.f32.gmra.mxu0 %v2847
      %v2911 = vpop.f32.mrf.mxu0
      %v2912 = vadd.f32 0.0, %v2911
      %2913 = vmatmul.f32.gmra.mxu0 %v2850
      %v2914 = vpop.f32.mrf.mxu0
      %v2915 = vadd.f32 0.0, %v2914
      %2916 = vmatmul.f32.gmra.mxu0 %v2853
      %v2917 = vpop.f32.mrf.mxu0
      %v2918 = vadd.f32 0.0, %v2917
      %2919 = vmatmul.f32.gmra.mxu0 %v2856
      %v2920 = vpop.f32.mrf.mxu0
      %v2921 = vadd.f32 0.0, %v2920
      %2922 = vmatmul.f32.gmra.mxu0 %v2859
      %v2923 = vpop.f32.mrf.mxu0
      %v2924 = vadd.f32 0.0, %v2923
      %2925 = vmatmul.f32.gmra.mxu0 %v2862
      %v2926 = vpop.f32.mrf.mxu0
      %v2927 = vadd.f32 0.0, %v2926
      %2928 = vdwg.mxu0
      %v2929 = vadd.f32 %v2751, %v2882
      %v2930 = vadd.f32 %v2754, %v2885
      %v2931 = vadd.f32 %v2757, %v2888
      %v2932 = vadd.f32 %v2760, %v2891
      %v2933 = vadd.f32 %v2763, %v2894
      %v2934 = vadd.f32 %v2766, %v2897
      %v2935 = vadd.f32 %v2769, %v2900
      %v2936 = vadd.f32 %v2772, %v2903
      %v2937 = vadd.f32 %v2775, %v2906
      %v2938 = vadd.f32 %v2778, %v2909
      %v2939 = vadd.f32 %v2781, %v2912
      %v2940 = vadd.f32 %v2784, %v2915
      %v2941 = vadd.f32 %v2787, %v2918
      %v2942 = vadd.f32 %v2790, %v2921
      %v2943 = vadd.f32 %v2793, %v2924
      %v2944 = vadd.f32 %v2796, %v2927
      %s2945 = scalar_lea.vmem [#allocation3], 24
      %v2946 = vld [vmem:[%s2945] sm:$0xff]
      %v2947 = vld [vmem:[%s2945 + $0x8] sm:$0xff]
      %v2948 = vld [vmem:[%s2945 + $0x18] sm:$0xff]
      %v2949 = vld [vmem:[%s2945 + $0x20] sm:$0xff]
      %v2950 = vld [vmem:[%s2945 + $0x30] sm:$0xff]
      %v2951 = vld [vmem:[%s2945 + $0x38] sm:$0xff]
      %v2952 = vld [vmem:[%s2945 + $0x48] sm:$0xff]
      %v2953 = vld [vmem:[%s2945 + $0x50] sm:$0xff]
      %v2954 = vld [vmem:[%s2945 + $0x60] sm:$0xff]
      %v2955 = vld [vmem:[%s2945 + $0x68] sm:$0xff]
      %v2956 = vld [vmem:[%s2945 + $0x78] sm:$0xff]
      %v2957 = vld [vmem:[%s2945 + $0x80] sm:$0xff]
      %v2958 = vld [vmem:[%s2945 + $0x90] sm:$0xff]
      %v2959 = vld [vmem:[%s2945 + $0x98] sm:$0xff]
      %v2960 = vld [vmem:[%s2945 + $0xa8] sm:$0xff]
      %v2961 = vld [vmem:[%s2945 + $0xb0] sm:$0xff]
      %s2962 = scalar_lea.vmem %s3, 24
      %v2963 = vld [vmem:[%s2962] sm:$0xff]
      %v2965 = vsel %vm2108, %v2946, 0
      %v2968 = vsel %vm2108, %v2947, 0
      %v2971 = vsel %vm2108, %v2948, 0
      %v2974 = vsel %vm2108, %v2949, 0
      %v2977 = vsel %vm2108, %v2950, 0
      %v2980 = vsel %vm2108, %v2951, 0
      %v2983 = vsel %vm2108, %v2952, 0
      %v2986 = vsel %vm2108, %v2953, 0
      %v2989 = vsel %vm2108, %v2954, 0
      %v2992 = vsel %vm2108, %v2955, 0
      %v2995 = vsel %vm2108, %v2956, 0
      %v2998 = vsel %vm2108, %v2957, 0
      %v3001 = vsel %vm2108, %v2958, 0
      %v3004 = vsel %vm2108, %v2959, 0
      %v3007 = vsel %vm2108, %v2960, 0
      %v3010 = vsel %vm2108, %v2961, 0
      %3012 = vmatpush.msra.mxu0 0.0
      %3013 = vmatpush.msra.mxu0 0.0
      %3014 = vmatpush.msra.mxu0 0.0
      %3015 = vmatpush.msra.mxu0 0.0
      %3016 = vmatpush.msra.mxu0 0.0
      %3017 = vmatpush.msra.mxu0 0.0
      %3018 = vmatpush.msra.mxu0 0.0
      %3019 = vmatpush.msra.mxu0 0.0
      %3020 = vmatpush.msra.mxu0 0.0
      %3021 = vmatpush.msra.mxu0 0.0
      %3022 = vmatpush.msra.mxu0 0.0
      %3023 = vmatpush.msra.mxu0 0.0
      %3024 = vmatpush.msra.mxu0 0.0
      %3025 = vmatpush.msra.mxu0 0.0
      %3026 = vmatpush.msra.mxu0 0.0
      %3027 = vmatpush.msra.mxu0 %v2963
      %3028 = vmatmul.f32.gmra.mxu0 %v2965
      %v3029 = vpop.f32.mrf.mxu0
      %v3030 = vadd.f32 0.0, %v3029
      %3031 = vmatmul.f32.gmra.mxu0 %v2968
      %v3032 = vpop.f32.mrf.mxu0
      %v3033 = vadd.f32 0.0, %v3032
      %3034 = vmatmul.f32.gmra.mxu0 %v2971
      %v3035 = vpop.f32.mrf.mxu0
      %v3036 = vadd.f32 0.0, %v3035
      %3037 = vmatmul.f32.gmra.mxu0 %v2974
      %v3038 = vpop.f32.mrf.mxu0
      %v3039 = vadd.f32 0.0, %v3038
      %3040 = vmatmul.f32.gmra.mxu0 %v2977
      %v3041 = vpop.f32.mrf.mxu0
      %v3042 = vadd.f32 0.0, %v3041
      %3043 = vmatmul.f32.gmra.mxu0 %v2980
      %v3044 = vpop.f32.mrf.mxu0
      %v3045 = vadd.f32 0.0, %v3044
      %3046 = vmatmul.f32.gmra.mxu0 %v2983
      %v3047 = vpop.f32.mrf.mxu0
      %v3048 = vadd.f32 0.0, %v3047
      %3049 = vmatmul.f32.gmra.mxu0 %v2986
      %v3050 = vpop.f32.mrf.mxu0
      %v3051 = vadd.f32 0.0, %v3050
      %3052 = vmatmul.f32.gmra.mxu0 %v2989
      %v3053 = vpop.f32.mrf.mxu0
      %v3054 = vadd.f32 0.0, %v3053
      %3055 = vmatmul.f32.gmra.mxu0 %v2992
      %v3056 = vpop.f32.mrf.mxu0
      %v3057 = vadd.f32 0.0, %v3056
      %3058 = vmatmul.f32.gmra.mxu0 %v2995
      %v3059 = vpop.f32.mrf.mxu0
      %v3060 = vadd.f32 0.0, %v3059
      %3061 = vmatmul.f32.gmra.mxu0 %v2998
      %v3062 = vpop.f32.mrf.mxu0
      %v3063 = vadd.f32 0.0, %v3062
      %3064 = vmatmul.f32.gmra.mxu0 %v3001
      %v3065 = vpop.f32.mrf.mxu0
      %v3066 = vadd.f32 0.0, %v3065
      %3067 = vmatmul.f32.gmra.mxu0 %v3004
      %v3068 = vpop.f32.mrf.mxu0
      %v3069 = vadd.f32 0.0, %v3068
      %3070 = vmatmul.f32.gmra.mxu0 %v3007
      %v3071 = vpop.f32.mrf.mxu0
      %v3072 = vadd.f32 0.0, %v3071
      %3073 = vmatmul.f32.gmra.mxu0 %v3010
      %v3074 = vpop.f32.mrf.mxu0
      %v3075 = vadd.f32 0.0, %v3074
      %3076 = vdwg.mxu0
      %v3077 = vadd.f32 %v2929, %v3030
      %v3078 = vadd.f32 %v2930, %v3033
      %v3079 = vadd.f32 %v2931, %v3036
      %v3080 = vadd.f32 %v2932, %v3039
      %v3081 = vadd.f32 %v2933, %v3042
      %v3082 = vadd.f32 %v2934, %v3045
      %v3083 = vadd.f32 %v2935, %v3048
      %v3084 = vadd.f32 %v2936, %v3051
      %v3085 = vadd.f32 %v2937, %v3054
      %v3086 = vadd.f32 %v2938, %v3057
      %v3087 = vadd.f32 %v2939, %v3060
      %v3088 = vadd.f32 %v2940, %v3063
      %v3089 = vadd.f32 %v2941, %v3066
      %v3090 = vadd.f32 %v2942, %v3069
      %v3091 = vadd.f32 %v2943, %v3072
      %v3092 = vadd.f32 %v2944, %v3075
      %v3093 = vld [vmem:[%s2945 + $0x1] sm:$0xff]
      %v3094 = vld [vmem:[%s2945 + $0x9] sm:$0xff]
      %v3095 = vld [vmem:[%s2945 + $0x19] sm:$0xff]
      %v3096 = vld [vmem:[%s2945 + $0x21] sm:$0xff]
      %v3097 = vld [vmem:[%s2945 + $0x31] sm:$0xff]
      %v3098 = vld [vmem:[%s2945 + $0x39] sm:$0xff]
      %v3099 = vld [vmem:[%s2945 + $0x49] sm:$0xff]
      %v3100 = vld [vmem:[%s2945 + $0x51] sm:$0xff]
      %v3101 = vld [vmem:[%s2945 + $0x61] sm:$0xff]
      %v3102 = vld [vmem:[%s2945 + $0x69] sm:$0xff]
      %v3103 = vld [vmem:[%s2945 + $0x79] sm:$0xff]
      %v3104 = vld [vmem:[%s2945 + $0x81] sm:$0xff]
      %v3105 = vld [vmem:[%s2945 + $0x91] sm:$0xff]
      %v3106 = vld [vmem:[%s2945 + $0x99] sm:$0xff]
      %v3107 = vld [vmem:[%s2945 + $0xa9] sm:$0xff]
      %v3108 = vld [vmem:[%s2945 + $0xb1] sm:$0xff]
      %s3109 = scalar_lea.vmem %s3, 32
      %v3110 = vld [vmem:[%s3109] sm:$0xff]
      %v3112 = vsel %vm2108, %v3093, 0
      %v3115 = vsel %vm2108, %v3094, 0
      %v3118 = vsel %vm2108, %v3095, 0
      %v3121 = vsel %vm2108, %v3096, 0
      %v3124 = vsel %vm2108, %v3097, 0
      %v3127 = vsel %vm2108, %v3098, 0
      %v3130 = vsel %vm2108, %v3099, 0
      %v3133 = vsel %vm2108, %v3100, 0
      %v3136 = vsel %vm2108, %v3101, 0
      %v3139 = vsel %vm2108, %v3102, 0
      %v3142 = vsel %vm2108, %v3103, 0
      %v3145 = vsel %vm2108, %v3104, 0
      %v3148 = vsel %vm2108, %v3105, 0
      %v3151 = vsel %vm2108, %v3106, 0
      %v3154 = vsel %vm2108, %v3107, 0
      %v3157 = vsel %vm2108, %v3108, 0
      %3159 = vmatpush.msra.mxu0 0.0
      %3160 = vmatpush.msra.mxu0 0.0
      %3161 = vmatpush.msra.mxu0 0.0
      %3162 = vmatpush.msra.mxu0 0.0
      %3163 = vmatpush.msra.mxu0 0.0
      %3164 = vmatpush.msra.mxu0 0.0
      %3165 = vmatpush.msra.mxu0 0.0
      %3166 = vmatpush.msra.mxu0 0.0
      %3167 = vmatpush.msra.mxu0 0.0
      %3168 = vmatpush.msra.mxu0 0.0
      %3169 = vmatpush.msra.mxu0 0.0
      %3170 = vmatpush.msra.mxu0 0.0
      %3171 = vmatpush.msra.mxu0 0.0
      %3172 = vmatpush.msra.mxu0 0.0
      %3173 = vmatpush.msra.mxu0 0.0
      %3174 = vmatpush.msra.mxu0 %v3110
      %3175 = vmatmul.f32.gmra.mxu0 %v3112
      %v3176 = vpop.f32.mrf.mxu0
      %v3177 = vadd.f32 0.0, %v3176
      %3178 = vmatmul.f32.gmra.mxu0 %v3115
      %v3179 = vpop.f32.mrf.mxu0
      %v3180 = vadd.f32 0.0, %v3179
      %3181 = vmatmul.f32.gmra.mxu0 %v3118
      %v3182 = vpop.f32.mrf.mxu0
      %v3183 = vadd.f32 0.0, %v3182
      %3184 = vmatmul.f32.gmra.mxu0 %v3121
      %v3185 = vpop.f32.mrf.mxu0
      %v3186 = vadd.f32 0.0, %v3185
      %3187 = vmatmul.f32.gmra.mxu0 %v3124
      %v3188 = vpop.f32.mrf.mxu0
      %v3189 = vadd.f32 0.0, %v3188
      %3190 = vmatmul.f32.gmra.mxu0 %v3127
      %v3191 = vpop.f32.mrf.mxu0
      %v3192 = vadd.f32 0.0, %v3191
      %3193 = vmatmul.f32.gmra.mxu0 %v3130
      %v3194 = vpop.f32.mrf.mxu0
      %v3195 = vadd.f32 0.0, %v3194
      %3196 = vmatmul.f32.gmra.mxu0 %v3133
      %v3197 = vpop.f32.mrf.mxu0
      %v3198 = vadd.f32 0.0, %v3197
      %3199 = vmatmul.f32.gmra.mxu0 %v3136
      %v3200 = vpop.f32.mrf.mxu0
      %v3201 = vadd.f32 0.0, %v3200
      %3202 = vmatmul.f32.gmra.mxu0 %v3139
      %v3203 = vpop.f32.mrf.mxu0
      %v3204 = vadd.f32 0.0, %v3203
      %3205 = vmatmul.f32.gmra.mxu0 %v3142
      %v3206 = vpop.f32.mrf.mxu0
      %v3207 = vadd.f32 0.0, %v3206
      %3208 = vmatmul.f32.gmra.mxu0 %v3145
      %v3209 = vpop.f32.mrf.mxu0
      %v3210 = vadd.f32 0.0, %v3209
      %3211 = vmatmul.f32.gmra.mxu0 %v3148
      %v3212 = vpop.f32.mrf.mxu0
      %v3213 = vadd.f32 0.0, %v3212
      %3214 = vmatmul.f32.gmra.mxu0 %v3151
      %v3215 = vpop.f32.mrf.mxu0
      %v3216 = vadd.f32 0.0, %v3215
      %3217 = vmatmul.f32.gmra.mxu0 %v3154
      %v3218 = vpop.f32.mrf.mxu0
      %v3219 = vadd.f32 0.0, %v3218
      %3220 = vmatmul.f32.gmra.mxu0 %v3157
      %v3221 = vpop.f32.mrf.mxu0
      %v3222 = vadd.f32 0.0, %v3221
      %3223 = vdwg.mxu0
      %v3224 = vadd.f32 %v3077, %v3177
      %v3225 = vadd.f32 %v3078, %v3180
      %v3226 = vadd.f32 %v3079, %v3183
      %v3227 = vadd.f32 %v3080, %v3186
      %v3228 = vadd.f32 %v3081, %v3189
      %v3229 = vadd.f32 %v3082, %v3192
      %v3230 = vadd.f32 %v3083, %v3195
      %v3231 = vadd.f32 %v3084, %v3198
      %v3232 = vadd.f32 %v3085, %v3201
      %v3233 = vadd.f32 %v3086, %v3204
      %v3234 = vadd.f32 %v3087, %v3207
      %v3235 = vadd.f32 %v3088, %v3210
      %v3236 = vadd.f32 %v3089, %v3213
      %v3237 = vadd.f32 %v3090, %v3216
      %v3238 = vadd.f32 %v3091, %v3219
      %v3239 = vadd.f32 %v3092, %v3222
      %v3240 = vld [vmem:[%s2945 + $0x2] sm:$0xff]
      %v3241 = vld [vmem:[%s2945 + $0xa] sm:$0xff]
      %v3242 = vld [vmem:[%s2945 + $0x1a] sm:$0xff]
      %v3243 = vld [vmem:[%s2945 + $0x22] sm:$0xff]
      %v3244 = vld [vmem:[%s2945 + $0x32] sm:$0xff]
      %v3245 = vld [vmem:[%s2945 + $0x3a] sm:$0xff]
      %v3246 = vld [vmem:[%s2945 + $0x4a] sm:$0xff]
      %v3247 = vld [vmem:[%s2945 + $0x52] sm:$0xff]
      %v3248 = vld [vmem:[%s2945 + $0x62] sm:$0xff]
      %v3249 = vld [vmem:[%s2945 + $0x6a] sm:$0xff]
      %v3250 = vld [vmem:[%s2945 + $0x7a] sm:$0xff]
      %v3251 = vld [vmem:[%s2945 + $0x82] sm:$0xff]
      %v3252 = vld [vmem:[%s2945 + $0x92] sm:$0xff]
      %v3253 = vld [vmem:[%s2945 + $0x9a] sm:$0xff]
      %v3254 = vld [vmem:[%s2945 + $0xaa] sm:$0xff]
      %v3255 = vld [vmem:[%s2945 + $0xb2] sm:$0xff]
      %s3256 = scalar_lea.vmem %s3, 40
      %v3257 = vld [vmem:[%s3256] sm:$0xff]
      %v3259 = vsel %vm2108, %v3240, 0
      %v3262 = vsel %vm2108, %v3241, 0
      %v3265 = vsel %vm2108, %v3242, 0
      %v3268 = vsel %vm2108, %v3243, 0
      %v3271 = vsel %vm2108, %v3244, 0
      %v3274 = vsel %vm2108, %v3245, 0
      %v3277 = vsel %vm2108, %v3246, 0
      %v3280 = vsel %vm2108, %v3247, 0
      %v3283 = vsel %vm2108, %v3248, 0
      %v3286 = vsel %vm2108, %v3249, 0
      %v3289 = vsel %vm2108, %v3250, 0
      %v3292 = vsel %vm2108, %v3251, 0
      %v3295 = vsel %vm2108, %v3252, 0
      %v3298 = vsel %vm2108, %v3253, 0
      %v3301 = vsel %vm2108, %v3254, 0
      %v3304 = vsel %vm2108, %v3255, 0
      %3306 = vmatpush.msra.mxu0 0.0
      %3307 = vmatpush.msra.mxu0 0.0
      %3308 = vmatpush.msra.mxu0 0.0
      %3309 = vmatpush.msra.mxu0 0.0
      %3310 = vmatpush.msra.mxu0 0.0
      %3311 = vmatpush.msra.mxu0 0.0
      %3312 = vmatpush.msra.mxu0 0.0
      %3313 = vmatpush.msra.mxu0 0.0
      %3314 = vmatpush.msra.mxu0 0.0
      %3315 = vmatpush.msra.mxu0 0.0
      %3316 = vmatpush.msra.mxu0 0.0
      %3317 = vmatpush.msra.mxu0 0.0
      %3318 = vmatpush.msra.mxu0 0.0
      %3319 = vmatpush.msra.mxu0 0.0
      %3320 = vmatpush.msra.mxu0 0.0
      %3321 = vmatpush.msra.mxu0 %v3257
      %3322 = vmatmul.f32.gmra.mxu0 %v3259
      %v3323 = vpop.f32.mrf.mxu0
      %v3324 = vadd.f32 0.0, %v3323
      %3325 = vmatmul.f32.gmra.mxu0 %v3262
      %v3326 = vpop.f32.mrf.mxu0
      %v3327 = vadd.f32 0.0, %v3326
      %3328 = vmatmul.f32.gmra.mxu0 %v3265
      %v3329 = vpop.f32.mrf.mxu0
      %v3330 = vadd.f32 0.0, %v3329
      %3331 = vmatmul.f32.gmra.mxu0 %v3268
      %v3332 = vpop.f32.mrf.mxu0
      %v3333 = vadd.f32 0.0, %v3332
      %3334 = vmatmul.f32.gmra.mxu0 %v3271
      %v3335 = vpop.f32.mrf.mxu0
      %v3336 = vadd.f32 0.0, %v3335
      %3337 = vmatmul.f32.gmra.mxu0 %v3274
      %v3338 = vpop.f32.mrf.mxu0
      %v3339 = vadd.f32 0.0, %v3338
      %3340 = vmatmul.f32.gmra.mxu0 %v3277
      %v3341 = vpop.f32.mrf.mxu0
      %v3342 = vadd.f32 0.0, %v3341
      %3343 = vmatmul.f32.gmra.mxu0 %v3280
      %v3344 = vpop.f32.mrf.mxu0
      %v3345 = vadd.f32 0.0, %v3344
      %3346 = vmatmul.f32.gmra.mxu0 %v3283
      %v3347 = vpop.f32.mrf.mxu0
      %v3348 = vadd.f32 0.0, %v3347
      %3349 = vmatmul.f32.gmra.mxu0 %v3286
      %v3350 = vpop.f32.mrf.mxu0
      %v3351 = vadd.f32 0.0, %v3350
      %3352 = vmatmul.f32.gmra.mxu0 %v3289
      %v3353 = vpop.f32.mrf.mxu0
      %v3354 = vadd.f32 0.0, %v3353
      %3355 = vmatmul.f32.gmra.mxu0 %v3292
      %v3356 = vpop.f32.mrf.mxu0
      %v3357 = vadd.f32 0.0, %v3356
      %3358 = vmatmul.f32.gmra.mxu0 %v3295
      %v3359 = vpop.f32.mrf.mxu0
      %v3360 = vadd.f32 0.0, %v3359
      %3361 = vmatmul.f32.gmra.mxu0 %v3298
      %v3362 = vpop.f32.mrf.mxu0
      %v3363 = vadd.f32 0.0, %v3362
      %3364 = vmatmul.f32.gmra.mxu0 %v3301
      %v3365 = vpop.f32.mrf.mxu0
      %v3366 = vadd.f32 0.0, %v3365
      %3367 = vmatmul.f32.gmra.mxu0 %v3304
      %v3368 = vpop.f32.mrf.mxu0
      %v3369 = vadd.f32 0.0, %v3368
      %3370 = vdwg.mxu0
      %v3371 = vadd.f32 %v3224, %v3324
      %v3372 = vadd.f32 %v3225, %v3327
      %v3373 = vadd.f32 %v3226, %v3330
      %v3374 = vadd.f32 %v3227, %v3333
      %v3375 = vadd.f32 %v3228, %v3336
      %v3376 = vadd.f32 %v3229, %v3339
      %v3377 = vadd.f32 %v3230, %v3342
      %v3378 = vadd.f32 %v3231, %v3345
      %v3379 = vadd.f32 %v3232, %v3348
      %v3380 = vadd.f32 %v3233, %v3351
      %v3381 = vadd.f32 %v3234, %v3354
      %v3382 = vadd.f32 %v3235, %v3357
      %v3383 = vadd.f32 %v3236, %v3360
      %v3384 = vadd.f32 %v3237, %v3363
      %v3385 = vadd.f32 %v3238, %v3366
      %v3386 = vadd.f32 %v3239, %v3369
      %s3387 = scalar_lea.vmem [#allocation3], 48
      %v3388 = vld [vmem:[%s3387] sm:$0xff]
      %v3389 = vld [vmem:[%s3387 + $0x8] sm:$0xff]
      %v3390 = vld [vmem:[%s3387 + $0x18] sm:$0xff]
      %v3391 = vld [vmem:[%s3387 + $0x20] sm:$0xff]
      %v3392 = vld [vmem:[%s3387 + $0x30] sm:$0xff]
      %v3393 = vld [vmem:[%s3387 + $0x38] sm:$0xff]
      %v3394 = vld [vmem:[%s3387 + $0x48] sm:$0xff]
      %v3395 = vld [vmem:[%s3387 + $0x50] sm:$0xff]
      %v3396 = vld [vmem:[%s3387 + $0x60] sm:$0xff]
      %v3397 = vld [vmem:[%s3387 + $0x68] sm:$0xff]
      %v3398 = vld [vmem:[%s3387 + $0x78] sm:$0xff]
      %v3399 = vld [vmem:[%s3387 + $0x80] sm:$0xff]
      %v3400 = vld [vmem:[%s3387 + $0x90] sm:$0xff]
      %v3401 = vld [vmem:[%s3387 + $0x98] sm:$0xff]
      %v3402 = vld [vmem:[%s3387 + $0xa8] sm:$0xff]
      %v3403 = vld [vmem:[%s3387 + $0xb0] sm:$0xff]
      %s3404 = scalar_lea.vmem %s3, 48
      %v3405 = vld [vmem:[%s3404] sm:$0xff]
      %v3407 = vsel %vm2108, %v3388, 0
      %v3410 = vsel %vm2108, %v3389, 0
      %v3413 = vsel %vm2108, %v3390, 0
      %v3416 = vsel %vm2108, %v3391, 0
      %v3419 = vsel %vm2108, %v3392, 0
      %v3422 = vsel %vm2108, %v3393, 0
      %v3425 = vsel %vm2108, %v3394, 0
      %v3428 = vsel %vm2108, %v3395, 0
      %v3431 = vsel %vm2108, %v3396, 0
      %v3434 = vsel %vm2108, %v3397, 0
      %v3437 = vsel %vm2108, %v3398, 0
      %v3440 = vsel %vm2108, %v3399, 0
      %v3443 = vsel %vm2108, %v3400, 0
      %v3446 = vsel %vm2108, %v3401, 0
      %v3449 = vsel %vm2108, %v3402, 0
      %v3452 = vsel %vm2108, %v3403, 0
      %3454 = vmatpush.msra.mxu0 0.0
      %3455 = vmatpush.msra.mxu0 0.0
      %3456 = vmatpush.msra.mxu0 0.0
      %3457 = vmatpush.msra.mxu0 0.0
      %3458 = vmatpush.msra.mxu0 0.0
      %3459 = vmatpush.msra.mxu0 0.0
      %3460 = vmatpush.msra.mxu0 0.0
      %3461 = vmatpush.msra.mxu0 0.0
      %3462 = vmatpush.msra.mxu0 0.0
      %3463 = vmatpush.msra.mxu0 0.0
      %3464 = vmatpush.msra.mxu0 0.0
      %3465 = vmatpush.msra.mxu0 0.0
      %3466 = vmatpush.msra.mxu0 0.0
      %3467 = vmatpush.msra.mxu0 0.0
      %3468 = vmatpush.msra.mxu0 0.0
      %3469 = vmatpush.msra.mxu0 %v3405
      %3470 = vmatmul.f32.gmra.mxu0 %v3407
      %v3471 = vpop.f32.mrf.mxu0
      %v3472 = vadd.f32 0.0, %v3471
      %3473 = vmatmul.f32.gmra.mxu0 %v3410
      %v3474 = vpop.f32.mrf.mxu0
      %v3475 = vadd.f32 0.0, %v3474
      %3476 = vmatmul.f32.gmra.mxu0 %v3413
      %v3477 = vpop.f32.mrf.mxu0
      %v3478 = vadd.f32 0.0, %v3477
      %3479 = vmatmul.f32.gmra.mxu0 %v3416
      %v3480 = vpop.f32.mrf.mxu0
      %v3481 = vadd.f32 0.0, %v3480
      %3482 = vmatmul.f32.gmra.mxu0 %v3419
      %v3483 = vpop.f32.mrf.mxu0
      %v3484 = vadd.f32 0.0, %v3483
      %3485 = vmatmul.f32.gmra.mxu0 %v3422
      %v3486 = vpop.f32.mrf.mxu0
      %v3487 = vadd.f32 0.0, %v3486
      %3488 = vmatmul.f32.gmra.mxu0 %v3425
      %v3489 = vpop.f32.mrf.mxu0
      %v3490 = vadd.f32 0.0, %v3489
      %3491 = vmatmul.f32.gmra.mxu0 %v3428
      %v3492 = vpop.f32.mrf.mxu0
      %v3493 = vadd.f32 0.0, %v3492
      %3494 = vmatmul.f32.gmra.mxu0 %v3431
      %v3495 = vpop.f32.mrf.mxu0
      %v3496 = vadd.f32 0.0, %v3495
      %3497 = vmatmul.f32.gmra.mxu0 %v3434
      %v3498 = vpop.f32.mrf.mxu0
      %v3499 = vadd.f32 0.0, %v3498
      %3500 = vmatmul.f32.gmra.mxu0 %v3437
      %v3501 = vpop.f32.mrf.mxu0
      %v3502 = vadd.f32 0.0, %v3501
      %3503 = vmatmul.f32.gmra.mxu0 %v3440
      %v3504 = vpop.f32.mrf.mxu0
      %v3505 = vadd.f32 0.0, %v3504
      %3506 = vmatmul.f32.gmra.mxu0 %v3443
      %v3507 = vpop.f32.mrf.mxu0
      %v3508 = vadd.f32 0.0, %v3507
      %3509 = vmatmul.f32.gmra.mxu0 %v3446
      %v3510 = vpop.f32.mrf.mxu0
      %v3511 = vadd.f32 0.0, %v3510
      %3512 = vmatmul.f32.gmra.mxu0 %v3449
      %v3513 = vpop.f32.mrf.mxu0
      %v3514 = vadd.f32 0.0, %v3513
      %3515 = vmatmul.f32.gmra.mxu0 %v3452
      %v3516 = vpop.f32.mrf.mxu0
      %v3517 = vadd.f32 0.0, %v3516
      %3518 = vdwg.mxu0
      %v3519 = vadd.f32 %v3371, %v3472
      %v3520 = vadd.f32 %v3372, %v3475
      %v3521 = vadd.f32 %v3373, %v3478
      %v3522 = vadd.f32 %v3374, %v3481
      %v3523 = vadd.f32 %v3375, %v3484
      %v3524 = vadd.f32 %v3376, %v3487
      %v3525 = vadd.f32 %v3377, %v3490
      %v3526 = vadd.f32 %v3378, %v3493
      %v3527 = vadd.f32 %v3379, %v3496
      %v3528 = vadd.f32 %v3380, %v3499
      %v3529 = vadd.f32 %v3381, %v3502
      %v3530 = vadd.f32 %v3382, %v3505
      %v3531 = vadd.f32 %v3383, %v3508
      %v3532 = vadd.f32 %v3384, %v3511
      %v3533 = vadd.f32 %v3385, %v3514
      %v3534 = vadd.f32 %v3386, %v3517
      %v3535 = vld [vmem:[%s3387 + $0x1] sm:$0xff]
      %v3536 = vld [vmem:[%s3387 + $0x9] sm:$0xff]
      %v3537 = vld [vmem:[%s3387 + $0x19] sm:$0xff]
      %v3538 = vld [vmem:[%s3387 + $0x21] sm:$0xff]
      %v3539 = vld [vmem:[%s3387 + $0x31] sm:$0xff]
      %v3540 = vld [vmem:[%s3387 + $0x39] sm:$0xff]
      %v3541 = vld [vmem:[%s3387 + $0x49] sm:$0xff]
      %v3542 = vld [vmem:[%s3387 + $0x51] sm:$0xff]
      %v3543 = vld [vmem:[%s3387 + $0x61] sm:$0xff]
      %v3544 = vld [vmem:[%s3387 + $0x69] sm:$0xff]
      %v3545 = vld [vmem:[%s3387 + $0x79] sm:$0xff]
      %v3546 = vld [vmem:[%s3387 + $0x81] sm:$0xff]
      %v3547 = vld [vmem:[%s3387 + $0x91] sm:$0xff]
      %v3548 = vld [vmem:[%s3387 + $0x99] sm:$0xff]
      %v3549 = vld [vmem:[%s3387 + $0xa9] sm:$0xff]
      %v3550 = vld [vmem:[%s3387 + $0xb1] sm:$0xff]
      %s3551 = scalar_lea.vmem %s3, 56
      %v3552 = vld [vmem:[%s3551] sm:$0xff]
      %v3554 = vsel %vm2108, %v3535, 0
      %v3557 = vsel %vm2108, %v3536, 0
      %v3560 = vsel %vm2108, %v3537, 0
      %v3563 = vsel %vm2108, %v3538, 0
      %v3566 = vsel %vm2108, %v3539, 0
      %v3569 = vsel %vm2108, %v3540, 0
      %v3572 = vsel %vm2108, %v3541, 0
      %v3575 = vsel %vm2108, %v3542, 0
      %v3578 = vsel %vm2108, %v3543, 0
      %v3581 = vsel %vm2108, %v3544, 0
      %v3584 = vsel %vm2108, %v3545, 0
      %v3587 = vsel %vm2108, %v3546, 0
      %v3590 = vsel %vm2108, %v3547, 0
      %v3593 = vsel %vm2108, %v3548, 0
      %v3596 = vsel %vm2108, %v3549, 0
      %v3599 = vsel %vm2108, %v3550, 0
      %3601 = vmatpush.msra.mxu0 0.0
      %3602 = vmatpush.msra.mxu0 0.0
      %3603 = vmatpush.msra.mxu0 0.0
      %3604 = vmatpush.msra.mxu0 0.0
      %3605 = vmatpush.msra.mxu0 0.0
      %3606 = vmatpush.msra.mxu0 0.0
      %3607 = vmatpush.msra.mxu0 0.0
      %3608 = vmatpush.msra.mxu0 0.0
      %3609 = vmatpush.msra.mxu0 0.0
      %3610 = vmatpush.msra.mxu0 0.0
      %3611 = vmatpush.msra.mxu0 0.0
      %3612 = vmatpush.msra.mxu0 0.0
      %3613 = vmatpush.msra.mxu0 0.0
      %3614 = vmatpush.msra.mxu0 0.0
      %3615 = vmatpush.msra.mxu0 0.0
      %3616 = vmatpush.msra.mxu0 %v3552
      %3617 = vmatmul.f32.gmra.mxu0 %v3554
      %v3618 = vpop.f32.mrf.mxu0
      %v3619 = vadd.f32 0.0, %v3618
      %3620 = vmatmul.f32.gmra.mxu0 %v3557
      %v3621 = vpop.f32.mrf.mxu0
      %v3622 = vadd.f32 0.0, %v3621
      %3623 = vmatmul.f32.gmra.mxu0 %v3560
      %v3624 = vpop.f32.mrf.mxu0
      %v3625 = vadd.f32 0.0, %v3624
      %3626 = vmatmul.f32.gmra.mxu0 %v3563
      %v3627 = vpop.f32.mrf.mxu0
      %v3628 = vadd.f32 0.0, %v3627
      %3629 = vmatmul.f32.gmra.mxu0 %v3566
      %v3630 = vpop.f32.mrf.mxu0
      %v3631 = vadd.f32 0.0, %v3630
      %3632 = vmatmul.f32.gmra.mxu0 %v3569
      %v3633 = vpop.f32.mrf.mxu0
      %v3634 = vadd.f32 0.0, %v3633
      %3635 = vmatmul.f32.gmra.mxu0 %v3572
      %v3636 = vpop.f32.mrf.mxu0
      %v3637 = vadd.f32 0.0, %v3636
      %3638 = vmatmul.f32.gmra.mxu0 %v3575
      %v3639 = vpop.f32.mrf.mxu0
      %v3640 = vadd.f32 0.0, %v3639
      %3641 = vmatmul.f32.gmra.mxu0 %v3578
      %v3642 = vpop.f32.mrf.mxu0
      %v3643 = vadd.f32 0.0, %v3642
      %3644 = vmatmul.f32.gmra.mxu0 %v3581
      %v3645 = vpop.f32.mrf.mxu0
      %v3646 = vadd.f32 0.0, %v3645
      %3647 = vmatmul.f32.gmra.mxu0 %v3584
      %v3648 = vpop.f32.mrf.mxu0
      %v3649 = vadd.f32 0.0, %v3648
      %3650 = vmatmul.f32.gmra.mxu0 %v3587
      %v3651 = vpop.f32.mrf.mxu0
      %v3652 = vadd.f32 0.0, %v3651
      %3653 = vmatmul.f32.gmra.mxu0 %v3590
      %v3654 = vpop.f32.mrf.mxu0
      %v3655 = vadd.f32 0.0, %v3654
      %3656 = vmatmul.f32.gmra.mxu0 %v3593
      %v3657 = vpop.f32.mrf.mxu0
      %v3658 = vadd.f32 0.0, %v3657
      %3659 = vmatmul.f32.gmra.mxu0 %v3596
      %v3660 = vpop.f32.mrf.mxu0
      %v3661 = vadd.f32 0.0, %v3660
      %3662 = vmatmul.f32.gmra.mxu0 %v3599
      %v3663 = vpop.f32.mrf.mxu0
      %v3664 = vadd.f32 0.0, %v3663
      %3665 = vdwg.mxu0
      %v3666 = vadd.f32 %v3519, %v3619
      %v3667 = vadd.f32 %v3520, %v3622
      %v3668 = vadd.f32 %v3521, %v3625
      %v3669 = vadd.f32 %v3522, %v3628
      %v3670 = vadd.f32 %v3523, %v3631
      %v3671 = vadd.f32 %v3524, %v3634
      %v3672 = vadd.f32 %v3525, %v3637
      %v3673 = vadd.f32 %v3526, %v3640
      %v3674 = vadd.f32 %v3527, %v3643
      %v3675 = vadd.f32 %v3528, %v3646
      %v3676 = vadd.f32 %v3529, %v3649
      %v3677 = vadd.f32 %v3530, %v3652
      %v3678 = vadd.f32 %v3531, %v3655
      %v3679 = vadd.f32 %v3532, %v3658
      %v3680 = vadd.f32 %v3533, %v3661
      %v3681 = vadd.f32 %v3534, %v3664
      %v3682 = vld [vmem:[%s3387 + $0x2] sm:$0xff]
      %v3683 = vld [vmem:[%s3387 + $0xa] sm:$0xff]
      %v3684 = vld [vmem:[%s3387 + $0x1a] sm:$0xff]
      %v3685 = vld [vmem:[%s3387 + $0x22] sm:$0xff]
      %v3686 = vld [vmem:[%s3387 + $0x32] sm:$0xff]
      %v3687 = vld [vmem:[%s3387 + $0x3a] sm:$0xff]
      %v3688 = vld [vmem:[%s3387 + $0x4a] sm:$0xff]
      %v3689 = vld [vmem:[%s3387 + $0x52] sm:$0xff]
      %v3690 = vld [vmem:[%s3387 + $0x62] sm:$0xff]
      %v3691 = vld [vmem:[%s3387 + $0x6a] sm:$0xff]
      %v3692 = vld [vmem:[%s3387 + $0x7a] sm:$0xff]
      %v3693 = vld [vmem:[%s3387 + $0x82] sm:$0xff]
      %v3694 = vld [vmem:[%s3387 + $0x92] sm:$0xff]
      %v3695 = vld [vmem:[%s3387 + $0x9a] sm:$0xff]
      %v3696 = vld [vmem:[%s3387 + $0xaa] sm:$0xff]
      %v3697 = vld [vmem:[%s3387 + $0xb2] sm:$0xff]
      %s3698 = scalar_lea.vmem %s3, 64
      %v3699 = vld [vmem:[%s3698] sm:$0xff]
      %v3701 = vsel %vm2108, %v3682, 0
      %v3704 = vsel %vm2108, %v3683, 0
      %v3707 = vsel %vm2108, %v3684, 0
      %v3710 = vsel %vm2108, %v3685, 0
      %v3713 = vsel %vm2108, %v3686, 0
      %v3716 = vsel %vm2108, %v3687, 0
      %v3719 = vsel %vm2108, %v3688, 0
      %v3722 = vsel %vm2108, %v3689, 0
      %v3725 = vsel %vm2108, %v3690, 0
      %v3728 = vsel %vm2108, %v3691, 0
      %v3731 = vsel %vm2108, %v3692, 0
      %v3734 = vsel %vm2108, %v3693, 0
      %v3737 = vsel %vm2108, %v3694, 0
      %v3740 = vsel %vm2108, %v3695, 0
      %v3743 = vsel %vm2108, %v3696, 0
      %v3746 = vsel %vm2108, %v3697, 0
      %3748 = vmatpush.msra.mxu0 0.0
      %3749 = vmatpush.msra.mxu0 0.0
      %3750 = vmatpush.msra.mxu0 0.0
      %3751 = vmatpush.msra.mxu0 0.0
      %3752 = vmatpush.msra.mxu0 0.0
      %3753 = vmatpush.msra.mxu0 0.0
      %3754 = vmatpush.msra.mxu0 0.0
      %3755 = vmatpush.msra.mxu0 0.0
      %3756 = vmatpush.msra.mxu0 0.0
      %3757 = vmatpush.msra.mxu0 0.0
      %3758 = vmatpush.msra.mxu0 0.0
      %3759 = vmatpush.msra.mxu0 0.0
      %3760 = vmatpush.msra.mxu0 0.0
      %3761 = vmatpush.msra.mxu0 0.0
      %3762 = vmatpush.msra.mxu0 0.0
      %3763 = vmatpush.msra.mxu0 %v3699
      %3764 = vmatmul.f32.gmra.mxu0 %v3701
      %v3765 = vpop.f32.mrf.mxu0
      %v3766 = vadd.f32 0.0, %v3765
      %3767 = vmatmul.f32.gmra.mxu0 %v3704
      %v3768 = vpop.f32.mrf.mxu0
      %v3769 = vadd.f32 0.0, %v3768
      %3770 = vmatmul.f32.gmra.mxu0 %v3707
      %v3771 = vpop.f32.mrf.mxu0
      %v3772 = vadd.f32 0.0, %v3771
      %3773 = vmatmul.f32.gmra.mxu0 %v3710
      %v3774 = vpop.f32.mrf.mxu0
      %v3775 = vadd.f32 0.0, %v3774
      %3776 = vmatmul.f32.gmra.mxu0 %v3713
      %v3777 = vpop.f32.mrf.mxu0
      %v3778 = vadd.f32 0.0, %v3777
      %3779 = vmatmul.f32.gmra.mxu0 %v3716
      %v3780 = vpop.f32.mrf.mxu0
      %v3781 = vadd.f32 0.0, %v3780
      %3782 = vmatmul.f32.gmra.mxu0 %v3719
      %v3783 = vpop.f32.mrf.mxu0
      %v3784 = vadd.f32 0.0, %v3783
      %3785 = vmatmul.f32.gmra.mxu0 %v3722
      %v3786 = vpop.f32.mrf.mxu0
      %v3787 = vadd.f32 0.0, %v3786
      %3788 = vmatmul.f32.gmra.mxu0 %v3725
      %v3789 = vpop.f32.mrf.mxu0
      %v3790 = vadd.f32 0.0, %v3789
      %3791 = vmatmul.f32.gmra.mxu0 %v3728
      %v3792 = vpop.f32.mrf.mxu0
      %v3793 = vadd.f32 0.0, %v3792
      %3794 = vmatmul.f32.gmra.mxu0 %v3731
      %v3795 = vpop.f32.mrf.mxu0
      %v3796 = vadd.f32 0.0, %v3795
      %3797 = vmatmul.f32.gmra.mxu0 %v3734
      %v3798 = vpop.f32.mrf.mxu0
      %v3799 = vadd.f32 0.0, %v3798
      %3800 = vmatmul.f32.gmra.mxu0 %v3737
      %v3801 = vpop.f32.mrf.mxu0
      %v3802 = vadd.f32 0.0, %v3801
      %3803 = vmatmul.f32.gmra.mxu0 %v3740
      %v3804 = vpop.f32.mrf.mxu0
      %v3805 = vadd.f32 0.0, %v3804
      %3806 = vmatmul.f32.gmra.mxu0 %v3743
      %v3807 = vpop.f32.mrf.mxu0
      %v3808 = vadd.f32 0.0, %v3807
      %3809 = vmatmul.f32.gmra.mxu0 %v3746
      %v3810 = vpop.f32.mrf.mxu0
      %v3811 = vadd.f32 0.0, %v3810
      %3812 = vdwg.mxu0
      %v3813 = vadd.f32 %v3666, %v3766
      %v3814 = vadd.f32 %v3667, %v3769
      %v3815 = vadd.f32 %v3668, %v3772
      %v3816 = vadd.f32 %v3669, %v3775
      %v3817 = vadd.f32 %v3670, %v3778
      %v3818 = vadd.f32 %v3671, %v3781
      %v3819 = vadd.f32 %v3672, %v3784
      %v3820 = vadd.f32 %v3673, %v3787
      %v3821 = vadd.f32 %v3674, %v3790
      %v3822 = vadd.f32 %v3675, %v3793
      %v3823 = vadd.f32 %v3676, %v3796
      %v3824 = vadd.f32 %v3677, %v3799
      %v3825 = vadd.f32 %v3678, %v3802
      %v3826 = vadd.f32 %v3679, %v3805
      %v3827 = vadd.f32 %v3680, %v3808
      %v3828 = vadd.f32 %v3681, %v3811
      %v3829 = vld [vmem:[%s4] sm:$0x1]
      %v3831 = vperm.slane %v3829, 0
      %v3833 = vadd.f32 %v3813, %v3831
      %v3834 = vadd.f32 %v3814, %v3831
      %v3835 = vadd.f32 %v3815, %v3831
      %v3836 = vadd.f32 %v3816, %v3831
      %v3837 = vadd.f32 %v3817, %v3831
      %v3838 = vadd.f32 %v3818, %v3831
      %v3839 = vadd.f32 %v3819, %v3831
      %v3840 = vadd.f32 %v3820, %v3831
      %v3841 = vadd.f32 %v3821, %v3831
      %v3842 = vadd.f32 %v3822, %v3831
      %v3843 = vadd.f32 %v3823, %v3831
      %v3844 = vadd.f32 %v3824, %v3831
      %v3845 = vadd.f32 %v3825, %v3831
      %v3846 = vadd.f32 %v3826, %v3831
      %v3847 = vadd.f32 %v3827, %v3831
      %v3848 = vadd.f32 %v3828, %v3831
      %vm3849 = vcmp.gt.f32.partialorder %v3833, 0.0
      %vm3850 = vcmp.gt.f32.partialorder %v3834, 0.0
      %vm3851 = vcmp.gt.f32.partialorder %v3835, 0.0
      %vm3852 = vcmp.gt.f32.partialorder %v3836, 0.0
      %vm3853 = vcmp.gt.f32.partialorder %v3837, 0.0
      %vm3854 = vcmp.gt.f32.partialorder %v3838, 0.0
      %vm3855 = vcmp.gt.f32.partialorder %v3839, 0.0
      %vm3856 = vcmp.gt.f32.partialorder %v3840, 0.0
      %vm3857 = vcmp.gt.f32.partialorder %v3841, 0.0
      %vm3858 = vcmp.gt.f32.partialorder %v3842, 0.0
      %vm3859 = vcmp.gt.f32.partialorder %v3843, 0.0
      %vm3860 = vcmp.gt.f32.partialorder %v3844, 0.0
      %vm3861 = vcmp.gt.f32.partialorder %v3845, 0.0
      %vm3862 = vcmp.gt.f32.partialorder %v3846, 0.0
      %vm3863 = vcmp.gt.f32.partialorder %v3847, 0.0
      %vm3864 = vcmp.gt.f32.partialorder %v3848, 0.0
      %v3865 = vmul.f32 %v3833, 0.2
      %v3866 = vmul.f32 %v3834, 0.2
      %v3867 = vmul.f32 %v3835, 0.2
      %v3868 = vmul.f32 %v3836, 0.2
      %v3869 = vmul.f32 %v3837, 0.2
      %v3870 = vmul.f32 %v3838, 0.2
      %v3871 = vmul.f32 %v3839, 0.2
      %v3872 = vmul.f32 %v3840, 0.2
      %v3873 = vmul.f32 %v3841, 0.2
      %v3874 = vmul.f32 %v3842, 0.2
      %v3875 = vmul.f32 %v3843, 0.2
      %v3876 = vmul.f32 %v3844, 0.2
      %v3877 = vmul.f32 %v3845, 0.2
      %v3878 = vmul.f32 %v3846, 0.2
      %v3879 = vmul.f32 %v3847, 0.2
      %v3880 = vmul.f32 %v3848, 0.2
      %v3881 = vsel %vm3849, %v3833, %v3865
      %v3882 = vsel %vm3850, %v3834, %v3866
      %v3883 = vsel %vm3851, %v3835, %v3867
      %v3884 = vsel %vm3852, %v3836, %v3868
      %v3885 = vsel %vm3853, %v3837, %v3869
      %v3886 = vsel %vm3854, %v3838, %v3870
      %v3887 = vsel %vm3855, %v3839, %v3871
      %v3888 = vsel %vm3856, %v3840, %v3872
      %v3889 = vsel %vm3857, %v3841, %v3873
      %v3890 = vsel %vm3858, %v3842, %v3874
      %v3891 = vsel %vm3859, %v3843, %v3875
      %v3892 = vsel %vm3860, %v3844, %v3876
      %v3893 = vsel %vm3861, %v3845, %v3877
      %v3894 = vsel %vm3862, %v3846, %v3878
      %v3895 = vsel %vm3863, %v3847, %v3879
      %v3896 = vsel %vm3864, %v3848, %v3880
      %v3897 = vmul.f32 %v3881, %v3881
      %v3898 = vmul.f32 %v3882, %v3882
      %v3899 = vmul.f32 %v3883, %v3883
      %v3900 = vmul.f32 %v3884, %v3884
      %v3901 = vmul.f32 %v3885, %v3885
      %v3902 = vmul.f32 %v3886, %v3886
      %v3903 = vmul.f32 %v3887, %v3887
      %v3904 = vmul.f32 %v3888, %v3888
      %v3905 = vmul.f32 %v3889, %v3889
      %v3906 = vmul.f32 %v3890, %v3890
      %v3907 = vmul.f32 %v3891, %v3891
      %v3908 = vmul.f32 %v3892, %v3892
      %v3909 = vmul.f32 %v3893, %v3893
      %v3910 = vmul.f32 %v3894, %v3894
      %v3911 = vmul.f32 %v3895, %v3895
      %v3912 = vmul.f32 %v3896, %v3896
      %v3913 = vsel %vm2108, %v3897, 0.0
      %3914 = vadd.xlane.f32.xlu0 %v3913
      %v3915 = vpop.xlane.xlu0 %3914
      %v3916 = vsel %vm2108, %v3898, 0.0
      %3917 = vadd.xlane.f32.xlu0 %v3916
      %v3918 = vpop.xlane.xlu0 %3917
      %v3919 = vsel %vm2108, %v3899, 0.0
      %3920 = vadd.xlane.f32.xlu0 %v3919
      %v3921 = vpop.xlane.xlu0 %3920
      %v3922 = vsel %vm2108, %v3900, 0.0
      %3923 = vadd.xlane.f32.xlu0 %v3922
      %v3924 = vpop.xlane.xlu0 %3923
      %v3925 = vsel %vm2108, %v3901, 0.0
      %3926 = vadd.xlane.f32.xlu0 %v3925
      %v3927 = vpop.xlane.xlu0 %3926
      %v3928 = vsel %vm2108, %v3902, 0.0
      %3929 = vadd.xlane.f32.xlu0 %v3928
      %v3930 = vpop.xlane.xlu0 %3929
      %v3931 = vsel %vm2108, %v3903, 0.0
      %3932 = vadd.xlane.f32.xlu0 %v3931
      %v3933 = vpop.xlane.xlu0 %3932
      %v3934 = vsel %vm2108, %v3904, 0.0
      %3935 = vadd.xlane.f32.xlu0 %v3934
      %v3936 = vpop.xlane.xlu0 %3935
      %v3937 = vsel %vm2108, %v3905, 0.0
      %3938 = vadd.xlane.f32.xlu0 %v3937
      %v3939 = vpop.xlane.xlu0 %3938
      %v3940 = vsel %vm2108, %v3906, 0.0
      %3941 = vadd.xlane.f32.xlu0 %v3940
      %v3942 = vpop.xlane.xlu0 %3941
      %v3943 = vsel %vm2108, %v3907, 0.0
      %3944 = vadd.xlane.f32.xlu0 %v3943
      %v3945 = vpop.xlane.xlu0 %3944
      %v3946 = vsel %vm2108, %v3908, 0.0
      %3947 = vadd.xlane.f32.xlu0 %v3946
      %v3948 = vpop.xlane.xlu0 %3947
      %v3949 = vsel %vm2108, %v3909, 0.0
      %3950 = vadd.xlane.f32.xlu0 %v3949
      %v3951 = vpop.xlane.xlu0 %3950
      %v3952 = vsel %vm2108, %v3910, 0.0
      %3953 = vadd.xlane.f32.xlu0 %v3952
      %v3954 = vpop.xlane.xlu0 %3953
      %v3955 = vsel %vm2108, %v3911, 0.0
      %3956 = vadd.xlane.f32.xlu0 %v3955
      %v3957 = vpop.xlane.xlu0 %3956
      %v3958 = vsel %vm2108, %v3912, 0.0
      %3959 = vadd.xlane.f32.xlu0 %v3958
      %v3960 = vpop.xlane.xlu0 %3959
      %v3961 = vmul.f32 %v3915, %v2175
      %v3962 = vmul.f32 %v3918, %v2175
      %v3963 = vmul.f32 %v3921, %v2175
      %v3964 = vmul.f32 %v3924, %v2175
      %v3965 = vmul.f32 %v3927, %v2175
      %v3966 = vmul.f32 %v3930, %v2175
      %v3967 = vmul.f32 %v3933, %v2175
      %v3968 = vmul.f32 %v3936, %v2175
      %v3969 = vmul.f32 %v3939, %v2175
      %v3970 = vmul.f32 %v3942, %v2175
      %v3971 = vmul.f32 %v3945, %v2175
      %v3972 = vmul.f32 %v3948, %v2175
      %v3973 = vmul.f32 %v3951, %v2175
      %v3974 = vmul.f32 %v3954, %v2175
      %v3975 = vmul.f32 %v3957, %v2175
      %v3976 = vmul.f32 %v3960, %v2175
      %v3977 = vadd.f32 %v3961, 1e-08
      %v3978 = vadd.f32 %v3962, 1e-08
      %v3979 = vadd.f32 %v3963, 1e-08
      %v3980 = vadd.f32 %v3964, 1e-08
      %v3981 = vadd.f32 %v3965, 1e-08
      %v3982 = vadd.f32 %v3966, 1e-08
      %v3983 = vadd.f32 %v3967, 1e-08
      %v3984 = vadd.f32 %v3968, 1e-08
      %v3985 = vadd.f32 %v3969, 1e-08
      %v3986 = vadd.f32 %v3970, 1e-08
      %v3987 = vadd.f32 %v3971, 1e-08
      %v3988 = vadd.f32 %v3972, 1e-08
      %v3989 = vadd.f32 %v3973, 1e-08
      %v3990 = vadd.f32 %v3974, 1e-08
      %v3991 = vadd.f32 %v3975, 1e-08
      %v3992 = vadd.f32 %v3976, 1e-08
      %v3993 = vrsqrt.pop %v3977
      %v3994 = vmul.f32 %v3993, %v3977
      %v3995 = vmul.f32 %v3994, %v3993
      %v3996 = vmul.f32 0.5, %v3995
      %v3997 = vsub.f32 1.5, %v3996
      %v3998 = vmul.f32 %v3993, %v3997
      %vm3999 = vweird.f32 %v3977
      %vm4000 = vweird.f32 %v3993
      %vm4001 = vmor %vm3999, %vm4000
      %v4002 = vsel %vm4001, %v3993, %v3998
      %v4003 = vrsqrt.pop %v3978
      %v4004 = vmul.f32 %v4003, %v3978
      %v4005 = vmul.f32 %v4004, %v4003
      %v4006 = vmul.f32 0.5, %v4005
      %v4007 = vsub.f32 1.5, %v4006
      %v4008 = vmul.f32 %v4003, %v4007
      %vm4009 = vweird.f32 %v3978
      %vm4010 = vweird.f32 %v4003
      %vm4011 = vmor %vm4009, %vm4010
      %v4012 = vsel %vm4011, %v4003, %v4008
      %v4013 = vrsqrt.pop %v3979
      %v4014 = vmul.f32 %v4013, %v3979
      %v4015 = vmul.f32 %v4014, %v4013
      %v4016 = vmul.f32 0.5, %v4015
      %v4017 = vsub.f32 1.5, %v4016
      %v4018 = vmul.f32 %v4013, %v4017
      %vm4019 = vweird.f32 %v3979
      %vm4020 = vweird.f32 %v4013
      %vm4021 = vmor %vm4019, %vm4020
      %v4022 = vsel %vm4021, %v4013, %v4018
      %v4023 = vrsqrt.pop %v3980
      %v4024 = vmul.f32 %v4023, %v3980
      %v4025 = vmul.f32 %v4024, %v4023
      %v4026 = vmul.f32 0.5, %v4025
      %v4027 = vsub.f32 1.5, %v4026
      %v4028 = vmul.f32 %v4023, %v4027
      %vm4029 = vweird.f32 %v3980
      %vm4030 = vweird.f32 %v4023
      %vm4031 = vmor %vm4029, %vm4030
      %v4032 = vsel %vm4031, %v4023, %v4028
      %v4033 = vrsqrt.pop %v3981
      %v4034 = vmul.f32 %v4033, %v3981
      %v4035 = vmul.f32 %v4034, %v4033
      %v4036 = vmul.f32 0.5, %v4035
      %v4037 = vsub.f32 1.5, %v4036
      %v4038 = vmul.f32 %v4033, %v4037
      %vm4039 = vweird.f32 %v3981
      %vm4040 = vweird.f32 %v4033
      %vm4041 = vmor %vm4039, %vm4040
      %v4042 = vsel %vm4041, %v4033, %v4038
      %v4043 = vrsqrt.pop %v3982
      %v4044 = vmul.f32 %v4043, %v3982
      %v4045 = vmul.f32 %v4044, %v4043
      %v4046 = vmul.f32 0.5, %v4045
      %v4047 = vsub.f32 1.5, %v4046
      %v4048 = vmul.f32 %v4043, %v4047
      %vm4049 = vweird.f32 %v3982
      %vm4050 = vweird.f32 %v4043
      %vm4051 = vmor %vm4049, %vm4050
      %v4052 = vsel %vm4051, %v4043, %v4048
      %v4053 = vrsqrt.pop %v3983
      %v4054 = vmul.f32 %v4053, %v3983
      %v4055 = vmul.f32 %v4054, %v4053
      %v4056 = vmul.f32 0.5, %v4055
      %v4057 = vsub.f32 1.5, %v4056
      %v4058 = vmul.f32 %v4053, %v4057
      %vm4059 = vweird.f32 %v3983
      %vm4060 = vweird.f32 %v4053
      %vm4061 = vmor %vm4059, %vm4060
      %v4062 = vsel %vm4061, %v4053, %v4058
      %v4063 = vrsqrt.pop %v3984
      %v4064 = vmul.f32 %v4063, %v3984
      %v4065 = vmul.f32 %v4064, %v4063
      %v4066 = vmul.f32 0.5, %v4065
      %v4067 = vsub.f32 1.5, %v4066
      %v4068 = vmul.f32 %v4063, %v4067
      %vm4069 = vweird.f32 %v3984
      %vm4070 = vweird.f32 %v4063
      %vm4071 = vmor %vm4069, %vm4070
      %v4072 = vsel %vm4071, %v4063, %v4068
      %v4073 = vrsqrt.pop %v3985
      %v4074 = vmul.f32 %v4073, %v3985
      %v4075 = vmul.f32 %v4074, %v4073
      %v4076 = vmul.f32 0.5, %v4075
      %v4077 = vsub.f32 1.5, %v4076
      %v4078 = vmul.f32 %v4073, %v4077
      %vm4079 = vweird.f32 %v3985
      %vm4080 = vweird.f32 %v4073
      %vm4081 = vmor %vm4079, %vm4080
      %v4082 = vsel %vm4081, %v4073, %v4078
      %v4083 = vrsqrt.pop %v3986
      %v4084 = vmul.f32 %v4083, %v3986
      %v4085 = vmul.f32 %v4084, %v4083
      %v4086 = vmul.f32 0.5, %v4085
      %v4087 = vsub.f32 1.5, %v4086
      %v4088 = vmul.f32 %v4083, %v4087
      %vm4089 = vweird.f32 %v3986
      %vm4090 = vweird.f32 %v4083
      %vm4091 = vmor %vm4089, %vm4090
      %v4092 = vsel %vm4091, %v4083, %v4088
      %v4093 = vrsqrt.pop %v3987
      %v4094 = vmul.f32 %v4093, %v3987
      %v4095 = vmul.f32 %v4094, %v4093
      %v4096 = vmul.f32 0.5, %v4095
      %v4097 = vsub.f32 1.5, %v4096
      %v4098 = vmul.f32 %v4093, %v4097
      %vm4099 = vweird.f32 %v3987
      %vm4100 = vweird.f32 %v4093
      %vm4101 = vmor %vm4099, %vm4100
      %v4102 = vsel %vm4101, %v4093, %v4098
      %v4103 = vrsqrt.pop %v3988
      %v4104 = vmul.f32 %v4103, %v3988
      %v4105 = vmul.f32 %v4104, %v4103
      %v4106 = vmul.f32 0.5, %v4105
      %v4107 = vsub.f32 1.5, %v4106
      %v4108 = vmul.f32 %v4103, %v4107
      %vm4109 = vweird.f32 %v3988
      %vm4110 = vweird.f32 %v4103
      %vm4111 = vmor %vm4109, %vm4110
      %v4112 = vsel %vm4111, %v4103, %v4108
      %v4113 = vrsqrt.pop %v3989
      %v4114 = vmul.f32 %v4113, %v3989
      %v4115 = vmul.f32 %v4114, %v4113
      %v4116 = vmul.f32 0.5, %v4115
      %v4117 = vsub.f32 1.5, %v4116
      %v4118 = vmul.f32 %v4113, %v4117
      %vm4119 = vweird.f32 %v3989
      %vm4120 = vweird.f32 %v4113
      %vm4121 = vmor %vm4119, %vm4120
      %v4122 = vsel %vm4121, %v4113, %v4118
      %v4123 = vrsqrt.pop %v3990
      %v4124 = vmul.f32 %v4123, %v3990
      %v4125 = vmul.f32 %v4124, %v4123
      %v4126 = vmul.f32 0.5, %v4125
      %v4127 = vsub.f32 1.5, %v4126
      %v4128 = vmul.f32 %v4123, %v4127
      %vm4129 = vweird.f32 %v3990
      %vm4130 = vweird.f32 %v4123
      %vm4131 = vmor %vm4129, %vm4130
      %v4132 = vsel %vm4131, %v4123, %v4128
      %v4133 = vrsqrt.pop %v3991
      %v4134 = vmul.f32 %v4133, %v3991
      %v4135 = vmul.f32 %v4134, %v4133
      %v4136 = vmul.f32 0.5, %v4135
      %v4137 = vsub.f32 1.5, %v4136
      %v4138 = vmul.f32 %v4133, %v4137
      %vm4139 = vweird.f32 %v3991
      %vm4140 = vweird.f32 %v4133
      %vm4141 = vmor %vm4139, %vm4140
      %v4142 = vsel %vm4141, %v4133, %v4138
      %v4143 = vrsqrt.pop %v3992
      %v4144 = vmul.f32 %v4143, %v3992
      %v4145 = vmul.f32 %v4144, %v4143
      %v4146 = vmul.f32 0.5, %v4145
      %v4147 = vsub.f32 1.5, %v4146
      %v4148 = vmul.f32 %v4143, %v4147
      %vm4149 = vweird.f32 %v3992
      %vm4150 = vweird.f32 %v4143
      %vm4151 = vmor %vm4149, %vm4150
      %v4152 = vsel %vm4151, %v4143, %v4148
      %v4153 = vmul.f32 %v3881, %v4002
      %v4154 = vmul.f32 %v3882, %v4012
      %v4155 = vmul.f32 %v3883, %v4022
      %v4156 = vmul.f32 %v3884, %v4032
      %v4157 = vmul.f32 %v3885, %v4042
      %v4158 = vmul.f32 %v3886, %v4052
      %v4159 = vmul.f32 %v3887, %v4062
      %v4160 = vmul.f32 %v3888, %v4072
      %v4161 = vmul.f32 %v3889, %v4082
      %v4162 = vmul.f32 %v3890, %v4092
      %v4163 = vmul.f32 %v3891, %v4102
      %v4164 = vmul.f32 %v3892, %v4112
      %v4165 = vmul.f32 %v3893, %v4122
      %v4166 = vmul.f32 %v3894, %v4132
      %v4167 = vmul.f32 %v3895, %v4142
      %v4168 = vmul.f32 %v3896, %v4152
      %4169 = vst.msk [vmem:[%s248] sm:$0xff] %vm2108, %v4153
      %4170 = vst.msk [vmem:[%s248 + $0x8] sm:$0xff] %vm2108, %v4154
      %4171 = vst.msk [vmem:[%s248 + $0x10] sm:$0xff] %vm2108, %v4155
      %4172 = vst.msk [vmem:[%s248 + $0x18] sm:$0xff] %vm2108, %v4156
      %4173 = vst.msk [vmem:[%s248 + $0x20] sm:$0xff] %vm2108, %v4157
      %4174 = vst.msk [vmem:[%s248 + $0x28] sm:$0xff] %vm2108, %v4158
      %4175 = vst.msk [vmem:[%s248 + $0x30] sm:$0xff] %vm2108, %v4159
      %4176 = vst.msk [vmem:[%s248 + $0x38] sm:$0xff] %vm2108, %v4160
      %4177 = vst.msk [vmem:[%s248 + $0x40] sm:$0xff] %vm2108, %v4161
      %4178 = vst.msk [vmem:[%s248 + $0x48] sm:$0xff] %vm2108, %v4162
      %4179 = vst.msk [vmem:[%s248 + $0x50] sm:$0xff] %vm2108, %v4163
      %4180 = vst.msk [vmem:[%s248 + $0x58] sm:$0xff] %vm2108, %v4164
      %4181 = vst.msk [vmem:[%s248 + $0x60] sm:$0xff] %vm2108, %v4165
      %4182 = vst.msk [vmem:[%s248 + $0x68] sm:$0xff] %vm2108, %v4166
      %4183 = vst.msk [vmem:[%s248 + $0x70] sm:$0xff] %vm2108, %v4167
      %4184 = vst.msk [vmem:[%s248 + $0x78] sm:$0xff] %vm2108, %v4168
      %s4185 = smul.u32 8, %s21
      %p4186 = scmp.lt.s32.totalorder %s20, 1
      %s4187 = scalar_select %p4186, %s20, 1
      %p4188 = scmp.lt.s32.totalorder %s4185, 15
      %s4189 = scalar_select %p4188, %s4185, 15
      %s4190 = smul.addr %s4189, 2
      %s4191 = smul.addr %s4187, 32
      %s4192 = sadd.s32 %s4190, %s4191
      %s4193 = smul.addr %s4192, 8
      %s4194 = scalar_lea.vmem %s5, %s4193
      // Predicated region
      $region45: #{tpu_custom_call.1} parent=39 // pred_check
        %p4195 = pneg %p158
      $region46: #{tpu_custom_call.1} parent=39 // pred_check_branch
        %4197 = sbr.rel (%p4195) target = $region48
      $region47: #{tpu_custom_call.1} parent=39 // pred_region
        %s4198 = smul.u32 8, %s21
      $region48: #{tpu_custom_call.1} parent=39 // pred_fallthru
        _
    $region40: #{tpu_custom_call.1} parent=5 // pred_fallthru
      _
    %p4199 = scmp.le.s32.totalorder 2, %s11
    // Predicated region
    $region49: #{tpu_custom_call.1} parent=5 // pred_check
      %p4200 = pneg %p4199
    $region50: #{tpu_custom_call.1} parent=5 // pred_check_branch
      %4202 = sbr.rel (%p4200) target = $region52
    $region51: #{tpu_custom_call.1} parent=5 // pred_region
      %s4203 = ssub.s32 %s11, 2
      // Predicated region
      $region53: #{tpu_custom_call.1} parent=51 // pred_check
        %p4204 = pneg %p164
      $region54: #{tpu_custom_call.1} parent=51 // pred_check_branch
        %4206 = sbr.rel (%p4204) target = $region56
      $region55: #{tpu_custom_call.1} parent=51 // pred_region
        %s4207 = smul.u32 8, %s23
        %p4208 = scmp.lt.s32.totalorder %s22, 1
        %s4209 = scalar_select %p4208, %s22, 1
        %p4210 = scmp.lt.s32.totalorder %s4207, 15
        %s4211 = scalar_select %p4210, %s4207, 15
        %s4212 = smul.addr %s4211, 2
        %s4213 = smul.addr %s4209, 32
        %s4214 = sadd.s32 %s4212, %s4213
        %s4215 = smul.addr %s4214, 8
        %s4216 = scalar_lea.vmem %s5, %s4215
      $region56: #{tpu_custom_call.1} parent=51 // pred_fallthru
        _
    $region52: #{tpu_custom_call.1} parent=5 // pred_fallthru
      _
  $region6: #{tpu_custom_call.1} parent=0 // loop_footer
    %s15 = sadd.s32 1, %s11
  $region7: #{tpu_custom_call.1} parent=0 // loop_footer_branch
    %10 = sbr.rel target = $region3
  $region8: #{tpu_custom_call.1} parent=0 // loop_exit
    _

</llo_original>
